<compile_context>
chip_gen: v7x
topology: tpu7x:2x2x1
jax: 0.10.0
libtpu: 0.0.40
codegen_flags: <defaults>
</compile_context>

<pallas_src>
import functools

import jax
import jax.numpy as jnp
from jax.experimental import pallas as pl
from jax.experimental.pallas import tpu as pltpu

NUM_SIGNALS = 16
NUM_COMP = 3
HIDDEN_DIMS = [32, 64, 128, 256, 512]
D_MEAN = [0.5, 1.2, 2.85]
T2_MEAN = [45.0, 70.0, 750.0]
D_DELTA = [0.2, 0.5, 0.15]
T2_DELTA = [25.0, 30.0, 250.0]
B_VALUES = [0, 150, 1000, 1500]
TE_VALUES = [0, 13, 93, 143]
LEAKY_SLOPE = 0.01  # PyTorch nn.LeakyReLU default negative_slope

OUT_WIDTH = 128                       # lane-dense packed output width
_N_ENC = len(HIDDEN_DIMS)
_H = HIDDEN_DIMS[-1]                  # 512
_N_USED = NUM_SIGNALS + 3 * NUM_COMP  # 25 used lanes in the output slab


def _round_up(x, m):
    return (x + m - 1) // m * m


def _leaky_relu(x):
    return jnp.where(x > 0, x, LEAKY_SLOPE * x)


def _pia_kernel(
    x_ref,
    # encoder: 5 x (Linear + LeakyReLU)
    we0, be0, we1, be1, we2, be2, we3, be3, we4, be4,
    # fused predictor heads
    wh1, bh1,   # (512, 1536), (1, 1536): [D | T2 | v] first layers (MXU)
    w2t,        # (16, 512): rows 0-2 wd1.T | 3-5 wt1.T | 6-8 wv1.T  (VPU/XLU path)
    cst,        # (8, 128): row0 -b/1000 (16) | row1 -TE (16) | row2 head-2 biases (9)
    # packed output
    out_ref,
):
    tb = x_ref.shape[0]
    h = x_ref[...]  # (TB, 16) float32
    for w_ref, b_ref in ((we0, be0), (we1, be1), (we2, be2), (we3, be3), (we4, be4)):
        h = _leaky_relu(
            jnp.dot(h, w_ref[...], preferred_element_type=jnp.float32) + b_ref[...]
        )

    # one wide MXU matmul for the three head first layers (512 -> 1536)
    t = _leaky_relu(
        jnp.dot(h, wh1[...], preferred_element_type=jnp.float32) + bh1[...]
    )  # (TB, 1536)

    w2 = w2t[...]          # (16, 512)
    cv = cst[...]          # (8, 128)
    neg_b = cv[0:1, 0:NUM_SIGNALS]    # (1, 16)
    neg_te = cv[1:2, 0:NUM_SIGNALS]   # (1, 16)

    # per-head activation slices (lane-aligned)
    t_heads = (t[:, 0:_H], t[:, _H:2 * _H], t[:, 2 * _H:3 * _H])

    # 1536 -> 9 projection on the VPU (broadcast-multiply) + XLU (lane reduce),
    # riding slots that are idle while the MXU chews on wh1 / the encoder.
    def head_col(head_idx, c):
        row = head_idx * NUM_COMP + c
        w_row = w2[row:row + 1, :]              # (1, 512)
        b = cv[2:3, row:row + 1]                # (1, 1)
        return jnp.sum(t_heads[head_idx] * w_row, axis=1, keepdims=True) + b  # (TB, 1)

    v_lin = [head_col(2, c) for c in range(NUM_COMP)]
    v_max = jnp.maximum(jnp.maximum(v_lin[0], v_lin[1]), v_lin[2])

    D_cols, T2_cols, vexp_cols = [], [], []
    for c in range(NUM_COMP):
        D_cols.append(D_MEAN[c] + D_DELTA[c] * jnp.tanh(head_col(0, c)))     # (TB, 1)
        T2_cols.append(T2_MEAN[c] + T2_DELTA[c] * jnp.tanh(head_col(1, c)))  # (TB, 1)
        vexp_cols.append(jnp.exp(v_lin[c] - v_max))
    v_den = vexp_cols[0] + vexp_cols[1] + vexp_cols[2]
    v_cols = [e / v_den for e in vexp_cols]      # softmax over the 3 compartments

    # decode(): fused exponentials -> 3 exps per tile
    sig = None
    for c in range(NUM_COMP):
        inv_t2 = 1.0 / T2_cols[c]
        term = v_cols[c] * jnp.exp(neg_b * D_cols[c] + neg_te * inv_t2)  # (TB, 16)
        sig = term if sig is None else sig + term

    # single unmasked lane-dense store of the packed output slab
    pad = jnp.zeros((tb, OUT_WIDTH - _N_USED), jnp.float32)
    out_ref[...] = jnp.concatenate(
        [1000.0 * sig] + D_cols + T2_cols + v_cols + [pad], axis=1)


def init_params(key):
    """Deterministic PyTorch-Linear-style init: U(-1/sqrt(fan_in), +1/sqrt(fan_in))."""
    dims = [NUM_SIGNALS] + HIDDEN_DIMS
    n_linear = len(HIDDEN_DIMS) + 3 * 2
    keys = jax.random.split(key, n_linear)

    def linear(k, fan_in, fan_out):
        kw, kb = jax.random.split(k)
        bound = 1.0 / (fan_in ** 0.5)
        w = jax.random.uniform(kw, (fan_in, fan_out), jnp.float32, -bound, bound)
        b = jax.random.uniform(kb, (1, fan_out), jnp.float32, -bound, bound)
        return w, b

    params = []
    ki = 0
    for i in range(len(HIDDEN_DIMS)):
        w, b = linear(keys[ki], dims[i], dims[i + 1]); ki += 1
        params += [w, b]
    for _ in range(3):  # D, T2, v predictor heads
        w, b = linear(keys[ki], _H, _H); ki += 1
        params += [w, b]
        w, b = linear(keys[ki], _H, NUM_COMP); ki += 1
        params += [w, b]
    return tuple(params)


def prepare_params(flat_params):
    """One-time fusion of the raw Linear params into kernel-ready arrays.

    Hoisted out of pia_forward so the 3 MB wh1 concat / head-weight transpose /
    constant-slab build are not re-materialized on every forward call.
    """
    p = tuple(flat_params)
    enc = p[:2 * _N_ENC]
    wd0, bd0, wd1, bd1 = p[10:14]
    wt0, bt0, wt1, bt1 = p[14:18]
    wv0, bv0, wv1, bv1 = p[18:22]

    # fuse the three head first layers: 512 -> 3*512 (one MXU matmul in-kernel)
    wh1 = jnp.concatenate([wd0, wt0, wv0], axis=1)   # (512, 1536)
    bh1 = jnp.concatenate([bd0, bt0, bv0], axis=1)   # (1, 1536)

    # head second layers transposed into rows, padded to (16, 512) for the
    # in-kernel VPU/XLU projection (keeps the 9-column matmul off the MXU)
    w2t = jnp.zeros((16, _H), jnp.float32)
    w2t = w2t.at[0:NUM_COMP].set(wd1.T)
    w2t = w2t.at[NUM_COMP:2 * NUM_COMP].set(wt1.T)
    w2t = w2t.at[2 * NUM_COMP:3 * NUM_COMP].set(wv1.T)

    # decode constants + head-2 biases packed into one (8, 128) VMEM slab
    # (Pallas kernels may not capture non-scalar constants, so they come in as
    # an input with a constant index_map -> fetched once, VMEM-resident).
    neg_b = jnp.asarray([-b / 1000.0 for b in B_VALUES for _ in TE_VALUES], jnp.float32)
    neg_te = jnp.asarray([-float(te) for _ in B_VALUES for te in TE_VALUES], jnp.float32)
    b2 = jnp.concatenate([bd1.reshape(-1), bt1.reshape(-1), bv1.reshape(-1)])
    cst = jnp.zeros((8, OUT_WIDTH), jnp.float32)
    cst = cst.at[0, 0:NUM_SIGNALS].set(neg_b)
    cst = cst.at[1, 0:NUM_SIGNALS].set(neg_te)
    cst = cst.at[2, 0:3 * NUM_COMP].set(b2)

    return tuple(enc) + (wh1, bh1, w2t, cst)


@functools.partial(jax.jit, static_argnames=("block_rows",))
def pia_forward(x, prepared_params, block_rows=1024):
    """Returns [signal, x, D, T2, v] exactly like PIA.forward."""
    N = x.shape[0]
    weights = tuple(prepared_params)

    # Batch tile: as large as block_rows allows (amortizes per-grid-step overhead),
    # but never so large that the grid collapses to one step - with
    # dimension_semantics=("parallel",) that would idle the second v7x TensorCore.
    tb = max(8, min(_round_up(block_rows, 8), _round_up(max((N + 1) // 2, 1), 8)))
    n_pad = _round_up(N, tb)
    x_pad = x if n_pad == N else jnp.pad(x, ((0, n_pad - N), (0, 0)))

    in_specs = [pl.BlockSpec((tb, NUM_SIGNALS), lambda i: (i, 0))] + [
        # constant index_map -> weights stay resident in VMEM across grid steps
        pl.BlockSpec(w.shape, lambda i: (0, 0)) for w in weights
    ]

    packed = pl.pallas_call(
        _pia_kernel,
        out_shape=jax.ShapeDtypeStruct((n_pad, OUT_WIDTH), jnp.float32),
        grid=(n_pad // tb,),
        in_specs=in_specs,
        out_specs=pl.BlockSpec((tb, OUT_WIDTH), lambda i: (i, 0)),
        compiler_params=pltpu.CompilerParams(
            dimension_semantics=("parallel",),   # megacore-shard batch on v7x
            vmem_limit_bytes=48 * 1024 * 1024,   # >= v5e's 16 MiB scoped default
        ),
    )(x_pad, *weights)

    packed = packed[:N]
    sig = packed[:, 0:NUM_SIGNALS]
    D = packed[:, NUM_SIGNALS:NUM_SIGNALS + NUM_COMP]
    T2 = packed[:, NUM_SIGNALS + NUM_COMP:NUM_SIGNALS + 2 * NUM_COMP]
    v = packed[:, NUM_SIGNALS + 2 * NUM_COMP:NUM_SIGNALS + 3 * NUM_COMP]
    return [sig, x, D, T2, v]


def ref_forward(x, p):
    """Pure-JAX reference of the PyTorch forward (for verification)."""
    idx = 0
    h = x
    for _ in range(len(HIDDEN_DIMS)):
        h = _leaky_relu(h @ p[idx] + p[idx + 1]); idx += 2

    def head(i):
        t = _leaky_relu(h @ p[i] + p[i + 1])
        return t @ p[i + 2] + p[i + 3]

    d_lin = head(idx); idx += 4
    t2_lin = head(idx); idx += 4
    v_lin = head(idx); idx += 4
    D = jnp.asarray(D_MEAN, jnp.float32) + jnp.asarray(D_DELTA, jnp.float32) * jnp.tanh(d_lin)
    T2 = jnp.asarray(T2_MEAN, jnp.float32) + jnp.asarray(T2_DELTA, jnp.float32) * jnp.tanh(t2_lin)
    v = jax.nn.softmax(v_lin, axis=1)
    bv = jnp.asarray([b for b in B_VALUES for _ in TE_VALUES], jnp.float32)
    te = jnp.asarray(TE_VALUES * len(B_VALUES), jnp.float32)
    sig = jnp.zeros((x.shape[0], NUM_SIGNALS), jnp.float32)
    for c in range(NUM_COMP):
        sig = sig + v[:, c:c + 1] * jnp.exp(-(bv / 1000.0) * D[:, c:c + 1]) \
              * jnp.exp(-te / T2[:, c:c + 1])
    return 1000.0 * sig, D, T2, v


if __name__ == "__main__":
    key = jax.random.PRNGKey(0)
    kx, kp = jax.random.split(key)
    N = 13  # deliberately not a multiple of the tile to exercise the padded tail
    x = jax.random.normal(kx, (N, NUM_SIGNALS), jnp.float32)
    params = init_params(kp)
    prep = prepare_params(params)   # one-time param fusion (hoisted out of forward)

    # small tile so the grid has >1 step even at this tiny batch
    outs = pia_forward(x, prep, block_rows=8)
    jax.block_until_ready(outs)
    sig, x_out, D, T2, v = outs

    # verify against a plain-JAX reference
    sig_r, D_r, T2_r, v_r = ref_forward(x, params)
    assert sig.shape == (N, NUM_SIGNALS) and D.shape == (N, NUM_COMP)
    assert jnp.allclose(sig, sig_r, rtol=1e-4, atol=1e-2), "signal mismatch"
    assert jnp.allclose(D, D_r, rtol=1e-4, atol=1e-4), "D mismatch"
    assert jnp.allclose(T2, T2_r, rtol=1e-4, atol=1e-2), "T2 mismatch"
    assert jnp.allclose(v, v_r, rtol=1e-4, atol=1e-4), "v mismatch"
    assert jnp.allclose(x_out, x), "x passthrough mismatch"

    print("KERNEL_OK")
</pallas_src>

<mosaic_0001>
module attributes {stable_mosaic.version = 11 : i64} {
  func.func @_pia_kernel(%arg0: i32, %arg1: memref<8x16xf32, #tpu.memory_space<vmem>>, %arg2: memref<16x32xf32, #tpu.memory_space<vmem>>, %arg3: memref<1x32xf32, #tpu.memory_space<vmem>>, %arg4: memref<32x64xf32, #tpu.memory_space<vmem>>, %arg5: memref<1x64xf32, #tpu.memory_space<vmem>>, %arg6: memref<64x128xf32, #tpu.memory_space<vmem>>, %arg7: memref<1x128xf32, #tpu.memory_space<vmem>>, %arg8: memref<128x256xf32, #tpu.memory_space<vmem>>, %arg9: memref<1x256xf32, #tpu.memory_space<vmem>>, %arg10: memref<256x512xf32, #tpu.memory_space<vmem>>, %arg11: memref<1x512xf32, #tpu.memory_space<vmem>>, %arg12: memref<512x1536xf32, #tpu.memory_space<vmem>>, %arg13: memref<1x1536xf32, #tpu.memory_space<vmem>>, %arg14: memref<16x512xf32, #tpu.memory_space<vmem>>, %arg15: memref<8x128xf32, #tpu.memory_space<vmem>>, %arg16: memref<8x128xf32, #tpu.memory_space<vmem>>) attributes {dimension_semantics = [#tpu.dimension_semantics<parallel>], iteration_bounds = array<i64: 2>, scalar_prefetch = 0 : i64, scratch_operands = 0 : i64, tpu.core_type = #tpu.core_type<tc>, window_params = [{transform_indices = @transform_0, window_bounds = array<i64: 8, 16>}, {pipeline_mode = #tpu.pipeline_mode<synchronous>, transform_indices = @transform_1, window_bounds = array<i64: 16, 32>}, {pipeline_mode = #tpu.pipeline_mode<synchronous>, transform_indices = @transform_2, window_bounds = array<i64: 1, 32>}, {pipeline_mode = #tpu.pipeline_mode<synchronous>, transform_indices = @transform_3, window_bounds = array<i64: 32, 64>}, {pipeline_mode = #tpu.pipeline_mode<synchronous>, transform_indices = @transform_4, window_bounds = array<i64: 1, 64>}, {pipeline_mode = #tpu.pipeline_mode<synchronous>, transform_indices = @transform_5, window_bounds = array<i64: 64, 128>}, {pipeline_mode = #tpu.pipeline_mode<synchronous>, transform_indices = @transform_6, window_bounds = array<i64: 1, 128>}, {pipeline_mode = #tpu.pipeline_mode<synchronous>, transform_indices = @transform_7, window_bounds = array<i64: 128, 256>}, {pipeline_mode = #tpu.pipeline_mode<synchronous>, transform_indices = @transform_8, window_bounds = array<i64: 1, 256>}, {pipeline_mode = #tpu.pipeline_mode<synchronous>, transform_indices = @transform_9, window_bounds = array<i64: 256, 512>}, {pipeline_mode = #tpu.pipeline_mode<synchronous>, transform_indices = @transform_10, window_bounds = array<i64: 1, 512>}, {pipeline_mode = #tpu.pipeline_mode<synchronous>, transform_indices = @transform_11, window_bounds = array<i64: 512, 1536>}, {pipeline_mode = #tpu.pipeline_mode<synchronous>, transform_indices = @transform_12, window_bounds = array<i64: 1, 1536>}, {pipeline_mode = #tpu.pipeline_mode<synchronous>, transform_indices = @transform_13, window_bounds = array<i64: 16, 512>}, {pipeline_mode = #tpu.pipeline_mode<synchronous>, transform_indices = @transform_14, window_bounds = array<i64: 8, 128>}, {transform_indices = @transform_15, window_bounds = array<i64: 8, 128>}]} {
    %c0 = arith.constant 0 : index
    %c0_0 = arith.constant 0 : index
    %0 = vector.load %arg1[%c0, %c0_0] : memref<8x16xf32, #tpu.memory_space<vmem>>, vector<8x16xf32>
    %c0_1 = arith.constant 0 : index
    %c0_2 = arith.constant 0 : index
    %1 = vector.load %arg2[%c0_1, %c0_2] : memref<16x32xf32, #tpu.memory_space<vmem>>, vector<16x32xf32>
    %cst = arith.constant dense<0.000000e+00> : vector<8x32xf32>
    %2 = tpu.matmul %0, %1, %cst {dimension_numbers = #tpu.dot_dimension_numbers<[1], [0], [0], [1], [0, 0, 1, 1], [], []>} : vector<8x16xf32>, vector<16x32xf32>, vector<8x32xf32> -> vector<8x32xf32>
    %c0_3 = arith.constant 0 : index
    %c0_4 = arith.constant 0 : index
    %3 = vector.load %arg3[%c0_3, %c0_4] : memref<1x32xf32, #tpu.memory_space<vmem>>, vector<1x32xf32>
    %4 = vector.broadcast %3 : vector<1x32xf32> to vector<8x32xf32>
    %5 = arith.addf %2, %4 : vector<8x32xf32>
    %cst_5 = arith.constant 0.000000e+00 : f32
    %6 = vector.broadcast %cst_5 : f32 to vector<8x32xf32>
    %7 = arith.cmpf ogt, %5, %6 : vector<8x32xf32>
    %cst_6 = arith.constant 0.00999999977 : f32
    %8 = vector.broadcast %cst_6 : f32 to vector<8x32xf32>
    %9 = arith.mulf %8, %5 : vector<8x32xf32>
    %10 = arith.select %7, %5, %9 : vector<8x32xi1>, vector<8x32xf32>
    %c0_7 = arith.constant 0 : index
    %c0_8 = arith.constant 0 : index
    %11 = vector.load %arg4[%c0_7, %c0_8] : memref<32x64xf32, #tpu.memory_space<vmem>>, vector<32x64xf32>
    %cst_9 = arith.constant dense<0.000000e+00> : vector<8x64xf32>
    %12 = tpu.matmul %10, %11, %cst_9 {dimension_numbers = #tpu.dot_dimension_numbers<[1], [0], [0], [1], [0, 0, 1, 1], [], []>} : vector<8x32xf32>, vector<32x64xf32>, vector<8x64xf32> -> vector<8x64xf32>
    %c0_10 = arith.constant 0 : index
    %c0_11 = arith.constant 0 : index
    %13 = vector.load %arg5[%c0_10, %c0_11] : memref<1x64xf32, #tpu.memory_space<vmem>>, vector<1x64xf32>
    %14 = vector.broadcast %13 : vector<1x64xf32> to vector<8x64xf32>
    %15 = arith.addf %12, %14 : vector<8x64xf32>
    %cst_12 = arith.constant 0.000000e+00 : f32
    %16 = vector.broadcast %cst_12 : f32 to vector<8x64xf32>
    %17 = arith.cmpf ogt, %15, %16 : vector<8x64xf32>
    %cst_13 = arith.constant 0.00999999977 : f32
    %18 = vector.broadcast %cst_13 : f32 to vector<8x64xf32>
    %19 = arith.mulf %18, %15 : vector<8x64xf32>
    %20 = arith.select %17, %15, %19 : vector<8x64xi1>, vector<8x64xf32>
    %c0_14 = arith.constant 0 : index
    %c0_15 = arith.constant 0 : index
    %21 = vector.load %arg6[%c0_14, %c0_15] : memref<64x128xf32, #tpu.memory_space<vmem>>, vector<64x128xf32>
    %cst_16 = arith.constant dense<0.000000e+00> : vector<8x128xf32>
    %22 = tpu.matmul %20, %21, %cst_16 {dimension_numbers = #tpu.dot_dimension_numbers<[1], [0], [0], [1], [0, 0, 1, 1], [], []>} : vector<8x64xf32>, vector<64x128xf32>, vector<8x128xf32> -> vector<8x128xf32>
    %c0_17 = arith.constant 0 : index
    %c0_18 = arith.constant 0 : index
    %23 = vector.load %arg7[%c0_17, %c0_18] : memref<1x128xf32, #tpu.memory_space<vmem>>, vector<1x128xf32>
    %24 = vector.broadcast %23 : vector<1x128xf32> to vector<8x128xf32>
    %25 = arith.addf %22, %24 : vector<8x128xf32>
    %cst_19 = arith.constant 0.000000e+00 : f32
    %26 = vector.broadcast %cst_19 : f32 to vector<8x128xf32>
    %27 = arith.cmpf ogt, %25, %26 : vector<8x128xf32>
    %cst_20 = arith.constant 0.00999999977 : f32
    %28 = vector.broadcast %cst_20 : f32 to vector<8x128xf32>
    %29 = arith.mulf %28, %25 : vector<8x128xf32>
    %30 = arith.select %27, %25, %29 : vector<8x128xi1>, vector<8x128xf32>
    %c0_21 = arith.constant 0 : index
    %c0_22 = arith.constant 0 : index
    %31 = vector.load %arg8[%c0_21, %c0_22] : memref<128x256xf32, #tpu.memory_space<vmem>>, vector<128x256xf32>
    %cst_23 = arith.constant dense<0.000000e+00> : vector<8x256xf32>
    %32 = tpu.matmul %30, %31, %cst_23 {dimension_numbers = #tpu.dot_dimension_numbers<[1], [0], [0], [1], [0, 0, 1, 1], [], []>} : vector<8x128xf32>, vector<128x256xf32>, vector<8x256xf32> -> vector<8x256xf32>
    %c0_24 = arith.constant 0 : index
    %c0_25 = arith.constant 0 : index
    %33 = vector.load %arg9[%c0_24, %c0_25] : memref<1x256xf32, #tpu.memory_space<vmem>>, vector<1x256xf32>
    %34 = vector.broadcast %33 : vector<1x256xf32> to vector<8x256xf32>
    %35 = arith.addf %32, %34 : vector<8x256xf32>
    %cst_26 = arith.constant 0.000000e+00 : f32
    %36 = vector.broadcast %cst_26 : f32 to vector<8x256xf32>
    %37 = arith.cmpf ogt, %35, %36 : vector<8x256xf32>
    %cst_27 = arith.constant 0.00999999977 : f32
    %38 = vector.broadcast %cst_27 : f32 to vector<8x256xf32>
    %39 = arith.mulf %38, %35 : vector<8x256xf32>
    %40 = arith.select %37, %35, %39 : vector<8x256xi1>, vector<8x256xf32>
    %c0_28 = arith.constant 0 : index
    %c0_29 = arith.constant 0 : index
    %41 = vector.load %arg10[%c0_28, %c0_29] : memref<256x512xf32, #tpu.memory_space<vmem>>, vector<256x512xf32>
    %cst_30 = arith.constant dense<0.000000e+00> : vector<8x512xf32>
    %42 = tpu.matmul %40, %41, %cst_30 {dimension_numbers = #tpu.dot_dimension_numbers<[1], [0], [0], [1], [0, 0, 1, 1], [], []>} : vector<8x256xf32>, vector<256x512xf32>, vector<8x512xf32> -> vector<8x512xf32>
    %c0_31 = arith.constant 0 : index
    %c0_32 = arith.constant 0 : index
    %43 = vector.load %arg11[%c0_31, %c0_32] : memref<1x512xf32, #tpu.memory_space<vmem>>, vector<1x512xf32>
    %44 = vector.broadcast %43 : vector<1x512xf32> to vector<8x512xf32>
    %45 = arith.addf %42, %44 : vector<8x512xf32>
    %cst_33 = arith.constant 0.000000e+00 : f32
    %46 = vector.broadcast %cst_33 : f32 to vector<8x512xf32>
    %47 = arith.cmpf ogt, %45, %46 : vector<8x512xf32>
    %cst_34 = arith.constant 0.00999999977 : f32
    %48 = vector.broadcast %cst_34 : f32 to vector<8x512xf32>
    %49 = arith.mulf %48, %45 : vector<8x512xf32>
    %50 = arith.select %47, %45, %49 : vector<8x512xi1>, vector<8x512xf32>
    %c0_35 = arith.constant 0 : index
    %c0_36 = arith.constant 0 : index
    %51 = vector.load %arg12[%c0_35, %c0_36] : memref<512x1536xf32, #tpu.memory_space<vmem>>, vector<512x1536xf32>
    %cst_37 = arith.constant dense<0.000000e+00> : vector<8x1536xf32>
    %52 = tpu.matmul %50, %51, %cst_37 {dimension_numbers = #tpu.dot_dimension_numbers<[1], [0], [0], [1], [0, 0, 1, 1], [], []>} : vector<8x512xf32>, vector<512x1536xf32>, vector<8x1536xf32> -> vector<8x1536xf32>
    %c0_38 = arith.constant 0 : index
    %c0_39 = arith.constant 0 : index
    %53 = vector.load %arg13[%c0_38, %c0_39] : memref<1x1536xf32, #tpu.memory_space<vmem>>, vector<1x1536xf32>
    %54 = vector.broadcast %53 : vector<1x1536xf32> to vector<8x1536xf32>
    %55 = arith.addf %52, %54 : vector<8x1536xf32>
    %cst_40 = arith.constant 0.000000e+00 : f32
    %56 = vector.broadcast %cst_40 : f32 to vector<8x1536xf32>
    %57 = arith.cmpf ogt, %55, %56 : vector<8x1536xf32>
    %cst_41 = arith.constant 0.00999999977 : f32
    %58 = vector.broadcast %cst_41 : f32 to vector<8x1536xf32>
    %59 = arith.mulf %58, %55 : vector<8x1536xf32>
    %60 = arith.select %57, %55, %59 : vector<8x1536xi1>, vector<8x1536xf32>
    %c0_42 = arith.constant 0 : index
    %c0_43 = arith.constant 0 : index
    %61 = vector.load %arg14[%c0_42, %c0_43] : memref<16x512xf32, #tpu.memory_space<vmem>>, vector<16x512xf32>
    %c0_44 = arith.constant 0 : index
    %c0_45 = arith.constant 0 : index
    %62 = vector.load %arg15[%c0_44, %c0_45] : memref<8x128xf32, #tpu.memory_space<vmem>>, vector<8x128xf32>
    %63 = vector.extract_strided_slice %62 {offsets = [0, 0], sizes = [1, 16], strides = [1, 1]} : vector<8x128xf32> to vector<1x16xf32>
    %64 = vector.extract_strided_slice %62 {offsets = [1, 0], sizes = [1, 16], strides = [1, 1]} : vector<8x128xf32> to vector<1x16xf32>
    %65 = vector.extract_strided_slice %60 {offsets = [0, 0], sizes = [8, 512], strides = [1, 1]} : vector<8x1536xf32> to vector<8x512xf32>
    %66 = vector.extract_strided_slice %60 {offsets = [0, 512], sizes = [8, 512], strides = [1, 1]} : vector<8x1536xf32> to vector<8x512xf32>
    %67 = vector.extract_strided_slice %60 {offsets = [0, 1024], sizes = [8, 512], strides = [1, 1]} : vector<8x1536xf32> to vector<8x512xf32>
    %68 = vector.extract_strided_slice %61 {offsets = [6, 0], sizes = [1, 512], strides = [1, 1]} : vector<16x512xf32> to vector<1x512xf32>
    %69 = vector.extract_strided_slice %62 {offsets = [2, 6], sizes = [1, 1], strides = [1, 1]} : vector<8x128xf32> to vector<1x1xf32>
    %70 = vector.broadcast %68 : vector<1x512xf32> to vector<8x512xf32>
    %71 = arith.mulf %67, %70 : vector<8x512xf32>
    %cst_46 = arith.constant dense<0.000000e+00> : vector<8xf32>
    %72 = vector.multi_reduction <add>, %71, %cst_46 [1] : vector<8x512xf32> to vector<8xf32>
    %73 = vector.shape_cast %72 : vector<8xf32> to vector<8x1xf32>
    %74 = vector.broadcast %69 : vector<1x1xf32> to vector<8x1xf32>
    %75 = arith.addf %73, %74 : vector<8x1xf32>
    %76 = vector.extract_strided_slice %61 {offsets = [7, 0], sizes = [1, 512], strides = [1, 1]} : vector<16x512xf32> to vector<1x512xf32>
    %77 = vector.extract_strided_slice %62 {offsets = [2, 7], sizes = [1, 1], strides = [1, 1]} : vector<8x128xf32> to vector<1x1xf32>
    %78 = vector.broadcast %76 : vector<1x512xf32> to vector<8x512xf32>
    %79 = arith.mulf %67, %78 : vector<8x512xf32>
    %cst_47 = arith.constant dense<0.000000e+00> : vector<8xf32>
    %80 = vector.multi_reduction <add>, %79, %cst_47 [1] : vector<8x512xf32> to vector<8xf32>
    %81 = vector.shape_cast %80 : vector<8xf32> to vector<8x1xf32>
    %82 = vector.broadcast %77 : vector<1x1xf32> to vector<8x1xf32>
    %83 = arith.addf %81, %82 : vector<8x1xf32>
    %84 = vector.extract_strided_slice %61 {offsets = [8, 0], sizes = [1, 512], strides = [1, 1]} : vector<16x512xf32> to vector<1x512xf32>
    %85 = vector.extract_strided_slice %62 {offsets = [2, 8], sizes = [1, 1], strides = [1, 1]} : vector<8x128xf32> to vector<1x1xf32>
    %86 = vector.broadcast %84 : vector<1x512xf32> to vector<8x512xf32>
    %87 = arith.mulf %67, %86 : vector<8x512xf32>
    %cst_48 = arith.constant dense<0.000000e+00> : vector<8xf32>
    %88 = vector.multi_reduction <add>, %87, %cst_48 [1] : vector<8x512xf32> to vector<8xf32>
    %89 = vector.shape_cast %88 : vector<8xf32> to vector<8x1xf32>
    %90 = vector.broadcast %85 : vector<1x1xf32> to vector<8x1xf32>
    %91 = arith.addf %89, %90 : vector<8x1xf32>
    %92 = arith.maximumf %75, %83 : vector<8x1xf32>
    %93 = arith.maximumf %92, %91 : vector<8x1xf32>
    %94 = vector.extract_strided_slice %61 {offsets = [0, 0], sizes = [1, 512], strides = [1, 1]} : vector<16x512xf32> to vector<1x512xf32>
    %95 = vector.extract_strided_slice %62 {offsets = [2, 0], sizes = [1, 1], strides = [1, 1]} : vector<8x128xf32> to vector<1x1xf32>
    %96 = vector.broadcast %94 : vector<1x512xf32> to vector<8x512xf32>
    %97 = arith.mulf %65, %96 : vector<8x512xf32>
    %cst_49 = arith.constant dense<0.000000e+00> : vector<8xf32>
    %98 = vector.multi_reduction <add>, %97, %cst_49 [1] : vector<8x512xf32> to vector<8xf32>
    %99 = vector.shape_cast %98 : vector<8xf32> to vector<8x1xf32>
    %100 = vector.broadcast %95 : vector<1x1xf32> to vector<8x1xf32>
    %101 = arith.addf %99, %100 : vector<8x1xf32>
    %102 = math.tanh %101 : vector<8x1xf32>
    %cst_50 = arith.constant 2.000000e-01 : f32
    %103 = vector.broadcast %cst_50 : f32 to vector<8x1xf32>
    %104 = arith.mulf %103, %102 : vector<8x1xf32>
    %cst_51 = arith.constant 5.000000e-01 : f32
    %105 = vector.broadcast %cst_51 : f32 to vector<8x1xf32>
    %106 = arith.addf %105, %104 : vector<8x1xf32>
    %107 = vector.extract_strided_slice %61 {offsets = [3, 0], sizes = [1, 512], strides = [1, 1]} : vector<16x512xf32> to vector<1x512xf32>
    %108 = vector.extract_strided_slice %62 {offsets = [2, 3], sizes = [1, 1], strides = [1, 1]} : vector<8x128xf32> to vector<1x1xf32>
    %109 = vector.broadcast %107 : vector<1x512xf32> to vector<8x512xf32>
    %110 = arith.mulf %66, %109 : vector<8x512xf32>
    %cst_52 = arith.constant dense<0.000000e+00> : vector<8xf32>
    %111 = vector.multi_reduction <add>, %110, %cst_52 [1] : vector<8x512xf32> to vector<8xf32>
    %112 = vector.shape_cast %111 : vector<8xf32> to vector<8x1xf32>
    %113 = vector.broadcast %108 : vector<1x1xf32> to vector<8x1xf32>
    %114 = arith.addf %112, %113 : vector<8x1xf32>
    %115 = math.tanh %114 : vector<8x1xf32>
    %cst_53 = arith.constant 2.500000e+01 : f32
    %116 = vector.broadcast %cst_53 : f32 to vector<8x1xf32>
    %117 = arith.mulf %116, %115 : vector<8x1xf32>
    %cst_54 = arith.constant 4.500000e+01 : f32
    %118 = vector.broadcast %cst_54 : f32 to vector<8x1xf32>
    %119 = arith.addf %118, %117 : vector<8x1xf32>
    %120 = arith.subf %75, %93 : vector<8x1xf32>
    %121 = math.exp %120 : vector<8x1xf32>
    %122 = vector.extract_strided_slice %61 {offsets = [1, 0], sizes = [1, 512], strides = [1, 1]} : vector<16x512xf32> to vector<1x512xf32>
    %123 = vector.extract_strided_slice %62 {offsets = [2, 1], sizes = [1, 1], strides = [1, 1]} : vector<8x128xf32> to vector<1x1xf32>
    %124 = vector.broadcast %122 : vector<1x512xf32> to vector<8x512xf32>
    %125 = arith.mulf %65, %124 : vector<8x512xf32>
    %cst_55 = arith.constant dense<0.000000e+00> : vector<8xf32>
    %126 = vector.multi_reduction <add>, %125, %cst_55 [1] : vector<8x512xf32> to vector<8xf32>
    %127 = vector.shape_cast %126 : vector<8xf32> to vector<8x1xf32>
    %128 = vector.broadcast %123 : vector<1x1xf32> to vector<8x1xf32>
    %129 = arith.addf %127, %128 : vector<8x1xf32>
    %130 = math.tanh %129 : vector<8x1xf32>
    %cst_56 = arith.constant 5.000000e-01 : f32
    %131 = vector.broadcast %cst_56 : f32 to vector<8x1xf32>
    %132 = arith.mulf %131, %130 : vector<8x1xf32>
    %cst_57 = arith.constant 1.200000e+00 : f32
    %133 = vector.broadcast %cst_57 : f32 to vector<8x1xf32>
    %134 = arith.addf %133, %132 : vector<8x1xf32>
    %135 = vector.extract_strided_slice %61 {offsets = [4, 0], sizes = [1, 512], strides = [1, 1]} : vector<16x512xf32> to vector<1x512xf32>
    %136 = vector.extract_strided_slice %62 {offsets = [2, 4], sizes = [1, 1], strides = [1, 1]} : vector<8x128xf32> to vector<1x1xf32>
    %137 = vector.broadcast %135 : vector<1x512xf32> to vector<8x512xf32>
    %138 = arith.mulf %66, %137 : vector<8x512xf32>
    %cst_58 = arith.constant dense<0.000000e+00> : vector<8xf32>
    %139 = vector.multi_reduction <add>, %138, %cst_58 [1] : vector<8x512xf32> to vector<8xf32>
    %140 = vector.shape_cast %139 : vector<8xf32> to vector<8x1xf32>
    %141 = vector.broadcast %136 : vector<1x1xf32> to vector<8x1xf32>
    %142 = arith.addf %140, %141 : vector<8x1xf32>
    %143 = math.tanh %142 : vector<8x1xf32>
    %cst_59 = arith.constant 3.000000e+01 : f32
    %144 = vector.broadcast %cst_59 : f32 to vector<8x1xf32>
    %145 = arith.mulf %144, %143 : vector<8x1xf32>
    %cst_60 = arith.constant 7.000000e+01 : f32
    %146 = vector.broadcast %cst_60 : f32 to vector<8x1xf32>
    %147 = arith.addf %146, %145 : vector<8x1xf32>
    %148 = arith.subf %83, %93 : vector<8x1xf32>
    %149 = math.exp %148 : vector<8x1xf32>
    %150 = vector.extract_strided_slice %61 {offsets = [2, 0], sizes = [1, 512], strides = [1, 1]} : vector<16x512xf32> to vector<1x512xf32>
    %151 = vector.extract_strided_slice %62 {offsets = [2, 2], sizes = [1, 1], strides = [1, 1]} : vector<8x128xf32> to vector<1x1xf32>
    %152 = vector.broadcast %150 : vector<1x512xf32> to vector<8x512xf32>
    %153 = arith.mulf %65, %152 : vector<8x512xf32>
    %cst_61 = arith.constant dense<0.000000e+00> : vector<8xf32>
    %154 = vector.multi_reduction <add>, %153, %cst_61 [1] : vector<8x512xf32> to vector<8xf32>
    %155 = vector.shape_cast %154 : vector<8xf32> to vector<8x1xf32>
    %156 = vector.broadcast %151 : vector<1x1xf32> to vector<8x1xf32>
    %157 = arith.addf %155, %156 : vector<8x1xf32>
    %158 = math.tanh %157 : vector<8x1xf32>
    %cst_62 = arith.constant 1.500000e-01 : f32
    %159 = vector.broadcast %cst_62 : f32 to vector<8x1xf32>
    %160 = arith.mulf %159, %158 : vector<8x1xf32>
    %cst_63 = arith.constant 2.850000e+00 : f32
    %161 = vector.broadcast %cst_63 : f32 to vector<8x1xf32>
    %162 = arith.addf %161, %160 : vector<8x1xf32>
    %163 = vector.extract_strided_slice %61 {offsets = [5, 0], sizes = [1, 512], strides = [1, 1]} : vector<16x512xf32> to vector<1x512xf32>
    %164 = vector.extract_strided_slice %62 {offsets = [2, 5], sizes = [1, 1], strides = [1, 1]} : vector<8x128xf32> to vector<1x1xf32>
    %165 = vector.broadcast %163 : vector<1x512xf32> to vector<8x512xf32>
    %166 = arith.mulf %66, %165 : vector<8x512xf32>
    %cst_64 = arith.constant dense<0.000000e+00> : vector<8xf32>
    %167 = vector.multi_reduction <add>, %166, %cst_64 [1] : vector<8x512xf32> to vector<8xf32>
    %168 = vector.shape_cast %167 : vector<8xf32> to vector<8x1xf32>
    %169 = vector.broadcast %164 : vector<1x1xf32> to vector<8x1xf32>
    %170 = arith.addf %168, %169 : vector<8x1xf32>
    %171 = math.tanh %170 : vector<8x1xf32>
    %cst_65 = arith.constant 2.500000e+02 : f32
    %172 = vector.broadcast %cst_65 : f32 to vector<8x1xf32>
    %173 = arith.mulf %172, %171 : vector<8x1xf32>
    %cst_66 = arith.constant 7.500000e+02 : f32
    %174 = vector.broadcast %cst_66 : f32 to vector<8x1xf32>
    %175 = arith.addf %174, %173 : vector<8x1xf32>
    %176 = arith.subf %91, %93 : vector<8x1xf32>
    %177 = math.exp %176 : vector<8x1xf32>
    %178 = arith.addf %121, %149 : vector<8x1xf32>
    %179 = arith.addf %178, %177 : vector<8x1xf32>
    %180 = arith.divf %121, %179 : vector<8x1xf32>
    %181 = arith.divf %149, %179 : vector<8x1xf32>
    %182 = arith.divf %177, %179 : vector<8x1xf32>
    %cst_67 = arith.constant 1.000000e+00 : f32
    %183 = vector.broadcast %cst_67 : f32 to vector<8x1xf32>
    %184 = arith.divf %183, %119 : vector<8x1xf32>
    %185 = vector.broadcast %63 : vector<1x16xf32> to vector<8x16xf32>
    %186 = vector.broadcast %106 : vector<8x1xf32> to vector<8x16xf32>
    %187 = arith.mulf %185, %186 : vector<8x16xf32>
    %188 = vector.broadcast %64 : vector<1x16xf32> to vector<8x16xf32>
    %189 = vector.broadcast %184 : vector<8x1xf32> to vector<8x16xf32>
    %190 = arith.mulf %188, %189 : vector<8x16xf32>
    %191 = arith.addf %187, %190 : vector<8x16xf32>
    %192 = math.exp %191 : vector<8x16xf32>
    %193 = vector.broadcast %180 : vector<8x1xf32> to vector<8x16xf32>
    %194 = arith.mulf %193, %192 : vector<8x16xf32>
    %cst_68 = arith.constant 1.000000e+00 : f32
    %195 = vector.broadcast %cst_68 : f32 to vector<8x1xf32>
    %196 = arith.divf %195, %147 : vector<8x1xf32>
    %197 = vector.broadcast %63 : vector<1x16xf32> to vector<8x16xf32>
    %198 = vector.broadcast %134 : vector<8x1xf32> to vector<8x16xf32>
    %199 = arith.mulf %197, %198 : vector<8x16xf32>
    %200 = vector.broadcast %64 : vector<1x16xf32> to vector<8x16xf32>
    %201 = vector.broadcast %196 : vector<8x1xf32> to vector<8x16xf32>
    %202 = arith.mulf %200, %201 : vector<8x16xf32>
    %203 = arith.addf %199, %202 : vector<8x16xf32>
    %204 = math.exp %203 : vector<8x16xf32>
    %205 = vector.broadcast %181 : vector<8x1xf32> to vector<8x16xf32>
    %206 = arith.mulf %205, %204 : vector<8x16xf32>
    %207 = arith.addf %194, %206 : vector<8x16xf32>
    %cst_69 = arith.constant 1.000000e+00 : f32
    %208 = vector.broadcast %cst_69 : f32 to vector<8x1xf32>
    %209 = arith.divf %208, %175 : vector<8x1xf32>
    %210 = vector.broadcast %63 : vector<1x16xf32> to vector<8x16xf32>
    %211 = vector.broadcast %162 : vector<8x1xf32> to vector<8x16xf32>
    %212 = arith.mulf %210, %211 : vector<8x16xf32>
    %213 = vector.broadcast %64 : vector<1x16xf32> to vector<8x16xf32>
    %214 = vector.broadcast %209 : vector<8x1xf32> to vector<8x16xf32>
    %215 = arith.mulf %213, %214 : vector<8x16xf32>
    %216 = arith.addf %212, %215 : vector<8x16xf32>
    %217 = math.exp %216 : vector<8x16xf32>
    %218 = vector.broadcast %182 : vector<8x1xf32> to vector<8x16xf32>
    %219 = arith.mulf %218, %217 : vector<8x16xf32>
    %220 = arith.addf %207, %219 : vector<8x16xf32>
    %cst_70 = arith.constant 0.000000e+00 : f32
    %221 = vector.broadcast %cst_70 : f32 to vector<8x103xf32>
    %cst_71 = arith.constant 1.000000e+03 : f32
    %222 = vector.broadcast %cst_71 : f32 to vector<8x16xf32>
    %223 = arith.mulf %222, %220 : vector<8x16xf32>
    %224 = tpu.concatenate %223, %106, %134, %162, %119, %147, %175, %180, %181, %182, %221 in 1 : vector<8x16xf32>, vector<8x1xf32>, vector<8x1xf32>, vector<8x1xf32>, vector<8x1xf32>, vector<8x1xf32>, vector<8x1xf32>, vector<8x1xf32>, vector<8x1xf32>, vector<8x1xf32>, vector<8x103xf32> -> vector<8x128xf32>
    %c0_72 = arith.constant 0 : index
    %c0_73 = arith.constant 0 : index
    %225 = vector.load %arg16[%c0_72, %c0_73] : memref<8x128xf32, #tpu.memory_space<vmem>>, vector<8x128xf32>
    tpu.vector_store %arg16[%c0_72, %c0_73], %224 {strides = array<i32>} : memref<8x128xf32, #tpu.memory_space<vmem>>, vector<8x128xf32>,
    return
  }
  func.func @transform_0(%arg0: i32) -> (i32, i32) {
    %c0_i32 = arith.constant 0 : i32
    %c0_i32_0 = arith.constant 0 : i32
    return %arg0, %c0_i32 : i32, i32
  }
  func.func @transform_1(%arg0: i32) -> (i32, i32) {
    %c0_i32 = arith.constant 0 : i32
    %c0_i32_0 = arith.constant 0 : i32
    %c0_i32_1 = arith.constant 0 : i32
    return %c0_i32, %c0_i32_0 : i32, i32
  }
  func.func @transform_2(%arg0: i32) -> (i32, i32) {
    %c0_i32 = arith.constant 0 : i32
    %c0_i32_0 = arith.constant 0 : i32
    %c0_i32_1 = arith.constant 0 : i32
    return %c0_i32, %c0_i32_0 : i32, i32
  }
  func.func @transform_3(%arg0: i32) -> (i32, i32) {
    %c0_i32 = arith.constant 0 : i32
    %c0_i32_0 = arith.constant 0 : i32
    %c0_i32_1 = arith.constant 0 : i32
    return %c0_i32, %c0_i32_0 : i32, i32
  }
  func.func @transform_4(%arg0: i32) -> (i32, i32) {
    %c0_i32 = arith.constant 0 : i32
    %c0_i32_0 = arith.constant 0 : i32
    %c0_i32_1 = arith.constant 0 : i32
    return %c0_i32, %c0_i32_0 : i32, i32
  }
  func.func @transform_5(%arg0: i32) -> (i32, i32) {
    %c0_i32 = arith.constant 0 : i32
    %c0_i32_0 = arith.constant 0 : i32
    %c0_i32_1 = arith.constant 0 : i32
    return %c0_i32, %c0_i32_0 : i32, i32
  }
  func.func @transform_6(%arg0: i32) -> (i32, i32) {
    %c0_i32 = arith.constant 0 : i32
    %c0_i32_0 = arith.constant 0 : i32
    %c0_i32_1 = arith.constant 0 : i32
    return %c0_i32, %c0_i32_0 : i32, i32
  }
  func.func @transform_7(%arg0: i32) -> (i32, i32) {
    %c0_i32 = arith.constant 0 : i32
    %c0_i32_0 = arith.constant 0 : i32
    %c0_i32_1 = arith.constant 0 : i32
    return %c0_i32, %c0_i32_0 : i32, i32
  }
  func.func @transform_8(%arg0: i32) -> (i32, i32) {
    %c0_i32 = arith.constant 0 : i32
    %c0_i32_0 = arith.constant 0 : i32
    %c0_i32_1 = arith.constant 0 : i32
    return %c0_i32, %c0_i32_0 : i32, i32
  }
  func.func @transform_9(%arg0: i32) -> (i32, i32) {
    %c0_i32 = arith.constant 0 : i32
    %c0_i32_0 = arith.constant 0 : i32
    %c0_i32_1 = arith.constant 0 : i32
    return %c0_i32, %c0_i32_0 : i32, i32
  }
  func.func @transform_10(%arg0: i32) -> (i32, i32) {
    %c0_i32 = arith.constant 0 : i32
    %c0_i32_0 = arith.constant 0 : i32
    %c0_i32_1 = arith.constant 0 : i32
    return %c0_i32, %c0_i32_0 : i32, i32
  }
  func.func @transform_11(%arg0: i32) -> (i32, i32) {
    %c0_i32 = arith.constant 0 : i32
    %c0_i32_0 = arith.constant 0 : i32
    %c0_i32_1 = arith.constant 0 : i32
    return %c0_i32, %c0_i32_0 : i32, i32
  }
  func.func @transform_12(%arg0: i32) -> (i32, i32) {
    %c0_i32 = arith.constant 0 : i32
    %c0_i32_0 = arith.constant 0 : i32
    %c0_i32_1 = arith.constant 0 : i32
    return %c0_i32, %c0_i32_0 : i32, i32
  }
  func.func @transform_13(%arg0: i32) -> (i32, i32) {
    %c0_i32 = arith.constant 0 : i32
    %c0_i32_0 = arith.constant 0 : i32
    %c0_i32_1 = arith.constant 0 : i32
    return %c0_i32, %c0_i32_0 : i32, i32
  }
  func.func @transform_14(%arg0: i32) -> (i32, i32) {
    %c0_i32 = arith.constant 0 : i32
    %c0_i32_0 = arith.constant 0 : i32
    %c0_i32_1 = arith.constant 0 : i32
    return %c0_i32, %c0_i32_0 : i32, i32
  }
  func.func @transform_15(%arg0: i32) -> (i32, i32) {
    %c0_i32 = arith.constant 0 : i32
    %c0_i32_0 = arith.constant 0 : i32
    return %arg0, %c0_i32 : i32, i32
  }
}

</mosaic_0001>

<llo_original>
// kernel: pia_forward.1
$region0: #{pia_forward.1}
  #allocation0 [shape = 'u32[]', space=smem, size = 0x4, offset = 0x4, fixed_abs, tag = 'smem constant byte address 0x4 - core index']
  #allocation1 [shape = 'u32[144,128]{1,0:T(1,128)}', space=vmem, size = 0x12000, scoped, tag = 'internal scratch']
  %s0 = inlined_call_operand.vmem [shape: f32[16,16], index: 0, kind: input, shape index: {}]
  %s1 = inlined_call_operand.hbm [shape: f32[16,32], index: 1, kind: input, shape index: {}]
  %s2 = inlined_call_operand.hbm [shape: f32[1,32], index: 2, kind: input, shape index: {}]
  %s3 = inlined_call_operand.hbm [shape: f32[32,64], index: 3, kind: input, shape index: {}]
  %s4 = inlined_call_operand.hbm [shape: f32[1,64], index: 4, kind: input, shape index: {}]
  %s5 = inlined_call_operand.hbm [shape: f32[64,128], index: 5, kind: input, shape index: {}]
  %s6 = inlined_call_operand.hbm [shape: f32[1,128], index: 6, kind: input, shape index: {}]
  %s7 = inlined_call_operand.hbm [shape: f32[128,256], index: 7, kind: input, shape index: {}]
  %s8 = inlined_call_operand.hbm [shape: f32[1,256], index: 8, kind: input, shape index: {}]
  %s9 = inlined_call_operand.hbm [shape: f32[256,512], index: 9, kind: input, shape index: {}]
  %s10 = inlined_call_operand.hbm [shape: f32[1,512], index: 10, kind: input, shape index: {}]
  %s11 = inlined_call_operand.hbm [shape: f32[512,1536], index: 11, kind: input, shape index: {}]
  %s12 = inlined_call_operand.hbm [shape: f32[1,1536], index: 12, kind: input, shape index: {}]
  %s13 = inlined_call_operand.hbm [shape: f32[16,512], index: 13, kind: input, shape index: {}]
  %s14 = inlined_call_operand.hbm [shape: f32[8,128], index: 14, kind: input, shape index: {}]
  %s15 = inlined_call_operand.vmem [shape: f32[16,128], index: 15, kind: output, shape index: {}]
  %s16 = sld [smem:[#allocation0]]
  $region149: #{pia_forward.1} parent=0
    _
  %s18 = ssub.s32 1, %s16
  %s19 = scalar_select 0, %s18, %s16
  $region1: #{pia_forward.1} parent=0
    #allocation2 [shape = 'u8[8192]{0}', space=vmem, size = 0x2000, scoped, tag = 'input window, operand 1, single buffered']
    #allocation3 [shape = 's32[2]{0}', space=sflag, size = 0x8, scoped, tag = 'scoped memory for pia_forward.1']
    #allocation4 [shape = 'u8[512]{0}', space=vmem, size = 0x400, scoped, tag = 'input window, operand 2, single buffered']
    #allocation5 [shape = 's32[1]{0}', space=sflag, size = 0x4, scoped, tag = 'scoped memory for pia_forward.1']
    #allocation6 [shape = 'u8[16384]{0}', space=vmem, size = 0x4000, scoped, tag = 'input window, operand 3, single buffered']
    #allocation7 [shape = 'u8[512]{0}', space=vmem, size = 0x400, scoped, tag = 'input window, operand 4, single buffered']
    #allocation8 [shape = 's32[1]{0}', space=sflag, size = 0x4, scoped, tag = 'scoped memory for pia_forward.1']
    #allocation9 [shape = 'u8[32768]{0}', space=vmem, size = 0x8000, scoped, tag = 'input window, operand 5, single buffered']
    #allocation10 [shape = 'u8[512]{0}', space=vmem, size = 0x400, scoped, tag = 'input window, operand 6, single buffered']
    #allocation11 [shape = 's32[1]{0}', space=sflag, size = 0x4, scoped, tag = 'scoped memory for pia_forward.1']
    #allocation12 [shape = 'u8[131072]{0}', space=vmem, size = 0x20000, scoped, tag = 'input window, operand 7, single buffered']
    #allocation13 [shape = 'u8[1024]{0}', space=vmem, size = 0x400, scoped, tag = 'input window, operand 8, single buffered']
    #allocation14 [shape = 's32[1]{0}', space=sflag, size = 0x4, scoped, tag = 'scoped memory for pia_forward.1']
    #allocation15 [shape = 'u8[524288]{0}', space=vmem, size = 0x80000, scoped, tag = 'input window, operand 9, single buffered']
    #allocation16 [shape = 'u8[2048]{0}', space=vmem, size = 0x800, scoped, tag = 'input window, operand 10, single buffered']
    #allocation17 [shape = 's32[1]{0}', space=sflag, size = 0x4, scoped, tag = 'scoped memory for pia_forward.1']
    #allocation18 [shape = 'u8[3145728]{0}', space=vmem, size = 0x300000, scoped, tag = 'input window, operand 11, single buffered']
    #allocation19 [shape = 'u8[6144]{0}', space=vmem, size = 0x1800, scoped, tag = 'input window, operand 12, single buffered']
    #allocation20 [shape = 's32[1]{0}', space=sflag, size = 0x4, scoped, tag = 'scoped memory for pia_forward.1']
    #allocation21 [shape = 'u8[32768]{0}', space=vmem, size = 0x8000, scoped, tag = 'input window, operand 13, single buffered']
    #allocation22 [shape = 'u8[4096]{0}', space=vmem, size = 0x1000, scoped, tag = 'input window, operand 14, single buffered']
    #allocation23 [shape = 's32[1]{0}', space=sflag, size = 0x4, scoped, tag = 'scoped memory for pia_forward.1']
    %20 = vsyncpa [#allocation3], 0
    %21 = vsyncpa [#allocation5], 0
    %22 = vsyncpa [#allocation8], 0
    %23 = vsyncpa [#allocation11], 0
    %24 = vsyncpa [#allocation14], 0
    %25 = vsyncpa [#allocation17], 0
    %26 = vsyncpa [#allocation20], 0
    %27 = vsyncpa [#allocation23], 0
    loop: start=0, step=1, limit=4
    $region2: #{pia_forward.1} parent=1 // loop_pre_header
      _
    $region3: #{pia_forward.1} parent=1 // loop_header
      %s29 = sphi 0, %s33
      %p30 = scmp.ge.s32.totalorder %s29, 4
      %s39 = sphi 0, %s41
      %s42 = sphi 0, %s39
      %s43 = sphi 0, %s42
      %s59 = sphi 0, %s43
      %s63 = sphi 0, %s63
      %s65 = sphi 0, %s63
      %s66 = sphi 0, %s65
      %s80 = sphi 0, %s66
      %s84 = sphi 0, %s84
      %s86 = sphi 0, %s84
      %s87 = sphi 0, %s86
      %s101 = sphi 0, %s87
      %s105 = sphi 0, %s105
      %s107 = sphi 0, %s105
      %s108 = sphi 0, %s107
      %s122 = sphi 0, %s108
      %s126 = sphi 0, %s126
      %s128 = sphi 0, %s126
      %s129 = sphi 0, %s128
      %s143 = sphi 0, %s129
      %s147 = sphi 0, %s147
      %s149 = sphi 0, %s147
      %s150 = sphi 0, %s149
      %s164 = sphi 0, %s150
      %s168 = sphi 0, %s168
      %s170 = sphi 0, %s168
      %s171 = sphi 0, %s170
      %s185 = sphi 0, %s171
      %s189 = sphi 0, %s189
      %s191 = sphi 0, %s189
      %s192 = sphi 0, %s191
      %s206 = sphi 0, %s192
      %s210 = sphi 0, %s210
      %s212 = sphi 0, %s210
      %s213 = sphi 0, %s212
      %s227 = sphi 0, %s213
      %s231 = sphi 0, %s231
      %s233 = sphi 0, %s231
      %s234 = sphi 0, %s233
      %s248 = sphi 0, %s234
      %s252 = sphi 0, %s252
      %s254 = sphi 0, %s252
      %s255 = sphi 0, %s254
      %s269 = sphi 0, %s255
      %s273 = sphi 0, %s273
      %s275 = sphi 0, %s273
      %s276 = sphi 0, %s275
      %s290 = sphi 0, %s276
      %s294 = sphi 0, %s294
      %s296 = sphi 0, %s294
      %s297 = sphi 0, %s296
      %s311 = sphi 0, %s297
      %s315 = sphi 0, %s315
      %s317 = sphi 0, %s315
      %s318 = sphi 0, %s317
      %s332 = sphi 0, %s318
      %s336 = sphi 0, %s336
      %s338 = sphi 0, %s336
      %s339 = sphi 0, %s338
      %s353 = sphi 0, %s339
      %s359 = sphi 0, %s361
      %s362 = sphi 0, %s359
      %s363 = sphi 0, %s362
      %s379 = sphi 0, %s363
    $region4: #{pia_forward.1} parent=1 // loop_header_branch
      %32 = sbr.rel (%p30) target = $region8
    $region5: #{pia_forward.1} parent=1 // loop_body
      %s34 = ssub.s32 %s29, 1
      %s35 = ssub.s32 %s29, 2
      %s36 = sadd.s32 %s29, 1
      %s37 = ssub.s32 %s29, %s36
      %p38 = scmp.eq.s32.totalorder %s37, 0
      %s40 = sadd.s32 %s39, 1
      %s41 = scalar_select %p38, %s39, %s40
      %p44 = pneg %p38
      %p45 = scmp.eq.s32.totalorder %s29, 1
      %p46 = por %p44, %p45
      %p47 = scmp.ne.s32.totalorder %s39, %s42
      %p48 = scmp.eq.s32.totalorder %s29, 0
      %p49 = por %p47, %p48
      %p50 = scmp.ne.s32.totalorder %s39, %s42
      %p51 = scmp.eq.s32.totalorder %s34, 1
      %p52 = por %p50, %p51
      %p53 = scmp.ne.s32.totalorder %s42, %s43
      %p54 = scmp.eq.s32.totalorder %s34, 0
      %p55 = por %p53, %p54
      %p56 = scmp.ne.s32.totalorder %s42, %s43
      %p57 = scmp.eq.s32.totalorder %s35, 1
      %p58 = por %p56, %p57
      %p60 = scmp.ne.s32.totalorder %s43, %s59
      %p61 = scmp.eq.s32.totalorder %s35, 0
      %p62 = por %p60, %p61
      %s64 = sadd.s32 %s63, 1
      %p67 = scmp.eq.s32.totalorder %s29, 1
      %p68 = scmp.ne.s32.totalorder %s63, %s65
      %p69 = scmp.eq.s32.totalorder %s29, 0
      %p70 = por %p68, %p69
      %p71 = scmp.ne.s32.totalorder %s63, %s65
      %p72 = scmp.eq.s32.totalorder %s34, 1
      %p73 = por %p71, %p72
      %p74 = scmp.ne.s32.totalorder %s65, %s66
      %p75 = scmp.eq.s32.totalorder %s34, 0
      %p76 = por %p74, %p75
      %p77 = scmp.ne.s32.totalorder %s65, %s66
      %p78 = scmp.eq.s32.totalorder %s35, 1
      %p79 = por %p77, %p78
      %p81 = scmp.ne.s32.totalorder %s66, %s80
      %p82 = scmp.eq.s32.totalorder %s35, 0
      %p83 = por %p81, %p82
      %s85 = sadd.s32 %s84, 1
      %p88 = scmp.eq.s32.totalorder %s29, 1
      %p89 = scmp.ne.s32.totalorder %s84, %s86
      %p90 = scmp.eq.s32.totalorder %s29, 0
      %p91 = por %p89, %p90
      %p92 = scmp.ne.s32.totalorder %s84, %s86
      %p93 = scmp.eq.s32.totalorder %s34, 1
      %p94 = por %p92, %p93
      %p95 = scmp.ne.s32.totalorder %s86, %s87
      %p96 = scmp.eq.s32.totalorder %s34, 0
      %p97 = por %p95, %p96
      %p98 = scmp.ne.s32.totalorder %s86, %s87
      %p99 = scmp.eq.s32.totalorder %s35, 1
      %p100 = por %p98, %p99
      %p102 = scmp.ne.s32.totalorder %s87, %s101
      %p103 = scmp.eq.s32.totalorder %s35, 0
      %p104 = por %p102, %p103
      %s106 = sadd.s32 %s105, 1
      %p109 = scmp.eq.s32.totalorder %s29, 1
      %p110 = scmp.ne.s32.totalorder %s105, %s107
      %p111 = scmp.eq.s32.totalorder %s29, 0
      %p112 = por %p110, %p111
      %p113 = scmp.ne.s32.totalorder %s105, %s107
      %p114 = scmp.eq.s32.totalorder %s34, 1
      %p115 = por %p113, %p114
      %p116 = scmp.ne.s32.totalorder %s107, %s108
      %p117 = scmp.eq.s32.totalorder %s34, 0
      %p118 = por %p116, %p117
      %p119 = scmp.ne.s32.totalorder %s107, %s108
      %p120 = scmp.eq.s32.totalorder %s35, 1
      %p121 = por %p119, %p120
      %p123 = scmp.ne.s32.totalorder %s108, %s122
      %p124 = scmp.eq.s32.totalorder %s35, 0
      %p125 = por %p123, %p124
      %s127 = sadd.s32 %s126, 1
      %p130 = scmp.eq.s32.totalorder %s29, 1
      %p131 = scmp.ne.s32.totalorder %s126, %s128
      %p132 = scmp.eq.s32.totalorder %s29, 0
      %p133 = por %p131, %p132
      %p134 = scmp.ne.s32.totalorder %s126, %s128
      %p135 = scmp.eq.s32.totalorder %s34, 1
      %p136 = por %p134, %p135
      %p137 = scmp.ne.s32.totalorder %s128, %s129
      %p138 = scmp.eq.s32.totalorder %s34, 0
      %p139 = por %p137, %p138
      %p140 = scmp.ne.s32.totalorder %s128, %s129
      %p141 = scmp.eq.s32.totalorder %s35, 1
      %p142 = por %p140, %p141
      %p144 = scmp.ne.s32.totalorder %s129, %s143
      %p145 = scmp.eq.s32.totalorder %s35, 0
      %p146 = por %p144, %p145
      %s148 = sadd.s32 %s147, 1
      %p151 = scmp.eq.s32.totalorder %s29, 1
      %p152 = scmp.ne.s32.totalorder %s147, %s149
      %p153 = scmp.eq.s32.totalorder %s29, 0
      %p154 = por %p152, %p153
      %p155 = scmp.ne.s32.totalorder %s147, %s149
      %p156 = scmp.eq.s32.totalorder %s34, 1
      %p157 = por %p155, %p156
      %p158 = scmp.ne.s32.totalorder %s149, %s150
      %p159 = scmp.eq.s32.totalorder %s34, 0
      %p160 = por %p158, %p159
      %p161 = scmp.ne.s32.totalorder %s149, %s150
      %p162 = scmp.eq.s32.totalorder %s35, 1
      %p163 = por %p161, %p162
      %p165 = scmp.ne.s32.totalorder %s150, %s164
      %p166 = scmp.eq.s32.totalorder %s35, 0
      %p167 = por %p165, %p166
      %s169 = sadd.s32 %s168, 1
      %p172 = scmp.eq.s32.totalorder %s29, 1
      %p173 = scmp.ne.s32.totalorder %s168, %s170
      %p174 = scmp.eq.s32.totalorder %s29, 0
      %p175 = por %p173, %p174
      %p176 = scmp.ne.s32.totalorder %s168, %s170
      %p177 = scmp.eq.s32.totalorder %s34, 1
      %p178 = por %p176, %p177
      %p179 = scmp.ne.s32.totalorder %s170, %s171
      %p180 = scmp.eq.s32.totalorder %s34, 0
      %p181 = por %p179, %p180
      %p182 = scmp.ne.s32.totalorder %s170, %s171
      %p183 = scmp.eq.s32.totalorder %s35, 1
      %p184 = por %p182, %p183
      %p186 = scmp.ne.s32.totalorder %s171, %s185
      %p187 = scmp.eq.s32.totalorder %s35, 0
      %p188 = por %p186, %p187
      %s190 = sadd.s32 %s189, 1
      %p193 = scmp.eq.s32.totalorder %s29, 1
      %p194 = scmp.ne.s32.totalorder %s189, %s191
      %p195 = scmp.eq.s32.totalorder %s29, 0
      %p196 = por %p194, %p195
      %p197 = scmp.ne.s32.totalorder %s189, %s191
      %p198 = scmp.eq.s32.totalorder %s34, 1
      %p199 = por %p197, %p198
      %p200 = scmp.ne.s32.totalorder %s191, %s192
      %p201 = scmp.eq.s32.totalorder %s34, 0
      %p202 = por %p200, %p201
      %p203 = scmp.ne.s32.totalorder %s191, %s192
      %p204 = scmp.eq.s32.totalorder %s35, 1
      %p205 = por %p203, %p204
      %p207 = scmp.ne.s32.totalorder %s192, %s206
      %p208 = scmp.eq.s32.totalorder %s35, 0
      %p209 = por %p207, %p208
      %s211 = sadd.s32 %s210, 1
      %p214 = scmp.eq.s32.totalorder %s29, 1
      %p215 = scmp.ne.s32.totalorder %s210, %s212
      %p216 = scmp.eq.s32.totalorder %s29, 0
      %p217 = por %p215, %p216
      %p218 = scmp.ne.s32.totalorder %s210, %s212
      %p219 = scmp.eq.s32.totalorder %s34, 1
      %p220 = por %p218, %p219
      %p221 = scmp.ne.s32.totalorder %s212, %s213
      %p222 = scmp.eq.s32.totalorder %s34, 0
      %p223 = por %p221, %p222
      %p224 = scmp.ne.s32.totalorder %s212, %s213
      %p225 = scmp.eq.s32.totalorder %s35, 1
      %p226 = por %p224, %p225
      %p228 = scmp.ne.s32.totalorder %s213, %s227
      %p229 = scmp.eq.s32.totalorder %s35, 0
      %p230 = por %p228, %p229
      %s232 = sadd.s32 %s231, 1
      %p235 = scmp.eq.s32.totalorder %s29, 1
      %p236 = scmp.ne.s32.totalorder %s231, %s233
      %p237 = scmp.eq.s32.totalorder %s29, 0
      %p238 = por %p236, %p237
      %p239 = scmp.ne.s32.totalorder %s231, %s233
      %p240 = scmp.eq.s32.totalorder %s34, 1
      %p241 = por %p239, %p240
      %p242 = scmp.ne.s32.totalorder %s233, %s234
      %p243 = scmp.eq.s32.totalorder %s34, 0
      %p244 = por %p242, %p243
      %p245 = scmp.ne.s32.totalorder %s233, %s234
      %p246 = scmp.eq.s32.totalorder %s35, 1
      %p247 = por %p245, %p246
      %p249 = scmp.ne.s32.totalorder %s234, %s248
      %p250 = scmp.eq.s32.totalorder %s35, 0
      %p251 = por %p249, %p250
      %s253 = sadd.s32 %s252, 1
      %p256 = scmp.eq.s32.totalorder %s29, 1
      %p257 = scmp.ne.s32.totalorder %s252, %s254
      %p258 = scmp.eq.s32.totalorder %s29, 0
      %p259 = por %p257, %p258
      %p260 = scmp.ne.s32.totalorder %s252, %s254
      %p261 = scmp.eq.s32.totalorder %s34, 1
      %p262 = por %p260, %p261
      %p263 = scmp.ne.s32.totalorder %s254, %s255
      %p264 = scmp.eq.s32.totalorder %s34, 0
      %p265 = por %p263, %p264
      %p266 = scmp.ne.s32.totalorder %s254, %s255
      %p267 = scmp.eq.s32.totalorder %s35, 1
      %p268 = por %p266, %p267
      %p270 = scmp.ne.s32.totalorder %s255, %s269
      %p271 = scmp.eq.s32.totalorder %s35, 0
      %p272 = por %p270, %p271
      %s274 = sadd.s32 %s273, 1
      %p277 = scmp.eq.s32.totalorder %s29, 1
      %p278 = scmp.ne.s32.totalorder %s273, %s275
      %p279 = scmp.eq.s32.totalorder %s29, 0
      %p280 = por %p278, %p279
      %p281 = scmp.ne.s32.totalorder %s273, %s275
      %p282 = scmp.eq.s32.totalorder %s34, 1
      %p283 = por %p281, %p282
      %p284 = scmp.ne.s32.totalorder %s275, %s276
      %p285 = scmp.eq.s32.totalorder %s34, 0
      %p286 = por %p284, %p285
      %p287 = scmp.ne.s32.totalorder %s275, %s276
      %p288 = scmp.eq.s32.totalorder %s35, 1
      %p289 = por %p287, %p288
      %p291 = scmp.ne.s32.totalorder %s276, %s290
      %p292 = scmp.eq.s32.totalorder %s35, 0
      %p293 = por %p291, %p292
      %s295 = sadd.s32 %s294, 1
      %p298 = scmp.eq.s32.totalorder %s29, 1
      %p299 = scmp.ne.s32.totalorder %s294, %s296
      %p300 = scmp.eq.s32.totalorder %s29, 0
      %p301 = por %p299, %p300
      %p302 = scmp.ne.s32.totalorder %s294, %s296
      %p303 = scmp.eq.s32.totalorder %s34, 1
      %p304 = por %p302, %p303
      %p305 = scmp.ne.s32.totalorder %s296, %s297
      %p306 = scmp.eq.s32.totalorder %s34, 0
      %p307 = por %p305, %p306
      %p308 = scmp.ne.s32.totalorder %s296, %s297
      %p309 = scmp.eq.s32.totalorder %s35, 1
      %p310 = por %p308, %p309
      %p312 = scmp.ne.s32.totalorder %s297, %s311
      %p313 = scmp.eq.s32.totalorder %s35, 0
      %p314 = por %p312, %p313
      %s316 = sadd.s32 %s315, 1
      %p319 = scmp.eq.s32.totalorder %s29, 1
      %p320 = scmp.ne.s32.totalorder %s315, %s317
      %p321 = scmp.eq.s32.totalorder %s29, 0
      %p322 = por %p320, %p321
      %p323 = scmp.ne.s32.totalorder %s315, %s317
      %p324 = scmp.eq.s32.totalorder %s34, 1
      %p325 = por %p323, %p324
      %p326 = scmp.ne.s32.totalorder %s317, %s318
      %p327 = scmp.eq.s32.totalorder %s34, 0
      %p328 = por %p326, %p327
      %p329 = scmp.ne.s32.totalorder %s317, %s318
      %p330 = scmp.eq.s32.totalorder %s35, 1
      %p331 = por %p329, %p330
      %p333 = scmp.ne.s32.totalorder %s318, %s332
      %p334 = scmp.eq.s32.totalorder %s35, 0
      %p335 = por %p333, %p334
      %s337 = sadd.s32 %s336, 1
      %p340 = scmp.eq.s32.totalorder %s29, 1
      %p341 = scmp.ne.s32.totalorder %s336, %s338
      %p342 = scmp.eq.s32.totalorder %s29, 0
      %p343 = por %p341, %p342
      %p344 = scmp.ne.s32.totalorder %s336, %s338
      %p345 = scmp.eq.s32.totalorder %s34, 1
      %p346 = por %p344, %p345
      %p347 = scmp.ne.s32.totalorder %s338, %s339
      %p348 = scmp.eq.s32.totalorder %s34, 0
      %p349 = por %p347, %p348
      %p350 = scmp.ne.s32.totalorder %s338, %s339
      %p351 = scmp.eq.s32.totalorder %s35, 1
      %p352 = por %p350, %p351
      %p354 = scmp.ne.s32.totalorder %s339, %s353
      %p355 = scmp.eq.s32.totalorder %s35, 0
      %p356 = por %p354, %p355
      %s357 = ssub.s32 %s29, %s36
      %p358 = scmp.eq.s32.totalorder %s357, 0
      %s360 = sadd.s32 %s359, 1
      %s361 = scalar_select %p358, %s359, %s360
      %p364 = pneg %p358
      %p365 = scmp.eq.s32.totalorder %s29, 1
      %p366 = por %p364, %p365
      %p367 = scmp.ne.s32.totalorder %s359, %s362
      %p368 = scmp.eq.s32.totalorder %s29, 0
      %p369 = por %p367, %p368
      %p370 = scmp.ne.s32.totalorder %s359, %s362
      %p371 = scmp.eq.s32.totalorder %s34, 1
      %p372 = por %p370, %p371
      %p373 = scmp.ne.s32.totalorder %s362, %s363
      %p374 = scmp.eq.s32.totalorder %s34, 0
      %p375 = por %p373, %p374
      %p376 = scmp.ne.s32.totalorder %s362, %s363
      %p377 = scmp.eq.s32.totalorder %s35, 1
      %p378 = por %p376, %p377
      %p380 = scmp.ne.s32.totalorder %s363, %s379
      %p381 = scmp.eq.s32.totalorder %s35, 0
      %p382 = por %p380, %p381
      %p383 = scmp.le.s32.totalorder 1, %s29
      %p384 = scmp.lt.s32.totalorder %s29, 3
      %p385 = pnand %p383, %p384
      %p386 = pneg %p385
      // Predicated region
      $region9: #{pia_forward.1} parent=5 // pred_check
        _
      $region10: #{pia_forward.1} parent=5 // pred_check_branch
        %388 = sbr.rel (%p385) target = $region12
      $region11: #{pia_forward.1} parent=5 // pred_region
        %s389 = ssub.s32 %s29, 1
        // Predicated region
        $region13: #{pia_forward.1} parent=11 // pred_check
          %p390 = pneg %p76
        $region14: #{pia_forward.1} parent=11 // pred_check_branch
          %392 = sbr.rel (%p390) target = $region16
        $region15: #{pia_forward.1} parent=11 // pred_region
          %s394 = ssub.s32 256, 256
          %395 = vsyncadd [#allocation3], %s394
          %s396 = sshll.u32 [#allocation2], 4
          %s397 = int_to_ptr.vmem [resolvable:$true] %s396
          %402 = dma.hbm_to_vmem [thread:$0]  %s1, 256, %s397, [#allocation3], 128, 128, 8
        $region16: #{pia_forward.1} parent=11 // pred_fallthru
          _
        // Predicated region
        $region17: #{pia_forward.1} parent=11 // pred_check
          %p403 = pneg %p97
        $region18: #{pia_forward.1} parent=11 // pred_check_branch
          %405 = sbr.rel (%p403) target = $region20
        $region19: #{pia_forward.1} parent=11 // pred_region
          %s407 = ssub.s32 16, 16
          %408 = vsyncadd [#allocation5], %s407
          %s410 = sshll.u32 [#allocation4], 4
          %s411 = int_to_ptr.vmem [resolvable:$true] %s410
          %413 = dma.hbm_to_vmem [thread:$0]  %s2, 16, %s411, [#allocation5]
        $region20: #{pia_forward.1} parent=11 // pred_fallthru
          _
        // Predicated region
        $region21: #{pia_forward.1} parent=11 // pred_check
          %p414 = pneg %p118
        $region22: #{pia_forward.1} parent=11 // pred_check_branch
          %416 = sbr.rel (%p414) target = $region24
        $region23: #{pia_forward.1} parent=11 // pred_region
          %s418 = ssub.s32 512, 512
          %419 = vsyncadd [#allocation5], %s418
          %s420 = sshll.u32 [#allocation6], 4
          %s421 = int_to_ptr.vmem [resolvable:$true] %s420
          %426 = dma.hbm_to_vmem [thread:$0]  %s3, 512, %s421, [#allocation5], 128, 128, 8
        $region24: #{pia_forward.1} parent=11 // pred_fallthru
          _
        // Predicated region
        $region25: #{pia_forward.1} parent=11 // pred_check
          %p427 = pneg %p139
        $region26: #{pia_forward.1} parent=11 // pred_check_branch
          %429 = sbr.rel (%p427) target = $region28
        $region27: #{pia_forward.1} parent=11 // pred_region
          %s431 = ssub.s32 16, 16
          %432 = vsyncadd [#allocation8], %s431
          %s434 = sshll.u32 [#allocation7], 4
          %s435 = int_to_ptr.vmem [resolvable:$true] %s434
          %437 = dma.hbm_to_vmem [thread:$0]  %s4, 16, %s435, [#allocation8]
        $region28: #{pia_forward.1} parent=11 // pred_fallthru
          _
        // Predicated region
        $region29: #{pia_forward.1} parent=11 // pred_check
          %p438 = pneg %p160
        $region30: #{pia_forward.1} parent=11 // pred_check_branch
          %440 = sbr.rel (%p438) target = $region32
        $region31: #{pia_forward.1} parent=11 // pred_region
          %s442 = ssub.s32 1024, 1024
          %443 = vsyncadd [#allocation8], %s442
          %s444 = sshll.u32 [#allocation9], 4
          %s445 = int_to_ptr.vmem [resolvable:$true] %s444
          %450 = dma.hbm_to_vmem [thread:$0]  %s5, 1024, %s445, [#allocation8], 128, 128, 8
        $region32: #{pia_forward.1} parent=11 // pred_fallthru
          _
        // Predicated region
        $region33: #{pia_forward.1} parent=11 // pred_check
          %p451 = pneg %p181
        $region34: #{pia_forward.1} parent=11 // pred_check_branch
          %453 = sbr.rel (%p451) target = $region36
        $region35: #{pia_forward.1} parent=11 // pred_region
          %s455 = ssub.s32 16, 16
          %456 = vsyncadd [#allocation11], %s455
          %s458 = sshll.u32 [#allocation10], 4
          %s459 = int_to_ptr.vmem [resolvable:$true] %s458
          %461 = dma.hbm_to_vmem [thread:$0]  %s6, 16, %s459, [#allocation11]
        $region36: #{pia_forward.1} parent=11 // pred_fallthru
          _
        // Predicated region
        $region37: #{pia_forward.1} parent=11 // pred_check
          %p462 = pneg %p202
        $region38: #{pia_forward.1} parent=11 // pred_check_branch
          %464 = sbr.rel (%p462) target = $region40
        $region39: #{pia_forward.1} parent=11 // pred_region
          %s466 = ssub.s32 4096, 4096
          %467 = vsyncadd [#allocation11], %s466
          %s468 = sshll.u32 [#allocation12], 4
          %s469 = int_to_ptr.vmem [resolvable:$true] %s468
          %474 = dma.hbm_to_vmem [thread:$0]  %s7, 4096, %s469, [#allocation11], 256, 256, 16
        $region40: #{pia_forward.1} parent=11 // pred_fallthru
          _
        // Predicated region
        $region41: #{pia_forward.1} parent=11 // pred_check
          %p475 = pneg %p223
        $region42: #{pia_forward.1} parent=11 // pred_check_branch
          %477 = sbr.rel (%p475) target = $region44
        $region43: #{pia_forward.1} parent=11 // pred_region
          %s479 = ssub.s32 32, 32
          %480 = vsyncadd [#allocation14], %s479
          %s482 = sshll.u32 [#allocation13], 4
          %s483 = int_to_ptr.vmem [resolvable:$true] %s482
          %485 = dma.hbm_to_vmem [thread:$0]  %s8, 32, %s483, [#allocation14]
        $region44: #{pia_forward.1} parent=11 // pred_fallthru
          _
        // Predicated region
        $region45: #{pia_forward.1} parent=11 // pred_check
          %p486 = pneg %p244
        $region46: #{pia_forward.1} parent=11 // pred_check_branch
          %488 = sbr.rel (%p486) target = $region48
        $region47: #{pia_forward.1} parent=11 // pred_region
          %s490 = ssub.s32 16384, 16384
          %491 = vsyncadd [#allocation14], %s490
          %s492 = sshll.u32 [#allocation15], 4
          %s493 = int_to_ptr.vmem [resolvable:$true] %s492
          %498 = dma.hbm_to_vmem [thread:$0]  %s9, 16384, %s493, [#allocation14], 512, 512, 32
        $region48: #{pia_forward.1} parent=11 // pred_fallthru
          _
        // Predicated region
        $region49: #{pia_forward.1} parent=11 // pred_check
          %p499 = pneg %p265
        $region50: #{pia_forward.1} parent=11 // pred_check_branch
          %501 = sbr.rel (%p499) target = $region52
        $region51: #{pia_forward.1} parent=11 // pred_region
          %s503 = ssub.s32 64, 64
          %504 = vsyncadd [#allocation17], %s503
          %s506 = sshll.u32 [#allocation16], 4
          %s507 = int_to_ptr.vmem [resolvable:$true] %s506
          %509 = dma.hbm_to_vmem [thread:$0]  %s10, 64, %s507, [#allocation17]
        $region52: #{pia_forward.1} parent=11 // pred_fallthru
          _
        // Predicated region
        $region53: #{pia_forward.1} parent=11 // pred_check
          %p510 = pneg %p286
        $region54: #{pia_forward.1} parent=11 // pred_check_branch
          %512 = sbr.rel (%p510) target = $region56
        $region55: #{pia_forward.1} parent=11 // pred_region
          %s514 = ssub.s32 98304, 98304
          %515 = vsyncadd [#allocation17], %s514
          %s516 = sshll.u32 [#allocation18], 4
          %s517 = int_to_ptr.vmem [resolvable:$true] %s516
          %522 = dma.hbm_to_vmem [thread:$0]  %s11, 98304, %s517, [#allocation17], 1536, 1536, 96
        $region56: #{pia_forward.1} parent=11 // pred_fallthru
          _
        // Predicated region
        $region57: #{pia_forward.1} parent=11 // pred_check
          %p523 = pneg %p307
        $region58: #{pia_forward.1} parent=11 // pred_check_branch
          %525 = sbr.rel (%p523) target = $region60
        $region59: #{pia_forward.1} parent=11 // pred_region
          %s527 = ssub.s32 192, 192
          %528 = vsyncadd [#allocation20], %s527
          %s530 = sshll.u32 [#allocation19], 4
          %s531 = int_to_ptr.vmem [resolvable:$true] %s530
          %533 = dma.hbm_to_vmem [thread:$0]  %s12, 192, %s531, [#allocation20]
        $region60: #{pia_forward.1} parent=11 // pred_fallthru
          _
        // Predicated region
        $region61: #{pia_forward.1} parent=11 // pred_check
          %p534 = pneg %p328
        $region62: #{pia_forward.1} parent=11 // pred_check_branch
          %536 = sbr.rel (%p534) target = $region64
        $region63: #{pia_forward.1} parent=11 // pred_region
          %s538 = ssub.s32 1024, 1024
          %539 = vsyncadd [#allocation20], %s538
          %s540 = sshll.u32 [#allocation21], 4
          %s541 = int_to_ptr.vmem [resolvable:$true] %s540
          %546 = dma.hbm_to_vmem [thread:$0]  %s13, 1024, %s541, [#allocation20], 512, 512, 32
        $region64: #{pia_forward.1} parent=11 // pred_fallthru
          _
        // Predicated region
        $region65: #{pia_forward.1} parent=11 // pred_check
          %p547 = pneg %p349
        $region66: #{pia_forward.1} parent=11 // pred_check_branch
          %549 = sbr.rel (%p547) target = $region68
        $region67: #{pia_forward.1} parent=11 // pred_region
          %s551 = ssub.s32 128, 128
          %552 = vsyncadd [#allocation23], %s551
          %s554 = sshll.u32 [#allocation22], 4
          %s555 = int_to_ptr.vmem [resolvable:$true] %s554
          %557 = dma.hbm_to_vmem [thread:$0]  %s14, 128, %s555, [#allocation23]
        $region68: #{pia_forward.1} parent=11 // pred_fallthru
          _
      $region12: #{pia_forward.1} parent=5 // pred_fallthru
        _
      %p558 = scmp.lt.s32.totalorder %s29, 2
      // Predicated region
      $region69: #{pia_forward.1} parent=5 // pred_check
        %p559 = pneg %p558
      $region70: #{pia_forward.1} parent=5 // pred_check_branch
        %561 = sbr.rel (%p559) target = $region72
      $region71: #{pia_forward.1} parent=5 // pred_region
        // Predicated region
        $region73: #{pia_forward.1} parent=71 // pred_check
          %p562 = pneg %p49
        $region74: #{pia_forward.1} parent=71 // pred_check_branch
          %564 = sbr.rel (%p562) target = $region76
        $region75: #{pia_forward.1} parent=71 // pred_region
          %p565 = scmp.lt.s32.totalorder %s29, 1
          %s566 = scalar_select %p565, %s29, 1
          %s567 = smul.addr %s566, 8
          %s568 = scalar_lea.vmem %s0, %s567
        $region76: #{pia_forward.1} parent=71 // pred_fallthru
          _
      $region72: #{pia_forward.1} parent=5 // pred_fallthru
        _
      %p569 = scmp.le.s32.totalorder 1, %s29
      %p570 = scmp.lt.s32.totalorder %s29, 3
      %p571 = pnand %p569, %p570
      %p572 = pneg %p571
      // Predicated region
      $region77: #{pia_forward.1} parent=5 // pred_check
        _
      $region78: #{pia_forward.1} parent=5 // pred_check_branch
        %574 = sbr.rel (%p571) target = $region80
      $region79: #{pia_forward.1} parent=5 // pred_region
        %s575 = ssub.s32 %s29, 1
        // Predicated region
        $region81: #{pia_forward.1} parent=79 // pred_check
          %p576 = pneg %p76
        $region82: #{pia_forward.1} parent=79 // pred_check_branch
          %578 = sbr.rel (%p576) target = $region84
        $region83: #{pia_forward.1} parent=79 // pred_region
          %579 = dma.done [#allocation3], 256
        $region84: #{pia_forward.1} parent=79 // pred_fallthru
          _
        // Predicated region
        $region85: #{pia_forward.1} parent=79 // pred_check
          %p580 = pneg %p97
        $region86: #{pia_forward.1} parent=79 // pred_check_branch
          %582 = sbr.rel (%p580) target = $region88
        $region87: #{pia_forward.1} parent=79 // pred_region
          %583 = dma.done [#allocation5], 16
        $region88: #{pia_forward.1} parent=79 // pred_fallthru
          _
        // Predicated region
        $region89: #{pia_forward.1} parent=79 // pred_check
          %p584 = pneg %p118
        $region90: #{pia_forward.1} parent=79 // pred_check_branch
          %586 = sbr.rel (%p584) target = $region92
        $region91: #{pia_forward.1} parent=79 // pred_region
          %587 = dma.done [#allocation5], 512
        $region92: #{pia_forward.1} parent=79 // pred_fallthru
          _
        // Predicated region
        $region93: #{pia_forward.1} parent=79 // pred_check
          %p588 = pneg %p139
        $region94: #{pia_forward.1} parent=79 // pred_check_branch
          %590 = sbr.rel (%p588) target = $region96
        $region95: #{pia_forward.1} parent=79 // pred_region
          %591 = dma.done [#allocation8], 16
        $region96: #{pia_forward.1} parent=79 // pred_fallthru
          _
        // Predicated region
        $region97: #{pia_forward.1} parent=79 // pred_check
          %p592 = pneg %p160
        $region98: #{pia_forward.1} parent=79 // pred_check_branch
          %594 = sbr.rel (%p592) target = $region100
        $region99: #{pia_forward.1} parent=79 // pred_region
          %595 = dma.done [#allocation8], 1024
        $region100: #{pia_forward.1} parent=79 // pred_fallthru
          _
        // Predicated region
        $region101: #{pia_forward.1} parent=79 // pred_check
          %p596 = pneg %p181
        $region102: #{pia_forward.1} parent=79 // pred_check_branch
          %598 = sbr.rel (%p596) target = $region104
        $region103: #{pia_forward.1} parent=79 // pred_region
          %599 = dma.done [#allocation11], 16
        $region104: #{pia_forward.1} parent=79 // pred_fallthru
          _
        // Predicated region
        $region105: #{pia_forward.1} parent=79 // pred_check
          %p600 = pneg %p202
        $region106: #{pia_forward.1} parent=79 // pred_check_branch
          %602 = sbr.rel (%p600) target = $region108
        $region107: #{pia_forward.1} parent=79 // pred_region
          %603 = dma.done [#allocation11], 4096
        $region108: #{pia_forward.1} parent=79 // pred_fallthru
          _
        // Predicated region
        $region109: #{pia_forward.1} parent=79 // pred_check
          %p604 = pneg %p223
        $region110: #{pia_forward.1} parent=79 // pred_check_branch
          %606 = sbr.rel (%p604) target = $region112
        $region111: #{pia_forward.1} parent=79 // pred_region
          %607 = dma.done [#allocation14], 32
        $region112: #{pia_forward.1} parent=79 // pred_fallthru
          _
        // Predicated region
        $region113: #{pia_forward.1} parent=79 // pred_check
          %p608 = pneg %p244
        $region114: #{pia_forward.1} parent=79 // pred_check_branch
          %610 = sbr.rel (%p608) target = $region116
        $region115: #{pia_forward.1} parent=79 // pred_region
          %611 = dma.done [#allocation14], 16384
        $region116: #{pia_forward.1} parent=79 // pred_fallthru
          _
        // Predicated region
        $region117: #{pia_forward.1} parent=79 // pred_check
          %p612 = pneg %p265
        $region118: #{pia_forward.1} parent=79 // pred_check_branch
          %614 = sbr.rel (%p612) target = $region120
        $region119: #{pia_forward.1} parent=79 // pred_region
          %615 = dma.done [#allocation17], 64
        $region120: #{pia_forward.1} parent=79 // pred_fallthru
          _
        // Predicated region
        $region121: #{pia_forward.1} parent=79 // pred_check
          %p616 = pneg %p286
        $region122: #{pia_forward.1} parent=79 // pred_check_branch
          %618 = sbr.rel (%p616) target = $region124
        $region123: #{pia_forward.1} parent=79 // pred_region
          %619 = dma.done [#allocation17], 98304
        $region124: #{pia_forward.1} parent=79 // pred_fallthru
          _
        // Predicated region
        $region125: #{pia_forward.1} parent=79 // pred_check
          %p620 = pneg %p307
        $region126: #{pia_forward.1} parent=79 // pred_check_branch
          %622 = sbr.rel (%p620) target = $region128
        $region127: #{pia_forward.1} parent=79 // pred_region
          %623 = dma.done [#allocation20], 192
        $region128: #{pia_forward.1} parent=79 // pred_fallthru
          _
        // Predicated region
        $region129: #{pia_forward.1} parent=79 // pred_check
          %p624 = pneg %p328
        $region130: #{pia_forward.1} parent=79 // pred_check_branch
          %626 = sbr.rel (%p624) target = $region132
        $region131: #{pia_forward.1} parent=79 // pred_region
          %627 = dma.done [#allocation20], 1024
        $region132: #{pia_forward.1} parent=79 // pred_fallthru
          _
        // Predicated region
        $region133: #{pia_forward.1} parent=79 // pred_check
          %p628 = pneg %p349
        $region134: #{pia_forward.1} parent=79 // pred_check_branch
          %630 = sbr.rel (%p628) target = $region136
        $region135: #{pia_forward.1} parent=79 // pred_region
          %631 = dma.done [#allocation23], 128
        $region136: #{pia_forward.1} parent=79 // pred_fallthru
          _
        %p632 = scmp.lt.s32.totalorder %s34, 1
        %s633 = scalar_select %p632, %s34, 1
        %s634 = smul.addr %s633, 8
        %s635 = scalar_lea.vmem %s0, %s634
        %p636 = pneg %p55
        %p637 = pneg %p52
        %p638 = pneg %p76
        %p639 = pneg %p73
        %p640 = pneg %p97
        %p641 = pneg %p94
        %p642 = pneg %p118
        %p643 = pneg %p115
        %p644 = pneg %p139
        %p645 = pneg %p136
        %p646 = pneg %p160
        %p647 = pneg %p157
        %p648 = pneg %p181
        %p649 = pneg %p178
        %p650 = pneg %p202
        %p651 = pneg %p199
        %p652 = pneg %p223
        %p653 = pneg %p220
        %p654 = pneg %p244
        %p655 = pneg %p241
        %p656 = pneg %p265
        %p657 = pneg %p262
        %p658 = pneg %p286
        %p659 = pneg %p283
        %p660 = pneg %p307
        %p661 = pneg %p304
        %p662 = pneg %p328
        %p663 = pneg %p325
        %p664 = pneg %p349
        %p665 = pneg %p346
        %p666 = pneg %p375
        %p667 = pneg %p372
        %p668 = scmp.lt.s32.totalorder %s34, 1
        %s669 = scalar_select %p668, %s34, 1
        %s670 = smul.addr %s669, 8
        %s671 = scalar_lea.vmem %s15, %s670
        %p672 = scmp.lt.s32.totalorder %s34, 1
        %s673 = scalar_select %p672, %s34, 1
        %s674 = smul.addr %s673, 8
        %s675 = scalar_lea.vmem %s0, %s674
        %p676 = scmp.lt.s32.totalorder %s34, 1
        %s677 = scalar_select %p676, %s34, 1
        %s678 = smul.addr %s677, 8
        %s679 = scalar_lea.vmem %s15, %s678
        %v680 = vld [vmem:[%s675] sm:$0xff]
        %v681 = vld [vmem:[#allocation2] sm:$0xff]
        %v682 = vld [vmem:[#allocation2 + $0x8] sm:$0xff]
        %v683 = vld [vmem:[#allocation4] sm:$0x1]
        %v685 = vlaneseq
        %v686 = vshrl.u32 %v685, 7
        %v687 = vsub.s32 0, %v686
        %v688 = vrot.slane %v683, %v687
        %vm690 = vcmask 130048
        %v692 = vsel %vm690, %v680, 0
        %694 = vmatprep.subr.mxu0 0.0
        %695 = vmatpush1.msra.mxu0 %v681
        %696 = vmatprep.subr.mxu0 0.0
        %697 = vmatpush1.msra.mxu0 %v682
        %698 = vmatprep.subr.mxu0 0.0
        %699 = vmatpush1.msra.mxu0 0.0
        %700 = vmatprep.subr.mxu0 0.0
        %701 = vmatpush1.msra.mxu0 0.0
        %702 = vmatprep.subr.mxu0 0.0
        %703 = vmatpush1.msra.mxu0 0.0
        %704 = vmatprep.subr.mxu0 0.0
        %705 = vmatpush1.msra.mxu0 0.0
        %706 = vmatprep.subr.mxu0 0.0
        %707 = vmatpush1.msra.mxu0 0.0
        %708 = vmatprep.subr.mxu0 0.0
        %709 = vmatpush1.msra.mxu0 0.0
        %710 = vmatprep.subr.mxu0 0.0
        %711 = vmatpush1.msra.mxu0 0.0
        %712 = vmatprep.subr.mxu0 0.0
        %713 = vmatpush1.msra.mxu0 0.0
        %714 = vmatprep.subr.mxu0 0.0
        %715 = vmatpush1.msra.mxu0 0.0
        %716 = vmatprep.subr.mxu0 0.0
        %717 = vmatpush1.msra.mxu0 0.0
        %718 = vmatprep.subr.mxu0 0.0
        %719 = vmatpush1.msra.mxu0 0.0
        %720 = vmatprep.subr.mxu0 0.0
        %721 = vmatpush1.msra.mxu0 0.0
        %722 = vmatprep.subr.mxu0 0.0
        %723 = vmatpush1.msra.mxu0 0.0
        %724 = vmatprep.subr.mxu0 0.0
        %725 = vmatpush1.msra.mxu0 0.0
        %726 = vmatprep.subr.mxu0 0.0
        %727 = vmatpush1.msra.mxu0 0.0
        %728 = vmatprep.subr.mxu0 0.0
        %729 = vmatpush1.msra.mxu0 0.0
        %730 = vmatprep.subr.mxu0 0.0
        %731 = vmatpush1.msra.mxu0 0.0
        %732 = vmatprep.subr.mxu0 0.0
        %733 = vmatpush1.msra.mxu0 0.0
        %734 = vmatprep.subr.mxu0 0.0
        %735 = vmatpush1.msra.mxu0 0.0
        %736 = vmatprep.subr.mxu0 0.0
        %737 = vmatpush1.msra.mxu0 0.0
        %738 = vmatprep.subr.mxu0 0.0
        %739 = vmatpush1.msra.mxu0 0.0
        %740 = vmatprep.subr.mxu0 0.0
        %741 = vmatpush1.msra.mxu0 0.0
        %742 = vmatprep.subr.mxu0 0.0
        %743 = vmatpush1.msra.mxu0 0.0
        %744 = vmatprep.subr.mxu0 0.0
        %745 = vmatpush1.msra.mxu0 0.0
        %746 = vmatprep.subr.mxu0 0.0
        %747 = vmatpush1.msra.mxu0 0.0
        %748 = vmatprep.subr.mxu0 0.0
        %749 = vmatpush1.msra.mxu0 0.0
        %750 = vmatprep.subr.mxu0 0.0
        %751 = vmatpush1.msra.mxu0 0.0
        %752 = vmatprep.subr.mxu0 0.0
        %753 = vmatpush1.msra.mxu0 0.0
        %754 = vmatprep.subr.mxu0 0.0
        %755 = vmatpush1.msra.mxu0 0.0
        %756 = vmatprep.subr.mxu0 0.0
        %757 = vmatpush1.msra.mxu0 0.0
        %758 = vmatprep.mubr.f32.mxu0 0.0
        %759 = vmatmul.mubr.f32.gmra.mrb[0].mxu0 %v692
        %v760 = vpop.f32.mrb[0].mxu0
        %v761 = vadd.f32 %v688, %v760
        %v762 = vpop.f32.mrb[0].mxu0
        %763 = vdwg.mxu0
        %vm764 = vcmp.gt.f32.partialorder %v761, 0.0
        %v765 = vmul.f32 %v761, 0.01
        %v766 = vsel %vm764, %v761, %v765
        %v767 = vld [vmem:[#allocation6] sm:$0xff]
        %v768 = vld [vmem:[#allocation6 + $0x8] sm:$0xff]
        %v769 = vld [vmem:[#allocation6 + $0x10] sm:$0xff]
        %v770 = vld [vmem:[#allocation6 + $0x18] sm:$0xff]
        %v771 = vld [vmem:[#allocation7] sm:$0x1]
        %v773 = vlaneseq
        %v774 = vshrl.u32 %v773, 7
        %v775 = vsub.s32 0, %v774
        %v776 = vrot.slane %v771, %v775
        %vm778 = vcmask 261120
        %v780 = vsel %vm778, %v766, 0
        %782 = vmatprep.subr.mxu0 0.0
        %783 = vmatpush1.msra.mxu0 %v767
        %784 = vmatprep.subr.mxu0 0.0
        %785 = vmatpush1.msra.mxu0 %v768
        %786 = vmatprep.subr.mxu0 0.0
        %787 = vmatpush1.msra.mxu0 %v769
        %788 = vmatprep.subr.mxu0 0.0
        %789 = vmatpush1.msra.mxu0 %v770
        %790 = vmatprep.subr.mxu0 0.0
        %791 = vmatpush1.msra.mxu0 0.0
        %792 = vmatprep.subr.mxu0 0.0
        %793 = vmatpush1.msra.mxu0 0.0
        %794 = vmatprep.subr.mxu0 0.0
        %795 = vmatpush1.msra.mxu0 0.0
        %796 = vmatprep.subr.mxu0 0.0
        %797 = vmatpush1.msra.mxu0 0.0
        %798 = vmatprep.subr.mxu0 0.0
        %799 = vmatpush1.msra.mxu0 0.0
        %800 = vmatprep.subr.mxu0 0.0
        %801 = vmatpush1.msra.mxu0 0.0
        %802 = vmatprep.subr.mxu0 0.0
        %803 = vmatpush1.msra.mxu0 0.0
        %804 = vmatprep.subr.mxu0 0.0
        %805 = vmatpush1.msra.mxu0 0.0
        %806 = vmatprep.subr.mxu0 0.0
        %807 = vmatpush1.msra.mxu0 0.0
        %808 = vmatprep.subr.mxu0 0.0
        %809 = vmatpush1.msra.mxu0 0.0
        %810 = vmatprep.subr.mxu0 0.0
        %811 = vmatpush1.msra.mxu0 0.0
        %812 = vmatprep.subr.mxu0 0.0
        %813 = vmatpush1.msra.mxu0 0.0
        %814 = vmatprep.subr.mxu0 0.0
        %815 = vmatpush1.msra.mxu0 0.0
        %816 = vmatprep.subr.mxu0 0.0
        %817 = vmatpush1.msra.mxu0 0.0
        %818 = vmatprep.subr.mxu0 0.0
        %819 = vmatpush1.msra.mxu0 0.0
        %820 = vmatprep.subr.mxu0 0.0
        %821 = vmatpush1.msra.mxu0 0.0
        %822 = vmatprep.subr.mxu0 0.0
        %823 = vmatpush1.msra.mxu0 0.0
        %824 = vmatprep.subr.mxu0 0.0
        %825 = vmatpush1.msra.mxu0 0.0
        %826 = vmatprep.subr.mxu0 0.0
        %827 = vmatpush1.msra.mxu0 0.0
        %828 = vmatprep.subr.mxu0 0.0
        %829 = vmatpush1.msra.mxu0 0.0
        %830 = vmatprep.subr.mxu0 0.0
        %831 = vmatpush1.msra.mxu0 0.0
        %832 = vmatprep.subr.mxu0 0.0
        %833 = vmatpush1.msra.mxu0 0.0
        %834 = vmatprep.subr.mxu0 0.0
        %835 = vmatpush1.msra.mxu0 0.0
        %836 = vmatprep.subr.mxu0 0.0
        %837 = vmatpush1.msra.mxu0 0.0
        %838 = vmatprep.subr.mxu0 0.0
        %839 = vmatpush1.msra.mxu0 0.0
        %840 = vmatprep.subr.mxu0 0.0
        %841 = vmatpush1.msra.mxu0 0.0
        %842 = vmatprep.subr.mxu0 0.0
        %843 = vmatpush1.msra.mxu0 0.0
        %844 = vmatprep.subr.mxu0 0.0
        %845 = vmatpush1.msra.mxu0 0.0
        %846 = vmatprep.mubr.f32.mxu0 0.0
        %847 = vmatmul.mubr.f32.gmra.mrb[0].mxu0 %v780
        %v848 = vpop.f32.mrb[0].mxu0
        %v849 = vadd.f32 %v776, %v848
        %v850 = vpop.f32.mrb[0].mxu0
        %851 = vdwg.mxu0
        %vm852 = vcmp.gt.f32.partialorder %v849, 0.0
        %v853 = vmul.f32 %v849, 0.01
        %v854 = vsel %vm852, %v849, %v853
        %v855 = vld [vmem:[#allocation9] sm:$0xff]
        %v856 = vld [vmem:[#allocation9 + $0x8] sm:$0xff]
        %v857 = vld [vmem:[#allocation9 + $0x10] sm:$0xff]
        %v858 = vld [vmem:[#allocation9 + $0x18] sm:$0xff]
        %v859 = vld [vmem:[#allocation9 + $0x20] sm:$0xff]
        %v860 = vld [vmem:[#allocation9 + $0x28] sm:$0xff]
        %v861 = vld [vmem:[#allocation9 + $0x30] sm:$0xff]
        %v862 = vld [vmem:[#allocation9 + $0x38] sm:$0xff]
        %v863 = vld [vmem:[#allocation10] sm:$0x1]
        %v865 = vlaneseq
        %v866 = vshrl.u32 %v865, 7
        %v867 = vsub.s32 0, %v866
        %v868 = vrot.slane %v863, %v867
        %vm870 = vcmask 523264
        %v872 = vsel %vm870, %v854, 0
        %874 = vmatprep.subr.mxu0 0.0
        %875 = vmatpush1.msra.mxu0 %v855
        %876 = vmatprep.subr.mxu0 0.0
        %877 = vmatpush1.msra.mxu0 %v856
        %878 = vmatprep.subr.mxu0 0.0
        %879 = vmatpush1.msra.mxu0 %v857
        %880 = vmatprep.subr.mxu0 0.0
        %881 = vmatpush1.msra.mxu0 %v858
        %882 = vmatprep.subr.mxu0 0.0
        %883 = vmatpush1.msra.mxu0 %v859
        %884 = vmatprep.subr.mxu0 0.0
        %885 = vmatpush1.msra.mxu0 %v860
        %886 = vmatprep.subr.mxu0 0.0
        %887 = vmatpush1.msra.mxu0 %v861
        %888 = vmatprep.subr.mxu0 0.0
        %889 = vmatpush1.msra.mxu0 %v862
        %890 = vmatprep.subr.mxu0 0.0
        %891 = vmatpush1.msra.mxu0 0.0
        %892 = vmatprep.subr.mxu0 0.0
        %893 = vmatpush1.msra.mxu0 0.0
        %894 = vmatprep.subr.mxu0 0.0
        %895 = vmatpush1.msra.mxu0 0.0
        %896 = vmatprep.subr.mxu0 0.0
        %897 = vmatpush1.msra.mxu0 0.0
        %898 = vmatprep.subr.mxu0 0.0
        %899 = vmatpush1.msra.mxu0 0.0
        %900 = vmatprep.subr.mxu0 0.0
        %901 = vmatpush1.msra.mxu0 0.0
        %902 = vmatprep.subr.mxu0 0.0
        %903 = vmatpush1.msra.mxu0 0.0
        %904 = vmatprep.subr.mxu0 0.0
        %905 = vmatpush1.msra.mxu0 0.0
        %906 = vmatprep.subr.mxu0 0.0
        %907 = vmatpush1.msra.mxu0 0.0
        %908 = vmatprep.subr.mxu0 0.0
        %909 = vmatpush1.msra.mxu0 0.0
        %910 = vmatprep.subr.mxu0 0.0
        %911 = vmatpush1.msra.mxu0 0.0
        %912 = vmatprep.subr.mxu0 0.0
        %913 = vmatpush1.msra.mxu0 0.0
        %914 = vmatprep.subr.mxu0 0.0
        %915 = vmatpush1.msra.mxu0 0.0
        %916 = vmatprep.subr.mxu0 0.0
        %917 = vmatpush1.msra.mxu0 0.0
        %918 = vmatprep.subr.mxu0 0.0
        %919 = vmatpush1.msra.mxu0 0.0
        %920 = vmatprep.subr.mxu0 0.0
        %921 = vmatpush1.msra.mxu0 0.0
        %922 = vmatprep.subr.mxu0 0.0
        %923 = vmatpush1.msra.mxu0 0.0
        %924 = vmatprep.subr.mxu0 0.0
        %925 = vmatpush1.msra.mxu0 0.0
        %926 = vmatprep.subr.mxu0 0.0
        %927 = vmatpush1.msra.mxu0 0.0
        %928 = vmatprep.subr.mxu0 0.0
        %929 = vmatpush1.msra.mxu0 0.0
        %930 = vmatprep.subr.mxu0 0.0
        %931 = vmatpush1.msra.mxu0 0.0
        %932 = vmatprep.subr.mxu0 0.0
        %933 = vmatpush1.msra.mxu0 0.0
        %934 = vmatprep.subr.mxu0 0.0
        %935 = vmatpush1.msra.mxu0 0.0
        %936 = vmatprep.subr.mxu0 0.0
        %937 = vmatpush1.msra.mxu0 0.0
        %938 = vmatprep.mubr.f32.mxu0 0.0
        %939 = vmatmul.mubr.f32.gmra.mrb[0].mxu0 %v872
        %v940 = vpop.f32.mrb[0].mxu0
        %v941 = vadd.f32 %v868, %v940
        %v942 = vpop.f32.mrb[0].mxu0
        %943 = vdwg.mxu0
        %vm944 = vcmp.gt.f32.partialorder %v941, 0.0
        %v945 = vmul.f32 %v941, 0.01
        %v946 = vsel %vm944, %v941, %v945
        %v947 = vld [vmem:[#allocation12] sm:$0xff]
        %v948 = vld [vmem:[#allocation12 + $0x8] sm:$0xff]
        %v949 = vld [vmem:[#allocation12 + $0x10] sm:$0xff]
        %v950 = vld [vmem:[#allocation12 + $0x18] sm:$0xff]
        %v951 = vld [vmem:[#allocation12 + $0x20] sm:$0xff]
        %v952 = vld [vmem:[#allocation12 + $0x28] sm:$0xff]
        %v953 = vld [vmem:[#allocation12 + $0x30] sm:$0xff]
        %v954 = vld [vmem:[#allocation12 + $0x38] sm:$0xff]
        %v955 = vld [vmem:[#allocation12 + $0x40] sm:$0xff]
        %v956 = vld [vmem:[#allocation12 + $0x48] sm:$0xff]
        %v957 = vld [vmem:[#allocation12 + $0x50] sm:$0xff]
        %v958 = vld [vmem:[#allocation12 + $0x58] sm:$0xff]
        %v959 = vld [vmem:[#allocation12 + $0x60] sm:$0xff]
        %v960 = vld [vmem:[#allocation12 + $0x68] sm:$0xff]
        %v961 = vld [vmem:[#allocation12 + $0x70] sm:$0xff]
        %v962 = vld [vmem:[#allocation12 + $0x78] sm:$0xff]
        %v963 = vld [vmem:[#allocation12 + $0x80] sm:$0xff]
        %v964 = vld [vmem:[#allocation12 + $0x88] sm:$0xff]
        %v965 = vld [vmem:[#allocation12 + $0x90] sm:$0xff]
        %v966 = vld [vmem:[#allocation12 + $0x98] sm:$0xff]
        %v967 = vld [vmem:[#allocation12 + $0xa0] sm:$0xff]
        %v968 = vld [vmem:[#allocation12 + $0xa8] sm:$0xff]
        %v969 = vld [vmem:[#allocation12 + $0xb0] sm:$0xff]
        %v970 = vld [vmem:[#allocation12 + $0xb8] sm:$0xff]
        %v971 = vld [vmem:[#allocation12 + $0xc0] sm:$0xff]
        %v972 = vld [vmem:[#allocation12 + $0xc8] sm:$0xff]
        %v973 = vld [vmem:[#allocation12 + $0xd0] sm:$0xff]
        %v974 = vld [vmem:[#allocation12 + $0xd8] sm:$0xff]
        %v975 = vld [vmem:[#allocation12 + $0xe0] sm:$0xff]
        %v976 = vld [vmem:[#allocation12 + $0xe8] sm:$0xff]
        %v977 = vld [vmem:[#allocation12 + $0xf0] sm:$0xff]
        %v978 = vld [vmem:[#allocation12 + $0xf8] sm:$0xff]
        %v979 = vld [vmem:[#allocation13] sm:$0x3]
        %v981 = vlaneseq
        %v982 = vshrl.u32 %v981, 7
        %v983 = vsub.s32 0, %v982
        %v984 = vrot.slane %v979, %v983
        %v985 = vlaneseq
        %v986 = vshrl.u32 %v985, 7
        %v987 = vsub.s32 1, %v986
        %v988 = vrot.slane %v979, %v987
        %991 = vmatprep.subr.mxu0 %v948
        %992 = vmatpush1.msra.mxu0 %v947
        %993 = vmatprep.subr.mxu0 %v950
        %994 = vmatpush1.msra.mxu0 %v949
        %995 = vmatprep.subr.mxu0 %v952
        %996 = vmatpush1.msra.mxu0 %v951
        %997 = vmatprep.subr.mxu0 %v954
        %998 = vmatpush1.msra.mxu0 %v953
        %999 = vmatprep.subr.mxu0 %v956
        %1000 = vmatpush1.msra.mxu0 %v955
        %1001 = vmatprep.subr.mxu0 %v958
        %1002 = vmatpush1.msra.mxu0 %v957
        %1003 = vmatprep.subr.mxu0 %v960
        %1004 = vmatpush1.msra.mxu0 %v959
        %1005 = vmatprep.subr.mxu0 %v962
        %1006 = vmatpush1.msra.mxu0 %v961
        %1007 = vmatprep.subr.mxu0 %v964
        %1008 = vmatpush1.msra.mxu0 %v963
        %1009 = vmatprep.subr.mxu0 %v966
        %1010 = vmatpush1.msra.mxu0 %v965
        %1011 = vmatprep.subr.mxu0 %v968
        %1012 = vmatpush1.msra.mxu0 %v967
        %1013 = vmatprep.subr.mxu0 %v970
        %1014 = vmatpush1.msra.mxu0 %v969
        %1015 = vmatprep.subr.mxu0 %v972
        %1016 = vmatpush1.msra.mxu0 %v971
        %1017 = vmatprep.subr.mxu0 %v974
        %1018 = vmatpush1.msra.mxu0 %v973
        %1019 = vmatprep.subr.mxu0 %v976
        %1020 = vmatpush1.msra.mxu0 %v975
        %1021 = vmatprep.subr.mxu0 %v978
        %1022 = vmatpush1.msra.mxu0 %v977
        %1023 = vmatprep.subr.mxu0 0.0
        %1024 = vmatpush1.msra.mxu0 0.0
        %1025 = vmatprep.subr.mxu0 0.0
        %1026 = vmatpush1.msra.mxu0 0.0
        %1027 = vmatprep.subr.mxu0 0.0
        %1028 = vmatpush1.msra.mxu0 0.0
        %1029 = vmatprep.subr.mxu0 0.0
        %1030 = vmatpush1.msra.mxu0 0.0
        %1031 = vmatprep.subr.mxu0 0.0
        %1032 = vmatpush1.msra.mxu0 0.0
        %1033 = vmatprep.subr.mxu0 0.0
        %1034 = vmatpush1.msra.mxu0 0.0
        %1035 = vmatprep.subr.mxu0 0.0
        %1036 = vmatpush1.msra.mxu0 0.0
        %1037 = vmatprep.subr.mxu0 0.0
        %1038 = vmatpush1.msra.mxu0 0.0
        %1039 = vmatprep.subr.mxu0 0.0
        %1040 = vmatpush1.msra.mxu0 0.0
        %1041 = vmatprep.subr.mxu0 0.0
        %1042 = vmatpush1.msra.mxu0 0.0
        %1043 = vmatprep.subr.mxu0 0.0
        %1044 = vmatpush1.msra.mxu0 0.0
        %1045 = vmatprep.subr.mxu0 0.0
        %1046 = vmatpush1.msra.mxu0 0.0
        %1047 = vmatprep.subr.mxu0 0.0
        %1048 = vmatpush1.msra.mxu0 0.0
        %1049 = vmatprep.subr.mxu0 0.0
        %1050 = vmatpush1.msra.mxu0 0.0
        %1051 = vmatprep.subr.mxu0 0.0
        %1052 = vmatpush1.msra.mxu0 0.0
        %1053 = vmatprep.subr.mxu0 0.0
        %1054 = vmatpush1.msra.mxu0 0.0
        %1055 = vmatprep.mubr.f32.mxu0 0.0
        %1056 = vmatmul.mubr.f32.gmra.mrb[0].mxu0 %v946
        %v1057 = vpop.f32.mrb[0].mxu0
        %v1058 = vadd.f32 %v984, %v1057
        %v1059 = vpop.f32.mrb[0].mxu0
        %v1060 = vadd.f32 %v988, %v1059
        %1061 = vdwg.mxu0
        %vm1062 = vcmp.gt.f32.partialorder %v1058, 0.0
        %vm1063 = vcmp.gt.f32.partialorder %v1060, 0.0
        %v1064 = vmul.f32 %v1058, 0.01
        %v1065 = vmul.f32 %v1060, 0.01
        %v1066 = vsel %vm1062, %v1058, %v1064
        %v1067 = vsel %vm1063, %v1060, %v1065
        %v1068 = vld [vmem:[#allocation15] sm:$0xff]
        %v1069 = vld [vmem:[#allocation15 + $0x8] sm:$0xff]
        %v1070 = vld [vmem:[#allocation15 + $0x10] sm:$0xff]
        %v1071 = vld [vmem:[#allocation15 + $0x18] sm:$0xff]
        %v1072 = vld [vmem:[#allocation15 + $0x20] sm:$0xff]
        %v1073 = vld [vmem:[#allocation15 + $0x28] sm:$0xff]
        %v1074 = vld [vmem:[#allocation15 + $0x30] sm:$0xff]
        %v1075 = vld [vmem:[#allocation15 + $0x38] sm:$0xff]
        %v1076 = vld [vmem:[#allocation15 + $0x40] sm:$0xff]
        %v1077 = vld [vmem:[#allocation15 + $0x48] sm:$0xff]
        %v1078 = vld [vmem:[#allocation15 + $0x50] sm:$0xff]
        %v1079 = vld [vmem:[#allocation15 + $0x58] sm:$0xff]
        %v1080 = vld [vmem:[#allocation15 + $0x60] sm:$0xff]
        %v1081 = vld [vmem:[#allocation15 + $0x68] sm:$0xff]
        %v1082 = vld [vmem:[#allocation15 + $0x70] sm:$0xff]
        %v1083 = vld [vmem:[#allocation15 + $0x78] sm:$0xff]
        %v1084 = vld [vmem:[#allocation15 + $0x80] sm:$0xff]
        %v1085 = vld [vmem:[#allocation15 + $0x88] sm:$0xff]
        %v1086 = vld [vmem:[#allocation15 + $0x90] sm:$0xff]
        %v1087 = vld [vmem:[#allocation15 + $0x98] sm:$0xff]
        %v1088 = vld [vmem:[#allocation15 + $0xa0] sm:$0xff]
        %v1089 = vld [vmem:[#allocation15 + $0xa8] sm:$0xff]
        %v1090 = vld [vmem:[#allocation15 + $0xb0] sm:$0xff]
        %v1091 = vld [vmem:[#allocation15 + $0xb8] sm:$0xff]
        %v1092 = vld [vmem:[#allocation15 + $0xc0] sm:$0xff]
        %v1093 = vld [vmem:[#allocation15 + $0xc8] sm:$0xff]
        %v1094 = vld [vmem:[#allocation15 + $0xd0] sm:$0xff]
        %v1095 = vld [vmem:[#allocation15 + $0xd8] sm:$0xff]
        %v1096 = vld [vmem:[#allocation15 + $0xe0] sm:$0xff]
        %v1097 = vld [vmem:[#allocation15 + $0xe8] sm:$0xff]
        %v1098 = vld [vmem:[#allocation15 + $0xf0] sm:$0xff]
        %v1099 = vld [vmem:[#allocation15 + $0xf8] sm:$0xff]
        %v1100 = vld [vmem:[#allocation15 + $0x100] sm:$0xff]
        %v1101 = vld [vmem:[#allocation15 + $0x108] sm:$0xff]
        %v1102 = vld [vmem:[#allocation15 + $0x110] sm:$0xff]
        %v1103 = vld [vmem:[#allocation15 + $0x118] sm:$0xff]
        %v1104 = vld [vmem:[#allocation15 + $0x120] sm:$0xff]
        %v1105 = vld [vmem:[#allocation15 + $0x128] sm:$0xff]
        %v1106 = vld [vmem:[#allocation15 + $0x130] sm:$0xff]
        %v1107 = vld [vmem:[#allocation15 + $0x138] sm:$0xff]
        %v1108 = vld [vmem:[#allocation15 + $0x140] sm:$0xff]
        %v1109 = vld [vmem:[#allocation15 + $0x148] sm:$0xff]
        %v1110 = vld [vmem:[#allocation15 + $0x150] sm:$0xff]
        %v1111 = vld [vmem:[#allocation15 + $0x158] sm:$0xff]
        %v1112 = vld [vmem:[#allocation15 + $0x160] sm:$0xff]
        %v1113 = vld [vmem:[#allocation15 + $0x168] sm:$0xff]
        %v1114 = vld [vmem:[#allocation15 + $0x170] sm:$0xff]
        %v1115 = vld [vmem:[#allocation15 + $0x178] sm:$0xff]
        %v1116 = vld [vmem:[#allocation15 + $0x180] sm:$0xff]
        %v1117 = vld [vmem:[#allocation15 + $0x188] sm:$0xff]
        %v1118 = vld [vmem:[#allocation15 + $0x190] sm:$0xff]
        %v1119 = vld [vmem:[#allocation15 + $0x198] sm:$0xff]
        %v1120 = vld [vmem:[#allocation15 + $0x1a0] sm:$0xff]
        %v1121 = vld [vmem:[#allocation15 + $0x1a8] sm:$0xff]
        %v1122 = vld [vmem:[#allocation15 + $0x1b0] sm:$0xff]
        %v1123 = vld [vmem:[#allocation15 + $0x1b8] sm:$0xff]
        %v1124 = vld [vmem:[#allocation15 + $0x1c0] sm:$0xff]
        %v1125 = vld [vmem:[#allocation15 + $0x1c8] sm:$0xff]
        %v1126 = vld [vmem:[#allocation15 + $0x1d0] sm:$0xff]
        %v1127 = vld [vmem:[#allocation15 + $0x1d8] sm:$0xff]
        %v1128 = vld [vmem:[#allocation15 + $0x1e0] sm:$0xff]
        %v1129 = vld [vmem:[#allocation15 + $0x1e8] sm:$0xff]
        %v1130 = vld [vmem:[#allocation15 + $0x1f0] sm:$0xff]
        %v1131 = vld [vmem:[#allocation15 + $0x1f8] sm:$0xff]
        %v1132 = vld [vmem:[#allocation15 + $0x200] sm:$0xff]
        %v1133 = vld [vmem:[#allocation15 + $0x208] sm:$0xff]
        %v1134 = vld [vmem:[#allocation15 + $0x210] sm:$0xff]
        %v1135 = vld [vmem:[#allocation15 + $0x218] sm:$0xff]
        %v1136 = vld [vmem:[#allocation15 + $0x220] sm:$0xff]
        %v1137 = vld [vmem:[#allocation15 + $0x228] sm:$0xff]
        %v1138 = vld [vmem:[#allocation15 + $0x230] sm:$0xff]
        %v1139 = vld [vmem:[#allocation15 + $0x238] sm:$0xff]
        %v1140 = vld [vmem:[#allocation15 + $0x240] sm:$0xff]
        %v1141 = vld [vmem:[#allocation15 + $0x248] sm:$0xff]
        %v1142 = vld [vmem:[#allocation15 + $0x250] sm:$0xff]
        %v1143 = vld [vmem:[#allocation15 + $0x258] sm:$0xff]
        %v1144 = vld [vmem:[#allocation15 + $0x260] sm:$0xff]
        %v1145 = vld [vmem:[#allocation15 + $0x268] sm:$0xff]
        %v1146 = vld [vmem:[#allocation15 + $0x270] sm:$0xff]
        %v1147 = vld [vmem:[#allocation15 + $0x278] sm:$0xff]
        %v1148 = vld [vmem:[#allocation15 + $0x280] sm:$0xff]
        %v1149 = vld [vmem:[#allocation15 + $0x288] sm:$0xff]
        %v1150 = vld [vmem:[#allocation15 + $0x290] sm:$0xff]
        %v1151 = vld [vmem:[#allocation15 + $0x298] sm:$0xff]
        %v1152 = vld [vmem:[#allocation15 + $0x2a0] sm:$0xff]
        %v1153 = vld [vmem:[#allocation15 + $0x2a8] sm:$0xff]
        %v1154 = vld [vmem:[#allocation15 + $0x2b0] sm:$0xff]
        %v1155 = vld [vmem:[#allocation15 + $0x2b8] sm:$0xff]
        %v1156 = vld [vmem:[#allocation15 + $0x2c0] sm:$0xff]
        %v1157 = vld [vmem:[#allocation15 + $0x2c8] sm:$0xff]
        %v1158 = vld [vmem:[#allocation15 + $0x2d0] sm:$0xff]
        %v1159 = vld [vmem:[#allocation15 + $0x2d8] sm:$0xff]
        %v1160 = vld [vmem:[#allocation15 + $0x2e0] sm:$0xff]
        %v1161 = vld [vmem:[#allocation15 + $0x2e8] sm:$0xff]
        %v1162 = vld [vmem:[#allocation15 + $0x2f0] sm:$0xff]
        %v1163 = vld [vmem:[#allocation15 + $0x2f8] sm:$0xff]
        %v1164 = vld [vmem:[#allocation15 + $0x300] sm:$0xff]
        %v1165 = vld [vmem:[#allocation15 + $0x308] sm:$0xff]
        %v1166 = vld [vmem:[#allocation15 + $0x310] sm:$0xff]
        %v1167 = vld [vmem:[#allocation15 + $0x318] sm:$0xff]
        %v1168 = vld [vmem:[#allocation15 + $0x320] sm:$0xff]
        %v1169 = vld [vmem:[#allocation15 + $0x328] sm:$0xff]
        %v1170 = vld [vmem:[#allocation15 + $0x330] sm:$0xff]
        %v1171 = vld [vmem:[#allocation15 + $0x338] sm:$0xff]
        %v1172 = vld [vmem:[#allocation15 + $0x340] sm:$0xff]
        %v1173 = vld [vmem:[#allocation15 + $0x348] sm:$0xff]
        %v1174 = vld [vmem:[#allocation15 + $0x350] sm:$0xff]
        %v1175 = vld [vmem:[#allocation15 + $0x358] sm:$0xff]
        %v1176 = vld [vmem:[#allocation15 + $0x360] sm:$0xff]
        %v1177 = vld [vmem:[#allocation15 + $0x368] sm:$0xff]
        %v1178 = vld [vmem:[#allocation15 + $0x370] sm:$0xff]
        %v1179 = vld [vmem:[#allocation15 + $0x378] sm:$0xff]
        %v1180 = vld [vmem:[#allocation15 + $0x380] sm:$0xff]
        %v1181 = vld [vmem:[#allocation15 + $0x388] sm:$0xff]
        %v1182 = vld [vmem:[#allocation15 + $0x390] sm:$0xff]
        %v1183 = vld [vmem:[#allocation15 + $0x398] sm:$0xff]
        %v1184 = vld [vmem:[#allocation15 + $0x3a0] sm:$0xff]
        %v1185 = vld [vmem:[#allocation15 + $0x3a8] sm:$0xff]
        %v1186 = vld [vmem:[#allocation15 + $0x3b0] sm:$0xff]
        %v1187 = vld [vmem:[#allocation15 + $0x3b8] sm:$0xff]
        %v1188 = vld [vmem:[#allocation15 + $0x3c0] sm:$0xff]
        %v1189 = vld [vmem:[#allocation15 + $0x3c8] sm:$0xff]
        %v1190 = vld [vmem:[#allocation15 + $0x3d0] sm:$0xff]
        %v1191 = vld [vmem:[#allocation15 + $0x3d8] sm:$0xff]
        %v1192 = vld [vmem:[#allocation15 + $0x3e0] sm:$0xff]
        %v1193 = vld [vmem:[#allocation15 + $0x3e8] sm:$0xff]
        %v1194 = vld [vmem:[#allocation15 + $0x3f0] sm:$0xff]
        %v1195 = vld [vmem:[#allocation15 + $0x3f8] sm:$0xff]
        %v1196 = vld [vmem:[#allocation16] sm:$0xf]
        %v1198 = vlaneseq
        %v1199 = vshrl.u32 %v1198, 7
        %v1200 = vsub.s32 0, %v1199
        %v1201 = vrot.slane %v1196, %v1200
        %v1202 = vlaneseq
        %v1203 = vshrl.u32 %v1202, 7
        %v1204 = vsub.s32 1, %v1203
        %v1205 = vrot.slane %v1196, %v1204
        %v1206 = vlaneseq
        %v1207 = vshrl.u32 %v1206, 7
        %v1208 = vsub.s32 2, %v1207
        %v1209 = vrot.slane %v1196, %v1208
        %v1210 = vlaneseq
        %v1211 = vshrl.u32 %v1210, 7
        %v1212 = vsub.s32 3, %v1211
        %v1213 = vrot.slane %v1196, %v1212
        %1218 = vmatprep.subr.mxu0 %v1069
        %1219 = vmatpush1.msra.mxu0 %v1068
        %1220 = vmatprep.subr.mxu0 %v1073
        %1221 = vmatpush1.msra.mxu0 %v1072
        %1222 = vmatprep.subr.mxu0 %v1077
        %1223 = vmatpush1.msra.mxu0 %v1076
        %1224 = vmatprep.subr.mxu0 %v1081
        %1225 = vmatpush1.msra.mxu0 %v1080
        %1226 = vmatprep.subr.mxu0 %v1085
        %1227 = vmatpush1.msra.mxu0 %v1084
        %1228 = vmatprep.subr.mxu0 %v1089
        %1229 = vmatpush1.msra.mxu0 %v1088
        %1230 = vmatprep.subr.mxu0 %v1093
        %1231 = vmatpush1.msra.mxu0 %v1092
        %1232 = vmatprep.subr.mxu0 %v1097
        %1233 = vmatpush1.msra.mxu0 %v1096
        %1234 = vmatprep.subr.mxu0 %v1101
        %1235 = vmatpush1.msra.mxu0 %v1100
        %1236 = vmatprep.subr.mxu0 %v1105
        %1237 = vmatpush1.msra.mxu0 %v1104
        %1238 = vmatprep.subr.mxu0 %v1109
        %1239 = vmatpush1.msra.mxu0 %v1108
        %1240 = vmatprep.subr.mxu0 %v1113
        %1241 = vmatpush1.msra.mxu0 %v1112
        %1242 = vmatprep.subr.mxu0 %v1117
        %1243 = vmatpush1.msra.mxu0 %v1116
        %1244 = vmatprep.subr.mxu0 %v1121
        %1245 = vmatpush1.msra.mxu0 %v1120
        %1246 = vmatprep.subr.mxu0 %v1125
        %1247 = vmatpush1.msra.mxu0 %v1124
        %1248 = vmatprep.subr.mxu0 %v1129
        %1249 = vmatpush1.msra.mxu0 %v1128
        %1250 = vmatprep.subr.mxu0 %v1133
        %1251 = vmatpush1.msra.mxu0 %v1132
        %1252 = vmatprep.subr.mxu0 %v1137
        %1253 = vmatpush1.msra.mxu0 %v1136
        %1254 = vmatprep.subr.mxu0 %v1141
        %1255 = vmatpush1.msra.mxu0 %v1140
        %1256 = vmatprep.subr.mxu0 %v1145
        %1257 = vmatpush1.msra.mxu0 %v1144
        %1258 = vmatprep.subr.mxu0 %v1149
        %1259 = vmatpush1.msra.mxu0 %v1148
        %1260 = vmatprep.subr.mxu0 %v1153
        %1261 = vmatpush1.msra.mxu0 %v1152
        %1262 = vmatprep.subr.mxu0 %v1157
        %1263 = vmatpush1.msra.mxu0 %v1156
        %1264 = vmatprep.subr.mxu0 %v1161
        %1265 = vmatpush1.msra.mxu0 %v1160
        %1266 = vmatprep.subr.mxu0 %v1165
        %1267 = vmatpush1.msra.mxu0 %v1164
        %1268 = vmatprep.subr.mxu0 %v1169
        %1269 = vmatpush1.msra.mxu0 %v1168
        %1270 = vmatprep.subr.mxu0 %v1173
        %1271 = vmatpush1.msra.mxu0 %v1172
        %1272 = vmatprep.subr.mxu0 %v1177
        %1273 = vmatpush1.msra.mxu0 %v1176
        %1274 = vmatprep.subr.mxu0 %v1181
        %1275 = vmatpush1.msra.mxu0 %v1180
        %1276 = vmatprep.subr.mxu0 %v1185
        %1277 = vmatpush1.msra.mxu0 %v1184
        %1278 = vmatprep.subr.mxu0 %v1189
        %1279 = vmatpush1.msra.mxu0 %v1188
        %1280 = vmatprep.subr.mxu0 %v1193
        %1281 = vmatpush1.msra.mxu0 %v1192
        %1282 = vmatprep.mubr.f32.mxu0 %v1067
        %1283 = vmatmul.mubr.f32.gmra.mrb[0].mxu0 %v1066
        %v1284 = vpop.f32.mrb[0].mxu0
        %v1285 = vadd.f32 %v1201, %v1284
        %v1286 = vpop.f32.mrb[0].mxu0
        %v1287 = vadd.f32 %v1205, %v1286
        %1288 = vdwg.mxu0
        %1289 = vmatprep.subr.mxu0 %v1071
        %1290 = vmatpush1.msra.mxu0 %v1070
        %1291 = vmatprep.subr.mxu0 %v1075
        %1292 = vmatpush1.msra.mxu0 %v1074
        %1293 = vmatprep.subr.mxu0 %v1079
        %1294 = vmatpush1.msra.mxu0 %v1078
        %1295 = vmatprep.subr.mxu0 %v1083
        %1296 = vmatpush1.msra.mxu0 %v1082
        %1297 = vmatprep.subr.mxu0 %v1087
        %1298 = vmatpush1.msra.mxu0 %v1086
        %1299 = vmatprep.subr.mxu0 %v1091
        %1300 = vmatpush1.msra.mxu0 %v1090
        %1301 = vmatprep.subr.mxu0 %v1095
        %1302 = vmatpush1.msra.mxu0 %v1094
        %1303 = vmatprep.subr.mxu0 %v1099
        %1304 = vmatpush1.msra.mxu0 %v1098
        %1305 = vmatprep.subr.mxu0 %v1103
        %1306 = vmatpush1.msra.mxu0 %v1102
        %1307 = vmatprep.subr.mxu0 %v1107
        %1308 = vmatpush1.msra.mxu0 %v1106
        %1309 = vmatprep.subr.mxu0 %v1111
        %1310 = vmatpush1.msra.mxu0 %v1110
        %1311 = vmatprep.subr.mxu0 %v1115
        %1312 = vmatpush1.msra.mxu0 %v1114
        %1313 = vmatprep.subr.mxu0 %v1119
        %1314 = vmatpush1.msra.mxu0 %v1118
        %1315 = vmatprep.subr.mxu0 %v1123
        %1316 = vmatpush1.msra.mxu0 %v1122
        %1317 = vmatprep.subr.mxu0 %v1127
        %1318 = vmatpush1.msra.mxu0 %v1126
        %1319 = vmatprep.subr.mxu0 %v1131
        %1320 = vmatpush1.msra.mxu0 %v1130
        %1321 = vmatprep.subr.mxu0 %v1135
        %1322 = vmatpush1.msra.mxu0 %v1134
        %1323 = vmatprep.subr.mxu0 %v1139
        %1324 = vmatpush1.msra.mxu0 %v1138
        %1325 = vmatprep.subr.mxu0 %v1143
        %1326 = vmatpush1.msra.mxu0 %v1142
        %1327 = vmatprep.subr.mxu0 %v1147
        %1328 = vmatpush1.msra.mxu0 %v1146
        %1329 = vmatprep.subr.mxu0 %v1151
        %1330 = vmatpush1.msra.mxu0 %v1150
        %1331 = vmatprep.subr.mxu0 %v1155
        %1332 = vmatpush1.msra.mxu0 %v1154
        %1333 = vmatprep.subr.mxu0 %v1159
        %1334 = vmatpush1.msra.mxu0 %v1158
        %1335 = vmatprep.subr.mxu0 %v1163
        %1336 = vmatpush1.msra.mxu0 %v1162
        %1337 = vmatprep.subr.mxu0 %v1167
        %1338 = vmatpush1.msra.mxu0 %v1166
        %1339 = vmatprep.subr.mxu0 %v1171
        %1340 = vmatpush1.msra.mxu0 %v1170
        %1341 = vmatprep.subr.mxu0 %v1175
        %1342 = vmatpush1.msra.mxu0 %v1174
        %1343 = vmatprep.subr.mxu0 %v1179
        %1344 = vmatpush1.msra.mxu0 %v1178
        %1345 = vmatprep.subr.mxu0 %v1183
        %1346 = vmatpush1.msra.mxu0 %v1182
        %1347 = vmatprep.subr.mxu0 %v1187
        %1348 = vmatpush1.msra.mxu0 %v1186
        %1349 = vmatprep.subr.mxu0 %v1191
        %1350 = vmatpush1.msra.mxu0 %v1190
        %1351 = vmatprep.subr.mxu0 %v1195
        %1352 = vmatpush1.msra.mxu0 %v1194
        %1353 = vmatprep.mubr.f32.mxu0 %v1067
        %1354 = vmatmul.mubr.f32.gmra.mrb[0].mxu0 %v1066
        %v1355 = vpop.f32.mrb[0].mxu0
        %v1356 = vadd.f32 %v1209, %v1355
        %v1357 = vpop.f32.mrb[0].mxu0
        %v1358 = vadd.f32 %v1213, %v1357
        %1359 = vdwg.mxu0
        %vm1360 = vcmp.gt.f32.partialorder %v1285, 0.0
        %vm1361 = vcmp.gt.f32.partialorder %v1287, 0.0
        %vm1362 = vcmp.gt.f32.partialorder %v1356, 0.0
        %vm1363 = vcmp.gt.f32.partialorder %v1358, 0.0
        %v1364 = vmul.f32 %v1285, 0.01
        %v1365 = vmul.f32 %v1287, 0.01
        %v1366 = vmul.f32 %v1356, 0.01
        %v1367 = vmul.f32 %v1358, 0.01
        %v1368 = vsel %vm1360, %v1285, %v1364
        %v1369 = vsel %vm1361, %v1287, %v1365
        %v1370 = vsel %vm1362, %v1356, %v1366
        %v1371 = vsel %vm1363, %v1358, %v1367
        %v1372 = vld [vmem:[#allocation18] sm:$0xff]
        %v1373 = vld [vmem:[#allocation18 + $0x8] sm:$0xff]
        %v1374 = vld [vmem:[#allocation18 + $0x10] sm:$0xff]
        %v1375 = vld [vmem:[#allocation18 + $0x18] sm:$0xff]
        %v1376 = vld [vmem:[#allocation18 + $0x20] sm:$0xff]
        %v1377 = vld [vmem:[#allocation18 + $0x28] sm:$0xff]
        %v1378 = vld [vmem:[#allocation18 + $0x30] sm:$0xff]
        %v1379 = vld [vmem:[#allocation18 + $0x38] sm:$0xff]
        %v1380 = vld [vmem:[#allocation18 + $0x40] sm:$0xff]
        %v1381 = vld [vmem:[#allocation18 + $0x48] sm:$0xff]
        %v1382 = vld [vmem:[#allocation18 + $0x50] sm:$0xff]
        %v1383 = vld [vmem:[#allocation18 + $0x58] sm:$0xff]
        %v1384 = vld [vmem:[#allocation18 + $0x60] sm:$0xff]
        %v1385 = vld [vmem:[#allocation18 + $0x68] sm:$0xff]
        %v1386 = vld [vmem:[#allocation18 + $0x70] sm:$0xff]
        %v1387 = vld [vmem:[#allocation18 + $0x78] sm:$0xff]
        %v1388 = vld [vmem:[#allocation18 + $0x80] sm:$0xff]
        %v1389 = vld [vmem:[#allocation18 + $0x88] sm:$0xff]
        %v1390 = vld [vmem:[#allocation18 + $0x90] sm:$0xff]
        %v1391 = vld [vmem:[#allocation18 + $0x98] sm:$0xff]
        %v1392 = vld [vmem:[#allocation18 + $0xa0] sm:$0xff]
        %v1393 = vld [vmem:[#allocation18 + $0xa8] sm:$0xff]
        %v1394 = vld [vmem:[#allocation18 + $0xb0] sm:$0xff]
        %v1395 = vld [vmem:[#allocation18 + $0xb8] sm:$0xff]
        %v1396 = vld [vmem:[#allocation18 + $0xc0] sm:$0xff]
        %v1397 = vld [vmem:[#allocation18 + $0xc8] sm:$0xff]
        %v1398 = vld [vmem:[#allocation18 + $0xd0] sm:$0xff]
        %v1399 = vld [vmem:[#allocation18 + $0xd8] sm:$0xff]
        %v1400 = vld [vmem:[#allocation18 + $0xe0] sm:$0xff]
        %v1401 = vld [vmem:[#allocation18 + $0xe8] sm:$0xff]
        %v1402 = vld [vmem:[#allocation18 + $0xf0] sm:$0xff]
        %v1403 = vld [vmem:[#allocation18 + $0xf8] sm:$0xff]
        %v1404 = vld [vmem:[#allocation18 + $0x100] sm:$0xff]
        %v1405 = vld [vmem:[#allocation18 + $0x108] sm:$0xff]
        %v1406 = vld [vmem:[#allocation18 + $0x110] sm:$0xff]
        %v1407 = vld [vmem:[#allocation18 + $0x118] sm:$0xff]
        %v1408 = vld [vmem:[#allocation18 + $0x120] sm:$0xff]
        %v1409 = vld [vmem:[#allocation18 + $0x128] sm:$0xff]
        %v1410 = vld [vmem:[#allocation18 + $0x130] sm:$0xff]
        %v1411 = vld [vmem:[#allocation18 + $0x138] sm:$0xff]
        %v1412 = vld [vmem:[#allocation18 + $0x140] sm:$0xff]
        %v1413 = vld [vmem:[#allocation18 + $0x148] sm:$0xff]
        %v1414 = vld [vmem:[#allocation18 + $0x150] sm:$0xff]
        %v1415 = vld [vmem:[#allocation18 + $0x158] sm:$0xff]
        %v1416 = vld [vmem:[#allocation18 + $0x160] sm:$0xff]
        %v1417 = vld [vmem:[#allocation18 + $0x168] sm:$0xff]
        %v1418 = vld [vmem:[#allocation18 + $0x170] sm:$0xff]
        %v1419 = vld [vmem:[#allocation18 + $0x178] sm:$0xff]
        %v1420 = vld [vmem:[#allocation18 + $0x180] sm:$0xff]
        %v1421 = vld [vmem:[#allocation18 + $0x188] sm:$0xff]
        %v1422 = vld [vmem:[#allocation18 + $0x190] sm:$0xff]
        %v1423 = vld [vmem:[#allocation18 + $0x198] sm:$0xff]
        %v1424 = vld [vmem:[#allocation18 + $0x1a0] sm:$0xff]
        %v1425 = vld [vmem:[#allocation18 + $0x1a8] sm:$0xff]
        %v1426 = vld [vmem:[#allocation18 + $0x1b0] sm:$0xff]
        %v1427 = vld [vmem:[#allocation18 + $0x1b8] sm:$0xff]
        %v1428 = vld [vmem:[#allocation18 + $0x1c0] sm:$0xff]
        %v1429 = vld [vmem:[#allocation18 + $0x1c8] sm:$0xff]
        %v1430 = vld [vmem:[#allocation18 + $0x1d0] sm:$0xff]
        %v1431 = vld [vmem:[#allocation18 + $0x1d8] sm:$0xff]
        %v1432 = vld [vmem:[#allocation18 + $0x1e0] sm:$0xff]
        %v1433 = vld [vmem:[#allocation18 + $0x1e8] sm:$0xff]
        %v1434 = vld [vmem:[#allocation18 + $0x1f0] sm:$0xff]
        %v1435 = vld [vmem:[#allocation18 + $0x1f8] sm:$0xff]
        %v1436 = vld [vmem:[#allocation18 + $0x200] sm:$0xff]
        %v1437 = vld [vmem:[#allocation18 + $0x208] sm:$0xff]
        %v1438 = vld [vmem:[#allocation18 + $0x210] sm:$0xff]
        %v1439 = vld [vmem:[#allocation18 + $0x218] sm:$0xff]
        %v1440 = vld [vmem:[#allocation18 + $0x220] sm:$0xff]
        %v1441 = vld [vmem:[#allocation18 + $0x228] sm:$0xff]
        %v1442 = vld [vmem:[#allocation18 + $0x230] sm:$0xff]
        %v1443 = vld [vmem:[#allocation18 + $0x238] sm:$0xff]
        %v1444 = vld [vmem:[#allocation18 + $0x240] sm:$0xff]
        %v1445 = vld [vmem:[#allocation18 + $0x248] sm:$0xff]
        %v1446 = vld [vmem:[#allocation18 + $0x250] sm:$0xff]
        %v1447 = vld [vmem:[#allocation18 + $0x258] sm:$0xff]
        %v1448 = vld [vmem:[#allocation18 + $0x260] sm:$0xff]
        %v1449 = vld [vmem:[#allocation18 + $0x268] sm:$0xff]
        %v1450 = vld [vmem:[#allocation18 + $0x270] sm:$0xff]
        %v1451 = vld [vmem:[#allocation18 + $0x278] sm:$0xff]
        %v1452 = vld [vmem:[#allocation18 + $0x280] sm:$0xff]
        %v1453 = vld [vmem:[#allocation18 + $0x288] sm:$0xff]
        %v1454 = vld [vmem:[#allocation18 + $0x290] sm:$0xff]
        %v1455 = vld [vmem:[#allocation18 + $0x298] sm:$0xff]
        %v1456 = vld [vmem:[#allocation18 + $0x2a0] sm:$0xff]
        %v1457 = vld [vmem:[#allocation18 + $0x2a8] sm:$0xff]
        %v1458 = vld [vmem:[#allocation18 + $0x2b0] sm:$0xff]
        %v1459 = vld [vmem:[#allocation18 + $0x2b8] sm:$0xff]
        %v1460 = vld [vmem:[#allocation18 + $0x2c0] sm:$0xff]
        %v1461 = vld [vmem:[#allocation18 + $0x2c8] sm:$0xff]
        %v1462 = vld [vmem:[#allocation18 + $0x2d0] sm:$0xff]
        %v1463 = vld [vmem:[#allocation18 + $0x2d8] sm:$0xff]
        %v1464 = vld [vmem:[#allocation18 + $0x2e0] sm:$0xff]
        %v1465 = vld [vmem:[#allocation18 + $0x2e8] sm:$0xff]
        %v1466 = vld [vmem:[#allocation18 + $0x2f0] sm:$0xff]
        %v1467 = vld [vmem:[#allocation18 + $0x2f8] sm:$0xff]
        %v1468 = vld [vmem:[#allocation18 + $0x300] sm:$0xff]
        %v1469 = vld [vmem:[#allocation18 + $0x308] sm:$0xff]
        %v1470 = vld [vmem:[#allocation18 + $0x310] sm:$0xff]
        %v1471 = vld [vmem:[#allocation18 + $0x318] sm:$0xff]
        %v1472 = vld [vmem:[#allocation18 + $0x320] sm:$0xff]
        %v1473 = vld [vmem:[#allocation18 + $0x328] sm:$0xff]
        %v1474 = vld [vmem:[#allocation18 + $0x330] sm:$0xff]
        %v1475 = vld [vmem:[#allocation18 + $0x338] sm:$0xff]
        %v1476 = vld [vmem:[#allocation18 + $0x340] sm:$0xff]
        %v1477 = vld [vmem:[#allocation18 + $0x348] sm:$0xff]
        %v1478 = vld [vmem:[#allocation18 + $0x350] sm:$0xff]
        %v1479 = vld [vmem:[#allocation18 + $0x358] sm:$0xff]
        %v1480 = vld [vmem:[#allocation18 + $0x360] sm:$0xff]
        %v1481 = vld [vmem:[#allocation18 + $0x368] sm:$0xff]
        %v1482 = vld [vmem:[#allocation18 + $0x370] sm:$0xff]
        %v1483 = vld [vmem:[#allocation18 + $0x378] sm:$0xff]
        %v1484 = vld [vmem:[#allocation18 + $0x380] sm:$0xff]
        %v1485 = vld [vmem:[#allocation18 + $0x388] sm:$0xff]
        %v1486 = vld [vmem:[#allocation18 + $0x390] sm:$0xff]
        %v1487 = vld [vmem:[#allocation18 + $0x398] sm:$0xff]
        %v1488 = vld [vmem:[#allocation18 + $0x3a0] sm:$0xff]
        %v1489 = vld [vmem:[#allocation18 + $0x3a8] sm:$0xff]
        %v1490 = vld [vmem:[#allocation18 + $0x3b0] sm:$0xff]
        %v1491 = vld [vmem:[#allocation18 + $0x3b8] sm:$0xff]
        %v1492 = vld [vmem:[#allocation18 + $0x3c0] sm:$0xff]
        %v1493 = vld [vmem:[#allocation18 + $0x3c8] sm:$0xff]
        %v1494 = vld [vmem:[#allocation18 + $0x3d0] sm:$0xff]
        %v1495 = vld [vmem:[#allocation18 + $0x3d8] sm:$0xff]
        %v1496 = vld [vmem:[#allocation18 + $0x3e0] sm:$0xff]
        %v1497 = vld [vmem:[#allocation18 + $0x3e8] sm:$0xff]
        %v1498 = vld [vmem:[#allocation18 + $0x3f0] sm:$0xff]
        %v1499 = vld [vmem:[#allocation18 + $0x3f8] sm:$0xff]
        %v1500 = vld [vmem:[#allocation18 + $0x400] sm:$0xff]
        %v1501 = vld [vmem:[#allocation18 + $0x408] sm:$0xff]
        %v1502 = vld [vmem:[#allocation18 + $0x410] sm:$0xff]
        %v1503 = vld [vmem:[#allocation18 + $0x418] sm:$0xff]
        %v1504 = vld [vmem:[#allocation18 + $0x420] sm:$0xff]
        %v1505 = vld [vmem:[#allocation18 + $0x428] sm:$0xff]
        %v1506 = vld [vmem:[#allocation18 + $0x430] sm:$0xff]
        %v1507 = vld [vmem:[#allocation18 + $0x438] sm:$0xff]
        %v1508 = vld [vmem:[#allocation18 + $0x440] sm:$0xff]
        %v1509 = vld [vmem:[#allocation18 + $0x448] sm:$0xff]
        %v1510 = vld [vmem:[#allocation18 + $0x450] sm:$0xff]
        %v1511 = vld [vmem:[#allocation18 + $0x458] sm:$0xff]
        %v1512 = vld [vmem:[#allocation18 + $0x460] sm:$0xff]
        %v1513 = vld [vmem:[#allocation18 + $0x468] sm:$0xff]
        %v1514 = vld [vmem:[#allocation18 + $0x470] sm:$0xff]
        %v1515 = vld [vmem:[#allocation18 + $0x478] sm:$0xff]
        %v1516 = vld [vmem:[#allocation18 + $0x480] sm:$0xff]
        %v1517 = vld [vmem:[#allocation18 + $0x488] sm:$0xff]
        %v1518 = vld [vmem:[#allocation18 + $0x490] sm:$0xff]
        %v1519 = vld [vmem:[#allocation18 + $0x498] sm:$0xff]
        %v1520 = vld [vmem:[#allocation18 + $0x4a0] sm:$0xff]
        %v1521 = vld [vmem:[#allocation18 + $0x4a8] sm:$0xff]
        %v1522 = vld [vmem:[#allocation18 + $0x4b0] sm:$0xff]
        %v1523 = vld [vmem:[#allocation18 + $0x4b8] sm:$0xff]
        %v1524 = vld [vmem:[#allocation18 + $0x4c0] sm:$0xff]
        %v1525 = vld [vmem:[#allocation18 + $0x4c8] sm:$0xff]
        %v1526 = vld [vmem:[#allocation18 + $0x4d0] sm:$0xff]
        %v1527 = vld [vmem:[#allocation18 + $0x4d8] sm:$0xff]
        %v1528 = vld [vmem:[#allocation18 + $0x4e0] sm:$0xff]
        %v1529 = vld [vmem:[#allocation18 + $0x4e8] sm:$0xff]
        %v1530 = vld [vmem:[#allocation18 + $0x4f0] sm:$0xff]
        %v1531 = vld [vmem:[#allocation18 + $0x4f8] sm:$0xff]
        %v1532 = vld [vmem:[#allocation18 + $0x500] sm:$0xff]
        %v1533 = vld [vmem:[#allocation18 + $0x508] sm:$0xff]
        %v1534 = vld [vmem:[#allocation18 + $0x510] sm:$0xff]
        %v1535 = vld [vmem:[#allocation18 + $0x518] sm:$0xff]
        %v1536 = vld [vmem:[#allocation18 + $0x520] sm:$0xff]
        %v1537 = vld [vmem:[#allocation18 + $0x528] sm:$0xff]
        %v1538 = vld [vmem:[#allocation18 + $0x530] sm:$0xff]
        %v1539 = vld [vmem:[#allocation18 + $0x538] sm:$0xff]
        %v1540 = vld [vmem:[#allocation18 + $0x540] sm:$0xff]
        %v1541 = vld [vmem:[#allocation18 + $0x548] sm:$0xff]
        %v1542 = vld [vmem:[#allocation18 + $0x550] sm:$0xff]
        %v1543 = vld [vmem:[#allocation18 + $0x558] sm:$0xff]
        %v1544 = vld [vmem:[#allocation18 + $0x560] sm:$0xff]
        %v1545 = vld [vmem:[#allocation18 + $0x568] sm:$0xff]
        %v1546 = vld [vmem:[#allocation18 + $0x570] sm:$0xff]
        %v1547 = vld [vmem:[#allocation18 + $0x578] sm:$0xff]
        %v1548 = vld [vmem:[#allocation18 + $0x580] sm:$0xff]
        %v1549 = vld [vmem:[#allocation18 + $0x588] sm:$0xff]
        %v1550 = vld [vmem:[#allocation18 + $0x590] sm:$0xff]
        %v1551 = vld [vmem:[#allocation18 + $0x598] sm:$0xff]
        %v1552 = vld [vmem:[#allocation18 + $0x5a0] sm:$0xff]
        %v1553 = vld [vmem:[#allocation18 + $0x5a8] sm:$0xff]
        %v1554 = vld [vmem:[#allocation18 + $0x5b0] sm:$0xff]
        %v1555 = vld [vmem:[#allocation18 + $0x5b8] sm:$0xff]
        %v1556 = vld [vmem:[#allocation18 + $0x5c0] sm:$0xff]
        %v1557 = vld [vmem:[#allocation18 + $0x5c8] sm:$0xff]
        %v1558 = vld [vmem:[#allocation18 + $0x5d0] sm:$0xff]
        %v1559 = vld [vmem:[#allocation18 + $0x5d8] sm:$0xff]
        %v1560 = vld [vmem:[#allocation18 + $0x5e0] sm:$0xff]
        %v1561 = vld [vmem:[#allocation18 + $0x5e8] sm:$0xff]
        %v1562 = vld [vmem:[#allocation18 + $0x5f0] sm:$0xff]
        %v1563 = vld [vmem:[#allocation18 + $0x5f8] sm:$0xff]
        %v1564 = vld [vmem:[#allocation18 + $0x600] sm:$0xff]
        %v1565 = vld [vmem:[#allocation18 + $0x608] sm:$0xff]
        %v1566 = vld [vmem:[#allocation18 + $0x610] sm:$0xff]
        %v1567 = vld [vmem:[#allocation18 + $0x618] sm:$0xff]
        %v1568 = vld [vmem:[#allocation18 + $0x620] sm:$0xff]
        %v1569 = vld [vmem:[#allocation18 + $0x628] sm:$0xff]
        %v1570 = vld [vmem:[#allocation18 + $0x630] sm:$0xff]
        %v1571 = vld [vmem:[#allocation18 + $0x638] sm:$0xff]
        %v1572 = vld [vmem:[#allocation18 + $0x640] sm:$0xff]
        %v1573 = vld [vmem:[#allocation18 + $0x648] sm:$0xff]
        %v1574 = vld [vmem:[#allocation18 + $0x650] sm:$0xff]
        %v1575 = vld [vmem:[#allocation18 + $0x658] sm:$0xff]
        %v1576 = vld [vmem:[#allocation18 + $0x660] sm:$0xff]
        %v1577 = vld [vmem:[#allocation18 + $0x668] sm:$0xff]
        %v1578 = vld [vmem:[#allocation18 + $0x670] sm:$0xff]
        %v1579 = vld [vmem:[#allocation18 + $0x678] sm:$0xff]
        %v1580 = vld [vmem:[#allocation18 + $0x680] sm:$0xff]
        %v1581 = vld [vmem:[#allocation18 + $0x688] sm:$0xff]
        %v1582 = vld [vmem:[#allocation18 + $0x690] sm:$0xff]
        %v1583 = vld [vmem:[#allocation18 + $0x698] sm:$0xff]
        %v1584 = vld [vmem:[#allocation18 + $0x6a0] sm:$0xff]
        %v1585 = vld [vmem:[#allocation18 + $0x6a8] sm:$0xff]
        %v1586 = vld [vmem:[#allocation18 + $0x6b0] sm:$0xff]
        %v1587 = vld [vmem:[#allocation18 + $0x6b8] sm:$0xff]
        %v1588 = vld [vmem:[#allocation18 + $0x6c0] sm:$0xff]
        %v1589 = vld [vmem:[#allocation18 + $0x6c8] sm:$0xff]
        %v1590 = vld [vmem:[#allocation18 + $0x6d0] sm:$0xff]
        %v1591 = vld [vmem:[#allocation18 + $0x6d8] sm:$0xff]
        %v1592 = vld [vmem:[#allocation18 + $0x6e0] sm:$0xff]
        %v1593 = vld [vmem:[#allocation18 + $0x6e8] sm:$0xff]
        %v1594 = vld [vmem:[#allocation18 + $0x6f0] sm:$0xff]
        %v1595 = vld [vmem:[#allocation18 + $0x6f8] sm:$0xff]
        %v1596 = vld [vmem:[#allocation18 + $0x700] sm:$0xff]
        %v1597 = vld [vmem:[#allocation18 + $0x708] sm:$0xff]
        %v1598 = vld [vmem:[#allocation18 + $0x710] sm:$0xff]
        %v1599 = vld [vmem:[#allocation18 + $0x718] sm:$0xff]
        %v1600 = vld [vmem:[#allocation18 + $0x720] sm:$0xff]
        %v1601 = vld [vmem:[#allocation18 + $0x728] sm:$0xff]
        %v1602 = vld [vmem:[#allocation18 + $0x730] sm:$0xff]
        %v1603 = vld [vmem:[#allocation18 + $0x738] sm:$0xff]
        %v1604 = vld [vmem:[#allocation18 + $0x740] sm:$0xff]
        %v1605 = vld [vmem:[#allocation18 + $0x748] sm:$0xff]
        %v1606 = vld [vmem:[#allocation18 + $0x750] sm:$0xff]
        %v1607 = vld [vmem:[#allocation18 + $0x758] sm:$0xff]
        %v1608 = vld [vmem:[#allocation18 + $0x760] sm:$0xff]
        %v1609 = vld [vmem:[#allocation18 + $0x768] sm:$0xff]
        %v1610 = vld [vmem:[#allocation18 + $0x770] sm:$0xff]
        %v1611 = vld [vmem:[#allocation18 + $0x778] sm:$0xff]
        %v1612 = vld [vmem:[#allocation18 + $0x780] sm:$0xff]
        %v1613 = vld [vmem:[#allocation18 + $0x788] sm:$0xff]
        %v1614 = vld [vmem:[#allocation18 + $0x790] sm:$0xff]
        %v1615 = vld [vmem:[#allocation18 + $0x798] sm:$0xff]
        %v1616 = vld [vmem:[#allocation18 + $0x7a0] sm:$0xff]
        %v1617 = vld [vmem:[#allocation18 + $0x7a8] sm:$0xff]
        %v1618 = vld [vmem:[#allocation18 + $0x7b0] sm:$0xff]
        %v1619 = vld [vmem:[#allocation18 + $0x7b8] sm:$0xff]
        %v1620 = vld [vmem:[#allocation18 + $0x7c0] sm:$0xff]
        %v1621 = vld [vmem:[#allocation18 + $0x7c8] sm:$0xff]
        %v1622 = vld [vmem:[#allocation18 + $0x7d0] sm:$0xff]
        %v1623 = vld [vmem:[#allocation18 + $0x7d8] sm:$0xff]
        %v1624 = vld [vmem:[#allocation18 + $0x7e0] sm:$0xff]
        %v1625 = vld [vmem:[#allocation18 + $0x7e8] sm:$0xff]
        %v1626 = vld [vmem:[#allocation18 + $0x7f0] sm:$0xff]
        %v1627 = vld [vmem:[#allocation18 + $0x7f8] sm:$0xff]
        %v1628 = vld [vmem:[#allocation18 + $0x800] sm:$0xff]
        %v1629 = vld [vmem:[#allocation18 + $0x808] sm:$0xff]
        %v1630 = vld [vmem:[#allocation18 + $0x810] sm:$0xff]
        %v1631 = vld [vmem:[#allocation18 + $0x818] sm:$0xff]
        %v1632 = vld [vmem:[#allocation18 + $0x820] sm:$0xff]
        %v1633 = vld [vmem:[#allocation18 + $0x828] sm:$0xff]
        %v1634 = vld [vmem:[#allocation18 + $0x830] sm:$0xff]
        %v1635 = vld [vmem:[#allocation18 + $0x838] sm:$0xff]
        %v1636 = vld [vmem:[#allocation18 + $0x840] sm:$0xff]
        %v1637 = vld [vmem:[#allocation18 + $0x848] sm:$0xff]
        %v1638 = vld [vmem:[#allocation18 + $0x850] sm:$0xff]
        %v1639 = vld [vmem:[#allocation18 + $0x858] sm:$0xff]
        %v1640 = vld [vmem:[#allocation18 + $0x860] sm:$0xff]
        %v1641 = vld [vmem:[#allocation18 + $0x868] sm:$0xff]
        %v1642 = vld [vmem:[#allocation18 + $0x870] sm:$0xff]
        %v1643 = vld [vmem:[#allocation18 + $0x878] sm:$0xff]
        %v1644 = vld [vmem:[#allocation18 + $0x880] sm:$0xff]
        %v1645 = vld [vmem:[#allocation18 + $0x888] sm:$0xff]
        %v1646 = vld [vmem:[#allocation18 + $0x890] sm:$0xff]
        %v1647 = vld [vmem:[#allocation18 + $0x898] sm:$0xff]
        %v1648 = vld [vmem:[#allocation18 + $0x8a0] sm:$0xff]
        %v1649 = vld [vmem:[#allocation18 + $0x8a8] sm:$0xff]
        %v1650 = vld [vmem:[#allocation18 + $0x8b0] sm:$0xff]
        %v1651 = vld [vmem:[#allocation18 + $0x8b8] sm:$0xff]
        %v1652 = vld [vmem:[#allocation18 + $0x8c0] sm:$0xff]
        %v1653 = vld [vmem:[#allocation18 + $0x8c8] sm:$0xff]
        %v1654 = vld [vmem:[#allocation18 + $0x8d0] sm:$0xff]
        %v1655 = vld [vmem:[#allocation18 + $0x8d8] sm:$0xff]
        %v1656 = vld [vmem:[#allocation18 + $0x8e0] sm:$0xff]
        %v1657 = vld [vmem:[#allocation18 + $0x8e8] sm:$0xff]
        %v1658 = vld [vmem:[#allocation18 + $0x8f0] sm:$0xff]
        %v1659 = vld [vmem:[#allocation18 + $0x8f8] sm:$0xff]
        %v1660 = vld [vmem:[#allocation18 + $0x900] sm:$0xff]
        %v1661 = vld [vmem:[#allocation18 + $0x908] sm:$0xff]
        %v1662 = vld [vmem:[#allocation18 + $0x910] sm:$0xff]
        %v1663 = vld [vmem:[#allocation18 + $0x918] sm:$0xff]
        %v1664 = vld [vmem:[#allocation18 + $0x920] sm:$0xff]
        %v1665 = vld [vmem:[#allocation18 + $0x928] sm:$0xff]
        %v1666 = vld [vmem:[#allocation18 + $0x930] sm:$0xff]
        %v1667 = vld [vmem:[#allocation18 + $0x938] sm:$0xff]
        %v1668 = vld [vmem:[#allocation18 + $0x940] sm:$0xff]
        %v1669 = vld [vmem:[#allocation18 + $0x948] sm:$0xff]
        %v1670 = vld [vmem:[#allocation18 + $0x950] sm:$0xff]
        %v1671 = vld [vmem:[#allocation18 + $0x958] sm:$0xff]
        %v1672 = vld [vmem:[#allocation18 + $0x960] sm:$0xff]
        %v1673 = vld [vmem:[#allocation18 + $0x968] sm:$0xff]
        %v1674 = vld [vmem:[#allocation18 + $0x970] sm:$0xff]
        %v1675 = vld [vmem:[#allocation18 + $0x978] sm:$0xff]
        %v1676 = vld [vmem:[#allocation18 + $0x980] sm:$0xff]
        %v1677 = vld [vmem:[#allocation18 + $0x988] sm:$0xff]
        %v1678 = vld [vmem:[#allocation18 + $0x990] sm:$0xff]
        %v1679 = vld [vmem:[#allocation18 + $0x998] sm:$0xff]
        %v1680 = vld [vmem:[#allocation18 + $0x9a0] sm:$0xff]
        %v1681 = vld [vmem:[#allocation18 + $0x9a8] sm:$0xff]
        %v1682 = vld [vmem:[#allocation18 + $0x9b0] sm:$0xff]
        %v1683 = vld [vmem:[#allocation18 + $0x9b8] sm:$0xff]
        %v1684 = vld [vmem:[#allocation18 + $0x9c0] sm:$0xff]
        %v1685 = vld [vmem:[#allocation18 + $0x9c8] sm:$0xff]
        %v1686 = vld [vmem:[#allocation18 + $0x9d0] sm:$0xff]
        %v1687 = vld [vmem:[#allocation18 + $0x9d8] sm:$0xff]
        %v1688 = vld [vmem:[#allocation18 + $0x9e0] sm:$0xff]
        %v1689 = vld [vmem:[#allocation18 + $0x9e8] sm:$0xff]
        %v1690 = vld [vmem:[#allocation18 + $0x9f0] sm:$0xff]
        %v1691 = vld [vmem:[#allocation18 + $0x9f8] sm:$0xff]
        %v1692 = vld [vmem:[#allocation18 + $0xa00] sm:$0xff]
        %v1693 = vld [vmem:[#allocation18 + $0xa08] sm:$0xff]
        %v1694 = vld [vmem:[#allocation18 + $0xa10] sm:$0xff]
        %v1695 = vld [vmem:[#allocation18 + $0xa18] sm:$0xff]
        %v1696 = vld [vmem:[#allocation18 + $0xa20] sm:$0xff]
        %v1697 = vld [vmem:[#allocation18 + $0xa28] sm:$0xff]
        %v1698 = vld [vmem:[#allocation18 + $0xa30] sm:$0xff]
        %v1699 = vld [vmem:[#allocation18 + $0xa38] sm:$0xff]
        %v1700 = vld [vmem:[#allocation18 + $0xa40] sm:$0xff]
        %v1701 = vld [vmem:[#allocation18 + $0xa48] sm:$0xff]
        %v1702 = vld [vmem:[#allocation18 + $0xa50] sm:$0xff]
        %v1703 = vld [vmem:[#allocation18 + $0xa58] sm:$0xff]
        %v1704 = vld [vmem:[#allocation18 + $0xa60] sm:$0xff]
        %v1705 = vld [vmem:[#allocation18 + $0xa68] sm:$0xff]
        %v1706 = vld [vmem:[#allocation18 + $0xa70] sm:$0xff]
        %v1707 = vld [vmem:[#allocation18 + $0xa78] sm:$0xff]
        %v1708 = vld [vmem:[#allocation18 + $0xa80] sm:$0xff]
        %v1709 = vld [vmem:[#allocation18 + $0xa88] sm:$0xff]
        %v1710 = vld [vmem:[#allocation18 + $0xa90] sm:$0xff]
        %v1711 = vld [vmem:[#allocation18 + $0xa98] sm:$0xff]
        %v1712 = vld [vmem:[#allocation18 + $0xaa0] sm:$0xff]
        %v1713 = vld [vmem:[#allocation18 + $0xaa8] sm:$0xff]
        %v1714 = vld [vmem:[#allocation18 + $0xab0] sm:$0xff]
        %v1715 = vld [vmem:[#allocation18 + $0xab8] sm:$0xff]
        %v1716 = vld [vmem:[#allocation18 + $0xac0] sm:$0xff]
        %v1717 = vld [vmem:[#allocation18 + $0xac8] sm:$0xff]
        %v1718 = vld [vmem:[#allocation18 + $0xad0] sm:$0xff]
        %v1719 = vld [vmem:[#allocation18 + $0xad8] sm:$0xff]
        %v1720 = vld [vmem:[#allocation18 + $0xae0] sm:$0xff]
        %v1721 = vld [vmem:[#allocation18 + $0xae8] sm:$0xff]
        %v1722 = vld [vmem:[#allocation18 + $0xaf0] sm:$0xff]
        %v1723 = vld [vmem:[#allocation18 + $0xaf8] sm:$0xff]
        %v1724 = vld [vmem:[#allocation18 + $0xb00] sm:$0xff]
        %v1725 = vld [vmem:[#allocation18 + $0xb08] sm:$0xff]
        %v1726 = vld [vmem:[#allocation18 + $0xb10] sm:$0xff]
        %v1727 = vld [vmem:[#allocation18 + $0xb18] sm:$0xff]
        %v1728 = vld [vmem:[#allocation18 + $0xb20] sm:$0xff]
        %v1729 = vld [vmem:[#allocation18 + $0xb28] sm:$0xff]
        %v1730 = vld [vmem:[#allocation18 + $0xb30] sm:$0xff]
        %v1731 = vld [vmem:[#allocation18 + $0xb38] sm:$0xff]
        %v1732 = vld [vmem:[#allocation18 + $0xb40] sm:$0xff]
        %v1733 = vld [vmem:[#allocation18 + $0xb48] sm:$0xff]
        %v1734 = vld [vmem:[#allocation18 + $0xb50] sm:$0xff]
        %v1735 = vld [vmem:[#allocation18 + $0xb58] sm:$0xff]
        %v1736 = vld [vmem:[#allocation18 + $0xb60] sm:$0xff]
        %v1737 = vld [vmem:[#allocation18 + $0xb68] sm:$0xff]
        %v1738 = vld [vmem:[#allocation18 + $0xb70] sm:$0xff]
        %v1739 = vld [vmem:[#allocation18 + $0xb78] sm:$0xff]
        %v1740 = vld [vmem:[#allocation18 + $0xb80] sm:$0xff]
        %v1741 = vld [vmem:[#allocation18 + $0xb88] sm:$0xff]
        %v1742 = vld [vmem:[#allocation18 + $0xb90] sm:$0xff]
        %v1743 = vld [vmem:[#allocation18 + $0xb98] sm:$0xff]
        %v1744 = vld [vmem:[#allocation18 + $0xba0] sm:$0xff]
        %v1745 = vld [vmem:[#allocation18 + $0xba8] sm:$0xff]
        %v1746 = vld [vmem:[#allocation18 + $0xbb0] sm:$0xff]
        %v1747 = vld [vmem:[#allocation18 + $0xbb8] sm:$0xff]
        %v1748 = vld [vmem:[#allocation18 + $0xbc0] sm:$0xff]
        %v1749 = vld [vmem:[#allocation18 + $0xbc8] sm:$0xff]
        %v1750 = vld [vmem:[#allocation18 + $0xbd0] sm:$0xff]
        %v1751 = vld [vmem:[#allocation18 + $0xbd8] sm:$0xff]
        %v1752 = vld [vmem:[#allocation18 + $0xbe0] sm:$0xff]
        %v1753 = vld [vmem:[#allocation18 + $0xbe8] sm:$0xff]
        %v1754 = vld [vmem:[#allocation18 + $0xbf0] sm:$0xff]
        %v1755 = vld [vmem:[#allocation18 + $0xbf8] sm:$0xff]
        %v1756 = vld [vmem:[#allocation18 + $0xc00] sm:$0xff]
        %v1757 = vld [vmem:[#allocation18 + $0xc08] sm:$0xff]
        %v1758 = vld [vmem:[#allocation18 + $0xc10] sm:$0xff]
        %v1759 = vld [vmem:[#allocation18 + $0xc18] sm:$0xff]
        %v1760 = vld [vmem:[#allocation18 + $0xc20] sm:$0xff]
        %v1761 = vld [vmem:[#allocation18 + $0xc28] sm:$0xff]
        %v1762 = vld [vmem:[#allocation18 + $0xc30] sm:$0xff]
        %v1763 = vld [vmem:[#allocation18 + $0xc38] sm:$0xff]
        %v1764 = vld [vmem:[#allocation18 + $0xc40] sm:$0xff]
        %v1765 = vld [vmem:[#allocation18 + $0xc48] sm:$0xff]
        %v1766 = vld [vmem:[#allocation18 + $0xc50] sm:$0xff]
        %v1767 = vld [vmem:[#allocation18 + $0xc58] sm:$0xff]
        %v1768 = vld [vmem:[#allocation18 + $0xc60] sm:$0xff]
        %v1769 = vld [vmem:[#allocation18 + $0xc68] sm:$0xff]
        %v1770 = vld [vmem:[#allocation18 + $0xc70] sm:$0xff]
        %v1771 = vld [vmem:[#allocation18 + $0xc78] sm:$0xff]
        %v1772 = vld [vmem:[#allocation18 + $0xc80] sm:$0xff]
        %v1773 = vld [vmem:[#allocation18 + $0xc88] sm:$0xff]
        %v1774 = vld [vmem:[#allocation18 + $0xc90] sm:$0xff]
        %v1775 = vld [vmem:[#allocation18 + $0xc98] sm:$0xff]
        %v1776 = vld [vmem:[#allocation18 + $0xca0] sm:$0xff]
        %v1777 = vld [vmem:[#allocation18 + $0xca8] sm:$0xff]
        %v1778 = vld [vmem:[#allocation18 + $0xcb0] sm:$0xff]
        %v1779 = vld [vmem:[#allocation18 + $0xcb8] sm:$0xff]
        %v1780 = vld [vmem:[#allocation18 + $0xcc0] sm:$0xff]
        %v1781 = vld [vmem:[#allocation18 + $0xcc8] sm:$0xff]
        %v1782 = vld [vmem:[#allocation18 + $0xcd0] sm:$0xff]
        %v1783 = vld [vmem:[#allocation18 + $0xcd8] sm:$0xff]
        %v1784 = vld [vmem:[#allocation18 + $0xce0] sm:$0xff]
        %v1785 = vld [vmem:[#allocation18 + $0xce8] sm:$0xff]
        %v1786 = vld [vmem:[#allocation18 + $0xcf0] sm:$0xff]
        %v1787 = vld [vmem:[#allocation18 + $0xcf8] sm:$0xff]
        %v1788 = vld [vmem:[#allocation18 + $0xd00] sm:$0xff]
        %v1789 = vld [vmem:[#allocation18 + $0xd08] sm:$0xff]
        %v1790 = vld [vmem:[#allocation18 + $0xd10] sm:$0xff]
        %v1791 = vld [vmem:[#allocation18 + $0xd18] sm:$0xff]
        %v1792 = vld [vmem:[#allocation18 + $0xd20] sm:$0xff]
        %v1793 = vld [vmem:[#allocation18 + $0xd28] sm:$0xff]
        %v1794 = vld [vmem:[#allocation18 + $0xd30] sm:$0xff]
        %v1795 = vld [vmem:[#allocation18 + $0xd38] sm:$0xff]
        %v1796 = vld [vmem:[#allocation18 + $0xd40] sm:$0xff]
        %v1797 = vld [vmem:[#allocation18 + $0xd48] sm:$0xff]
        %v1798 = vld [vmem:[#allocation18 + $0xd50] sm:$0xff]
        %v1799 = vld [vmem:[#allocation18 + $0xd58] sm:$0xff]
        %v1800 = vld [vmem:[#allocation18 + $0xd60] sm:$0xff]
        %v1801 = vld [vmem:[#allocation18 + $0xd68] sm:$0xff]
        %v1802 = vld [vmem:[#allocation18 + $0xd70] sm:$0xff]
        %v1803 = vld [vmem:[#allocation18 + $0xd78] sm:$0xff]
        %v1804 = vld [vmem:[#allocation18 + $0xd80] sm:$0xff]
        %v1805 = vld [vmem:[#allocation18 + $0xd88] sm:$0xff]
        %v1806 = vld [vmem:[#allocation18 + $0xd90] sm:$0xff]
        %v1807 = vld [vmem:[#allocation18 + $0xd98] sm:$0xff]
        %v1808 = vld [vmem:[#allocation18 + $0xda0] sm:$0xff]
        %v1809 = vld [vmem:[#allocation18 + $0xda8] sm:$0xff]
        %v1810 = vld [vmem:[#allocation18 + $0xdb0] sm:$0xff]
        %v1811 = vld [vmem:[#allocation18 + $0xdb8] sm:$0xff]
        %v1812 = vld [vmem:[#allocation18 + $0xdc0] sm:$0xff]
        %v1813 = vld [vmem:[#allocation18 + $0xdc8] sm:$0xff]
        %v1814 = vld [vmem:[#allocation18 + $0xdd0] sm:$0xff]
        %v1815 = vld [vmem:[#allocation18 + $0xdd8] sm:$0xff]
        %v1816 = vld [vmem:[#allocation18 + $0xde0] sm:$0xff]
        %v1817 = vld [vmem:[#allocation18 + $0xde8] sm:$0xff]
        %v1818 = vld [vmem:[#allocation18 + $0xdf0] sm:$0xff]
        %v1819 = vld [vmem:[#allocation18 + $0xdf8] sm:$0xff]
        %v1820 = vld [vmem:[#allocation18 + $0xe00] sm:$0xff]
        %v1821 = vld [vmem:[#allocation18 + $0xe08] sm:$0xff]
        %v1822 = vld [vmem:[#allocation18 + $0xe10] sm:$0xff]
        %v1823 = vld [vmem:[#allocation18 + $0xe18] sm:$0xff]
        %v1824 = vld [vmem:[#allocation18 + $0xe20] sm:$0xff]
        %v1825 = vld [vmem:[#allocation18 + $0xe28] sm:$0xff]
        %v1826 = vld [vmem:[#allocation18 + $0xe30] sm:$0xff]
        %v1827 = vld [vmem:[#allocation18 + $0xe38] sm:$0xff]
        %v1828 = vld [vmem:[#allocation18 + $0xe40] sm:$0xff]
        %v1829 = vld [vmem:[#allocation18 + $0xe48] sm:$0xff]
        %v1830 = vld [vmem:[#allocation18 + $0xe50] sm:$0xff]
        %v1831 = vld [vmem:[#allocation18 + $0xe58] sm:$0xff]
        %v1832 = vld [vmem:[#allocation18 + $0xe60] sm:$0xff]
        %v1833 = vld [vmem:[#allocation18 + $0xe68] sm:$0xff]
        %v1834 = vld [vmem:[#allocation18 + $0xe70] sm:$0xff]
        %v1835 = vld [vmem:[#allocation18 + $0xe78] sm:$0xff]
        %v1836 = vld [vmem:[#allocation18 + $0xe80] sm:$0xff]
        %v1837 = vld [vmem:[#allocation18 + $0xe88] sm:$0xff]
        %v1838 = vld [vmem:[#allocation18 + $0xe90] sm:$0xff]
        %v1839 = vld [vmem:[#allocation18 + $0xe98] sm:$0xff]
        %v1840 = vld [vmem:[#allocation18 + $0xea0] sm:$0xff]
        %v1841 = vld [vmem:[#allocation18 + $0xea8] sm:$0xff]
        %v1842 = vld [vmem:[#allocation18 + $0xeb0] sm:$0xff]
        %v1843 = vld [vmem:[#allocation18 + $0xeb8] sm:$0xff]
        %v1844 = vld [vmem:[#allocation18 + $0xec0] sm:$0xff]
        %v1845 = vld [vmem:[#allocation18 + $0xec8] sm:$0xff]
        %v1846 = vld [vmem:[#allocation18 + $0xed0] sm:$0xff]
        %v1847 = vld [vmem:[#allocation18 + $0xed8] sm:$0xff]
        %v1848 = vld [vmem:[#allocation18 + $0xee0] sm:$0xff]
        %v1849 = vld [vmem:[#allocation18 + $0xee8] sm:$0xff]
        %v1850 = vld [vmem:[#allocation18 + $0xef0] sm:$0xff]
        %v1851 = vld [vmem:[#allocation18 + $0xef8] sm:$0xff]
        %v1852 = vld [vmem:[#allocation18 + $0xf00] sm:$0xff]
        %v1853 = vld [vmem:[#allocation18 + $0xf08] sm:$0xff]
        %v1854 = vld [vmem:[#allocation18 + $0xf10] sm:$0xff]
        %v1855 = vld [vmem:[#allocation18 + $0xf18] sm:$0xff]
        %v1856 = vld [vmem:[#allocation18 + $0xf20] sm:$0xff]
        %v1857 = vld [vmem:[#allocation18 + $0xf28] sm:$0xff]
        %v1858 = vld [vmem:[#allocation18 + $0xf30] sm:$0xff]
        %v1859 = vld [vmem:[#allocation18 + $0xf38] sm:$0xff]
        %v1860 = vld [vmem:[#allocation18 + $0xf40] sm:$0xff]
        %v1861 = vld [vmem:[#allocation18 + $0xf48] sm:$0xff]
        %v1862 = vld [vmem:[#allocation18 + $0xf50] sm:$0xff]
        %v1863 = vld [vmem:[#allocation18 + $0xf58] sm:$0xff]
        %v1864 = vld [vmem:[#allocation18 + $0xf60] sm:$0xff]
        %v1865 = vld [vmem:[#allocation18 + $0xf68] sm:$0xff]
        %v1866 = vld [vmem:[#allocation18 + $0xf70] sm:$0xff]
        %v1867 = vld [vmem:[#allocation18 + $0xf78] sm:$0xff]
        %v1868 = vld [vmem:[#allocation18 + $0xf80] sm:$0xff]
        %v1869 = vld [vmem:[#allocation18 + $0xf88] sm:$0xff]
        %v1870 = vld [vmem:[#allocation18 + $0xf90] sm:$0xff]
        %v1871 = vld [vmem:[#allocation18 + $0xf98] sm:$0xff]
        %v1872 = vld [vmem:[#allocation18 + $0xfa0] sm:$0xff]
        %v1873 = vld [vmem:[#allocation18 + $0xfa8] sm:$0xff]
        %v1874 = vld [vmem:[#allocation18 + $0xfb0] sm:$0xff]
        %v1875 = vld [vmem:[#allocation18 + $0xfb8] sm:$0xff]
        %v1876 = vld [vmem:[#allocation18 + $0xfc0] sm:$0xff]
        %v1877 = vld [vmem:[#allocation18 + $0xfc8] sm:$0xff]
        %v1878 = vld [vmem:[#allocation18 + $0xfd0] sm:$0xff]
        %v1879 = vld [vmem:[#allocation18 + $0xfd8] sm:$0xff]
        %v1880 = vld [vmem:[#allocation18 + $0xfe0] sm:$0xff]
        %v1881 = vld [vmem:[#allocation18 + $0xfe8] sm:$0xff]
        %v1882 = vld [vmem:[#allocation18 + $0xff0] sm:$0xff]
        %v1883 = vld [vmem:[#allocation18 + $0xff8] sm:$0xff]
        %v1884 = vld [vmem:[#allocation18 + $0x1000] sm:$0xff]
        %v1885 = vld [vmem:[#allocation18 + $0x1008] sm:$0xff]
        %v1886 = vld [vmem:[#allocation18 + $0x1010] sm:$0xff]
        %v1887 = vld [vmem:[#allocation18 + $0x1018] sm:$0xff]
        %v1888 = vld [vmem:[#allocation18 + $0x1020] sm:$0xff]
        %v1889 = vld [vmem:[#allocation18 + $0x1028] sm:$0xff]
        %v1890 = vld [vmem:[#allocation18 + $0x1030] sm:$0xff]
        %v1891 = vld [vmem:[#allocation18 + $0x1038] sm:$0xff]
        %v1892 = vld [vmem:[#allocation18 + $0x1040] sm:$0xff]
        %v1893 = vld [vmem:[#allocation18 + $0x1048] sm:$0xff]
        %v1894 = vld [vmem:[#allocation18 + $0x1050] sm:$0xff]
        %v1895 = vld [vmem:[#allocation18 + $0x1058] sm:$0xff]
        %v1896 = vld [vmem:[#allocation18 + $0x1060] sm:$0xff]
        %v1897 = vld [vmem:[#allocation18 + $0x1068] sm:$0xff]
        %v1898 = vld [vmem:[#allocation18 + $0x1070] sm:$0xff]
        %v1899 = vld [vmem:[#allocation18 + $0x1078] sm:$0xff]
        %v1900 = vld [vmem:[#allocation18 + $0x1080] sm:$0xff]
        %v1901 = vld [vmem:[#allocation18 + $0x1088] sm:$0xff]
        %v1902 = vld [vmem:[#allocation18 + $0x1090] sm:$0xff]
        %v1903 = vld [vmem:[#allocation18 + $0x1098] sm:$0xff]
        %v1904 = vld [vmem:[#allocation18 + $0x10a0] sm:$0xff]
        %v1905 = vld [vmem:[#allocation18 + $0x10a8] sm:$0xff]
        %v1906 = vld [vmem:[#allocation18 + $0x10b0] sm:$0xff]
        %v1907 = vld [vmem:[#allocation18 + $0x10b8] sm:$0xff]
        %v1908 = vld [vmem:[#allocation18 + $0x10c0] sm:$0xff]
        %v1909 = vld [vmem:[#allocation18 + $0x10c8] sm:$0xff]
        %v1910 = vld [vmem:[#allocation18 + $0x10d0] sm:$0xff]
        %v1911 = vld [vmem:[#allocation18 + $0x10d8] sm:$0xff]
        %v1912 = vld [vmem:[#allocation18 + $0x10e0] sm:$0xff]
        %v1913 = vld [vmem:[#allocation18 + $0x10e8] sm:$0xff]
        %v1914 = vld [vmem:[#allocation18 + $0x10f0] sm:$0xff]
        %v1915 = vld [vmem:[#allocation18 + $0x10f8] sm:$0xff]
        %v1916 = vld [vmem:[#allocation18 + $0x1100] sm:$0xff]
        %v1917 = vld [vmem:[#allocation18 + $0x1108] sm:$0xff]
        %v1918 = vld [vmem:[#allocation18 + $0x1110] sm:$0xff]
        %v1919 = vld [vmem:[#allocation18 + $0x1118] sm:$0xff]
        %v1920 = vld [vmem:[#allocation18 + $0x1120] sm:$0xff]
        %v1921 = vld [vmem:[#allocation18 + $0x1128] sm:$0xff]
        %v1922 = vld [vmem:[#allocation18 + $0x1130] sm:$0xff]
        %v1923 = vld [vmem:[#allocation18 + $0x1138] sm:$0xff]
        %v1924 = vld [vmem:[#allocation18 + $0x1140] sm:$0xff]
        %v1925 = vld [vmem:[#allocation18 + $0x1148] sm:$0xff]
        %v1926 = vld [vmem:[#allocation18 + $0x1150] sm:$0xff]
        %v1927 = vld [vmem:[#allocation18 + $0x1158] sm:$0xff]
        %v1928 = vld [vmem:[#allocation18 + $0x1160] sm:$0xff]
        %v1929 = vld [vmem:[#allocation18 + $0x1168] sm:$0xff]
        %v1930 = vld [vmem:[#allocation18 + $0x1170] sm:$0xff]
        %v1931 = vld [vmem:[#allocation18 + $0x1178] sm:$0xff]
        %v1932 = vld [vmem:[#allocation18 + $0x1180] sm:$0xff]
        %v1933 = vld [vmem:[#allocation18 + $0x1188] sm:$0xff]
        %v1934 = vld [vmem:[#allocation18 + $0x1190] sm:$0xff]
        %v1935 = vld [vmem:[#allocation18 + $0x1198] sm:$0xff]
        %v1936 = vld [vmem:[#allocation18 + $0x11a0] sm:$0xff]
        %v1937 = vld [vmem:[#allocation18 + $0x11a8] sm:$0xff]
        %v1938 = vld [vmem:[#allocation18 + $0x11b0] sm:$0xff]
        %v1939 = vld [vmem:[#allocation18 + $0x11b8] sm:$0xff]
        %v1940 = vld [vmem:[#allocation18 + $0x11c0] sm:$0xff]
        %v1941 = vld [vmem:[#allocation18 + $0x11c8] sm:$0xff]
        %v1942 = vld [vmem:[#allocation18 + $0x11d0] sm:$0xff]
        %v1943 = vld [vmem:[#allocation18 + $0x11d8] sm:$0xff]
        %v1944 = vld [vmem:[#allocation18 + $0x11e0] sm:$0xff]
        %v1945 = vld [vmem:[#allocation18 + $0x11e8] sm:$0xff]
        %v1946 = vld [vmem:[#allocation18 + $0x11f0] sm:$0xff]
        %v1947 = vld [vmem:[#allocation18 + $0x11f8] sm:$0xff]
        %v1948 = vld [vmem:[#allocation18 + $0x1200] sm:$0xff]
        %v1949 = vld [vmem:[#allocation18 + $0x1208] sm:$0xff]
        %v1950 = vld [vmem:[#allocation18 + $0x1210] sm:$0xff]
        %v1951 = vld [vmem:[#allocation18 + $0x1218] sm:$0xff]
        %v1952 = vld [vmem:[#allocation18 + $0x1220] sm:$0xff]
        %v1953 = vld [vmem:[#allocation18 + $0x1228] sm:$0xff]
        %v1954 = vld [vmem:[#allocation18 + $0x1230] sm:$0xff]
        %v1955 = vld [vmem:[#allocation18 + $0x1238] sm:$0xff]
        %v1956 = vld [vmem:[#allocation18 + $0x1240] sm:$0xff]
        %v1957 = vld [vmem:[#allocation18 + $0x1248] sm:$0xff]
        %v1958 = vld [vmem:[#allocation18 + $0x1250] sm:$0xff]
        %v1959 = vld [vmem:[#allocation18 + $0x1258] sm:$0xff]
        %v1960 = vld [vmem:[#allocation18 + $0x1260] sm:$0xff]
        %v1961 = vld [vmem:[#allocation18 + $0x1268] sm:$0xff]
        %v1962 = vld [vmem:[#allocation18 + $0x1270] sm:$0xff]
        %v1963 = vld [vmem:[#allocation18 + $0x1278] sm:$0xff]
        %v1964 = vld [vmem:[#allocation18 + $0x1280] sm:$0xff]
        %v1965 = vld [vmem:[#allocation18 + $0x1288] sm:$0xff]
        %v1966 = vld [vmem:[#allocation18 + $0x1290] sm:$0xff]
        %v1967 = vld [vmem:[#allocation18 + $0x1298] sm:$0xff]
        %v1968 = vld [vmem:[#allocation18 + $0x12a0] sm:$0xff]
        %v1969 = vld [vmem:[#allocation18 + $0x12a8] sm:$0xff]
        %v1970 = vld [vmem:[#allocation18 + $0x12b0] sm:$0xff]
        %v1971 = vld [vmem:[#allocation18 + $0x12b8] sm:$0xff]
        %v1972 = vld [vmem:[#allocation18 + $0x12c0] sm:$0xff]
        %v1973 = vld [vmem:[#allocation18 + $0x12c8] sm:$0xff]
        %v1974 = vld [vmem:[#allocation18 + $0x12d0] sm:$0xff]
        %v1975 = vld [vmem:[#allocation18 + $0x12d8] sm:$0xff]
        %v1976 = vld [vmem:[#allocation18 + $0x12e0] sm:$0xff]
        %v1977 = vld [vmem:[#allocation18 + $0x12e8] sm:$0xff]
        %v1978 = vld [vmem:[#allocation18 + $0x12f0] sm:$0xff]
        %v1979 = vld [vmem:[#allocation18 + $0x12f8] sm:$0xff]
        %v1980 = vld [vmem:[#allocation18 + $0x1300] sm:$0xff]
        %v1981 = vld [vmem:[#allocation18 + $0x1308] sm:$0xff]
        %v1982 = vld [vmem:[#allocation18 + $0x1310] sm:$0xff]
        %v1983 = vld [vmem:[#allocation18 + $0x1318] sm:$0xff]
        %v1984 = vld [vmem:[#allocation18 + $0x1320] sm:$0xff]
        %v1985 = vld [vmem:[#allocation18 + $0x1328] sm:$0xff]
        %v1986 = vld [vmem:[#allocation18 + $0x1330] sm:$0xff]
        %v1987 = vld [vmem:[#allocation18 + $0x1338] sm:$0xff]
        %v1988 = vld [vmem:[#allocation18 + $0x1340] sm:$0xff]
        %v1989 = vld [vmem:[#allocation18 + $0x1348] sm:$0xff]
        %v1990 = vld [vmem:[#allocation18 + $0x1350] sm:$0xff]
        %v1991 = vld [vmem:[#allocation18 + $0x1358] sm:$0xff]
        %v1992 = vld [vmem:[#allocation18 + $0x1360] sm:$0xff]
        %v1993 = vld [vmem:[#allocation18 + $0x1368] sm:$0xff]
        %v1994 = vld [vmem:[#allocation18 + $0x1370] sm:$0xff]
        %v1995 = vld [vmem:[#allocation18 + $0x1378] sm:$0xff]
        %v1996 = vld [vmem:[#allocation18 + $0x1380] sm:$0xff]
        %v1997 = vld [vmem:[#allocation18 + $0x1388] sm:$0xff]
        %v1998 = vld [vmem:[#allocation18 + $0x1390] sm:$0xff]
        %v1999 = vld [vmem:[#allocation18 + $0x1398] sm:$0xff]
        %v2000 = vld [vmem:[#allocation18 + $0x13a0] sm:$0xff]
        %v2001 = vld [vmem:[#allocation18 + $0x13a8] sm:$0xff]
        %v2002 = vld [vmem:[#allocation18 + $0x13b0] sm:$0xff]
        %v2003 = vld [vmem:[#allocation18 + $0x13b8] sm:$0xff]
        %v2004 = vld [vmem:[#allocation18 + $0x13c0] sm:$0xff]
        %v2005 = vld [vmem:[#allocation18 + $0x13c8] sm:$0xff]
        %v2006 = vld [vmem:[#allocation18 + $0x13d0] sm:$0xff]
        %v2007 = vld [vmem:[#allocation18 + $0x13d8] sm:$0xff]
        %v2008 = vld [vmem:[#allocation18 + $0x13e0] sm:$0xff]
        %v2009 = vld [vmem:[#allocation18 + $0x13e8] sm:$0xff]
        %v2010 = vld [vmem:[#allocation18 + $0x13f0] sm:$0xff]
        %v2011 = vld [vmem:[#allocation18 + $0x13f8] sm:$0xff]
        %v2012 = vld [vmem:[#allocation18 + $0x1400] sm:$0xff]
        %v2013 = vld [vmem:[#allocation18 + $0x1408] sm:$0xff]
        %v2014 = vld [vmem:[#allocation18 + $0x1410] sm:$0xff]
        %v2015 = vld [vmem:[#allocation18 + $0x1418] sm:$0xff]
        %v2016 = vld [vmem:[#allocation18 + $0x1420] sm:$0xff]
        %v2017 = vld [vmem:[#allocation18 + $0x1428] sm:$0xff]
        %v2018 = vld [vmem:[#allocation18 + $0x1430] sm:$0xff]
        %v2019 = vld [vmem:[#allocation18 + $0x1438] sm:$0xff]
        %v2020 = vld [vmem:[#allocation18 + $0x1440] sm:$0xff]
        %v2021 = vld [vmem:[#allocation18 + $0x1448] sm:$0xff]
        %v2022 = vld [vmem:[#allocation18 + $0x1450] sm:$0xff]
        %v2023 = vld [vmem:[#allocation18 + $0x1458] sm:$0xff]
        %v2024 = vld [vmem:[#allocation18 + $0x1460] sm:$0xff]
        %v2025 = vld [vmem:[#allocation18 + $0x1468] sm:$0xff]
        %v2026 = vld [vmem:[#allocation18 + $0x1470] sm:$0xff]
        %v2027 = vld [vmem:[#allocation18 + $0x1478] sm:$0xff]
        %v2028 = vld [vmem:[#allocation18 + $0x1480] sm:$0xff]
        %v2029 = vld [vmem:[#allocation18 + $0x1488] sm:$0xff]
        %v2030 = vld [vmem:[#allocation18 + $0x1490] sm:$0xff]
        %v2031 = vld [vmem:[#allocation18 + $0x1498] sm:$0xff]
        %v2032 = vld [vmem:[#allocation18 + $0x14a0] sm:$0xff]
        %v2033 = vld [vmem:[#allocation18 + $0x14a8] sm:$0xff]
        %v2034 = vld [vmem:[#allocation18 + $0x14b0] sm:$0xff]
        %v2035 = vld [vmem:[#allocation18 + $0x14b8] sm:$0xff]
        %v2036 = vld [vmem:[#allocation18 + $0x14c0] sm:$0xff]
        %v2037 = vld [vmem:[#allocation18 + $0x14c8] sm:$0xff]
        %v2038 = vld [vmem:[#allocation18 + $0x14d0] sm:$0xff]
        %v2039 = vld [vmem:[#allocation18 + $0x14d8] sm:$0xff]
        %v2040 = vld [vmem:[#allocation18 + $0x14e0] sm:$0xff]
        %v2041 = vld [vmem:[#allocation18 + $0x14e8] sm:$0xff]
        %v2042 = vld [vmem:[#allocation18 + $0x14f0] sm:$0xff]
        %v2043 = vld [vmem:[#allocation18 + $0x14f8] sm:$0xff]
        %v2044 = vld [vmem:[#allocation18 + $0x1500] sm:$0xff]
        %v2045 = vld [vmem:[#allocation18 + $0x1508] sm:$0xff]
        %v2046 = vld [vmem:[#allocation18 + $0x1510] sm:$0xff]
        %v2047 = vld [vmem:[#allocation18 + $0x1518] sm:$0xff]
        %v2048 = vld [vmem:[#allocation18 + $0x1520] sm:$0xff]
        %v2049 = vld [vmem:[#allocation18 + $0x1528] sm:$0xff]
        %v2050 = vld [vmem:[#allocation18 + $0x1530] sm:$0xff]
        %v2051 = vld [vmem:[#allocation18 + $0x1538] sm:$0xff]
        %v2052 = vld [vmem:[#allocation18 + $0x1540] sm:$0xff]
        %v2053 = vld [vmem:[#allocation18 + $0x1548] sm:$0xff]
        %v2054 = vld [vmem:[#allocation18 + $0x1550] sm:$0xff]
        %v2055 = vld [vmem:[#allocation18 + $0x1558] sm:$0xff]
        %v2056 = vld [vmem:[#allocation18 + $0x1560] sm:$0xff]
        %v2057 = vld [vmem:[#allocation18 + $0x1568] sm:$0xff]
        %v2058 = vld [vmem:[#allocation18 + $0x1570] sm:$0xff]
        %v2059 = vld [vmem:[#allocation18 + $0x1578] sm:$0xff]
        %v2060 = vld [vmem:[#allocation18 + $0x1580] sm:$0xff]
        %v2061 = vld [vmem:[#allocation18 + $0x1588] sm:$0xff]
        %v2062 = vld [vmem:[#allocation18 + $0x1590] sm:$0xff]
        %v2063 = vld [vmem:[#allocation18 + $0x1598] sm:$0xff]
        %v2064 = vld [vmem:[#allocation18 + $0x15a0] sm:$0xff]
        %v2065 = vld [vmem:[#allocation18 + $0x15a8] sm:$0xff]
        %v2066 = vld [vmem:[#allocation18 + $0x15b0] sm:$0xff]
        %v2067 = vld [vmem:[#allocation18 + $0x15b8] sm:$0xff]
        %v2068 = vld [vmem:[#allocation18 + $0x15c0] sm:$0xff]
        %v2069 = vld [vmem:[#allocation18 + $0x15c8] sm:$0xff]
        %v2070 = vld [vmem:[#allocation18 + $0x15d0] sm:$0xff]
        %v2071 = vld [vmem:[#allocation18 + $0x15d8] sm:$0xff]
        %v2072 = vld [vmem:[#allocation18 + $0x15e0] sm:$0xff]
        %v2073 = vld [vmem:[#allocation18 + $0x15e8] sm:$0xff]
        %v2074 = vld [vmem:[#allocation18 + $0x15f0] sm:$0xff]
        %v2075 = vld [vmem:[#allocation18 + $0x15f8] sm:$0xff]
        %v2076 = vld [vmem:[#allocation18 + $0x1600] sm:$0xff]
        %v2077 = vld [vmem:[#allocation18 + $0x1608] sm:$0xff]
        %v2078 = vld [vmem:[#allocation18 + $0x1610] sm:$0xff]
        %v2079 = vld [vmem:[#allocation18 + $0x1618] sm:$0xff]
        %v2080 = vld [vmem:[#allocation18 + $0x1620] sm:$0xff]
        %v2081 = vld [vmem:[#allocation18 + $0x1628] sm:$0xff]
        %v2082 = vld [vmem:[#allocation18 + $0x1630] sm:$0xff]
        %v2083 = vld [vmem:[#allocation18 + $0x1638] sm:$0xff]
        %v2084 = vld [vmem:[#allocation18 + $0x1640] sm:$0xff]
        %v2085 = vld [vmem:[#allocation18 + $0x1648] sm:$0xff]
        %v2086 = vld [vmem:[#allocation18 + $0x1650] sm:$0xff]
        %v2087 = vld [vmem:[#allocation18 + $0x1658] sm:$0xff]
        %v2088 = vld [vmem:[#allocation18 + $0x1660] sm:$0xff]
        %v2089 = vld [vmem:[#allocation18 + $0x1668] sm:$0xff]
        %v2090 = vld [vmem:[#allocation18 + $0x1670] sm:$0xff]
        %v2091 = vld [vmem:[#allocation18 + $0x1678] sm:$0xff]
        %v2092 = vld [vmem:[#allocation18 + $0x1680] sm:$0xff]
        %v2093 = vld [vmem:[#allocation18 + $0x1688] sm:$0xff]
        %v2094 = vld [vmem:[#allocation18 + $0x1690] sm:$0xff]
        %v2095 = vld [vmem:[#allocation18 + $0x1698] sm:$0xff]
        %v2096 = vld [vmem:[#allocation18 + $0x16a0] sm:$0xff]
        %v2097 = vld [vmem:[#allocation18 + $0x16a8] sm:$0xff]
        %v2098 = vld [vmem:[#allocation18 + $0x16b0] sm:$0xff]
        %v2099 = vld [vmem:[#allocation18 + $0x16b8] sm:$0xff]
        %v2100 = vld [vmem:[#allocation18 + $0x16c0] sm:$0xff]
        %v2101 = vld [vmem:[#allocation18 + $0x16c8] sm:$0xff]
        %v2102 = vld [vmem:[#allocation18 + $0x16d0] sm:$0xff]
        %v2103 = vld [vmem:[#allocation18 + $0x16d8] sm:$0xff]
        %v2104 = vld [vmem:[#allocation18 + $0x16e0] sm:$0xff]
        %v2105 = vld [vmem:[#allocation18 + $0x16e8] sm:$0xff]
        %v2106 = vld [vmem:[#allocation18 + $0x16f0] sm:$0xff]
        %v2107 = vld [vmem:[#allocation18 + $0x16f8] sm:$0xff]
        %v2108 = vld [vmem:[#allocation18 + $0x1700] sm:$0xff]
        %v2109 = vld [vmem:[#allocation18 + $0x1708] sm:$0xff]
        %v2110 = vld [vmem:[#allocation18 + $0x1710] sm:$0xff]
        %v2111 = vld [vmem:[#allocation18 + $0x1718] sm:$0xff]
        %v2112 = vld [vmem:[#allocation18 + $0x1720] sm:$0xff]
        %v2113 = vld [vmem:[#allocation18 + $0x1728] sm:$0xff]
        %v2114 = vld [vmem:[#allocation18 + $0x1730] sm:$0xff]
        %v2115 = vld [vmem:[#allocation18 + $0x1738] sm:$0xff]
        %v2116 = vld [vmem:[#allocation18 + $0x1740] sm:$0xff]
        %v2117 = vld [vmem:[#allocation18 + $0x1748] sm:$0xff]
        %v2118 = vld [vmem:[#allocation18 + $0x1750] sm:$0xff]
        %v2119 = vld [vmem:[#allocation18 + $0x1758] sm:$0xff]
        %v2120 = vld [vmem:[#allocation18 + $0x1760] sm:$0xff]
        %v2121 = vld [vmem:[#allocation18 + $0x1768] sm:$0xff]
        %v2122 = vld [vmem:[#allocation18 + $0x1770] sm:$0xff]
        %v2123 = vld [vmem:[#allocation18 + $0x1778] sm:$0xff]
        %v2124 = vld [vmem:[#allocation18 + $0x1780] sm:$0xff]
        %v2125 = vld [vmem:[#allocation18 + $0x1788] sm:$0xff]
        %v2126 = vld [vmem:[#allocation18 + $0x1790] sm:$0xff]
        %v2127 = vld [vmem:[#allocation18 + $0x1798] sm:$0xff]
        %v2128 = vld [vmem:[#allocation18 + $0x17a0] sm:$0xff]
        %v2129 = vld [vmem:[#allocation18 + $0x17a8] sm:$0xff]
        %v2130 = vld [vmem:[#allocation18 + $0x17b0] sm:$0xff]
        %v2131 = vld [vmem:[#allocation18 + $0x17b8] sm:$0xff]
        %v2132 = vld [vmem:[#allocation18 + $0x17c0] sm:$0xff]
        %v2133 = vld [vmem:[#allocation18 + $0x17c8] sm:$0xff]
        %v2134 = vld [vmem:[#allocation18 + $0x17d0] sm:$0xff]
        %v2135 = vld [vmem:[#allocation18 + $0x17d8] sm:$0xff]
        %v2136 = vld [vmem:[#allocation18 + $0x17e0] sm:$0xff]
        %v2137 = vld [vmem:[#allocation18 + $0x17e8] sm:$0xff]
        %v2138 = vld [vmem:[#allocation18 + $0x17f0] sm:$0xff]
        %v2139 = vld [vmem:[#allocation18 + $0x17f8] sm:$0xff]
        %v2140 = vld [vmem:[#allocation19] sm:$0xff]
        %v2141 = vld [vmem:[#allocation19 + $0x8] sm:$0xf]
        %v2144 = vlaneseq
        %v2145 = vshrl.u32 %v2144, 7
        %v2146 = vsub.s32 0, %v2145
        %v2147 = vrot.slane %v2140, %v2146
        %v2148 = vlaneseq
        %v2149 = vshrl.u32 %v2148, 7
        %v2150 = vsub.s32 1, %v2149
        %v2151 = vrot.slane %v2140, %v2150
        %v2152 = vlaneseq
        %v2153 = vshrl.u32 %v2152, 7
        %v2154 = vsub.s32 2, %v2153
        %v2155 = vrot.slane %v2140, %v2154
        %v2156 = vlaneseq
        %v2157 = vshrl.u32 %v2156, 7
        %v2158 = vsub.s32 3, %v2157
        %v2159 = vrot.slane %v2140, %v2158
        %v2160 = vlaneseq
        %v2161 = vshrl.u32 %v2160, 7
        %v2162 = vsub.s32 4, %v2161
        %v2163 = vrot.slane %v2140, %v2162
        %v2164 = vlaneseq
        %v2165 = vshrl.u32 %v2164, 7
        %v2166 = vsub.s32 5, %v2165
        %v2167 = vrot.slane %v2140, %v2166
        %v2168 = vlaneseq
        %v2169 = vshrl.u32 %v2168, 7
        %v2170 = vsub.s32 6, %v2169
        %v2171 = vrot.slane %v2140, %v2170
        %v2172 = vlaneseq
        %v2173 = vshrl.u32 %v2172, 7
        %v2174 = vsub.s32 7, %v2173
        %v2175 = vrot.slane %v2140, %v2174
        %v2176 = vlaneseq
        %v2177 = vshrl.u32 %v2176, 7
        %v2178 = vsub.s32 0, %v2177
        %v2179 = vrot.slane %v2141, %v2178
        %v2180 = vlaneseq
        %v2181 = vshrl.u32 %v2180, 7
        %v2182 = vsub.s32 1, %v2181
        %v2183 = vrot.slane %v2141, %v2182
        %v2184 = vlaneseq
        %v2185 = vshrl.u32 %v2184, 7
        %v2186 = vsub.s32 2, %v2185
        %v2187 = vrot.slane %v2141, %v2186
        %v2188 = vlaneseq
        %v2189 = vshrl.u32 %v2188, 7
        %v2190 = vsub.s32 3, %v2189
        %v2191 = vrot.slane %v2141, %v2190
        %2204 = vmatprep.subr.mxu0 %v1373
        %2205 = vmatpush1.msra.mxu0 %v1372
        %2206 = vmatprep.subr.mxu0 %v1385
        %2207 = vmatpush1.msra.mxu0 %v1384
        %2208 = vmatprep.subr.mxu0 %v1397
        %2209 = vmatpush1.msra.mxu0 %v1396
        %2210 = vmatprep.subr.mxu0 %v1409
        %2211 = vmatpush1.msra.mxu0 %v1408
        %2212 = vmatprep.subr.mxu0 %v1421
        %2213 = vmatpush1.msra.mxu0 %v1420
        %2214 = vmatprep.subr.mxu0 %v1433
        %2215 = vmatpush1.msra.mxu0 %v1432
        %2216 = vmatprep.subr.mxu0 %v1445
        %2217 = vmatpush1.msra.mxu0 %v1444
        %2218 = vmatprep.subr.mxu0 %v1457
        %2219 = vmatpush1.msra.mxu0 %v1456
        %2220 = vmatprep.subr.mxu0 %v1469
        %2221 = vmatpush1.msra.mxu0 %v1468
        %2222 = vmatprep.subr.mxu0 %v1481
        %2223 = vmatpush1.msra.mxu0 %v1480
        %2224 = vmatprep.subr.mxu0 %v1493
        %2225 = vmatpush1.msra.mxu0 %v1492
        %2226 = vmatprep.subr.mxu0 %v1505
        %2227 = vmatpush1.msra.mxu0 %v1504
        %2228 = vmatprep.subr.mxu0 %v1517
        %2229 = vmatpush1.msra.mxu0 %v1516
        %2230 = vmatprep.subr.mxu0 %v1529
        %2231 = vmatpush1.msra.mxu0 %v1528
        %2232 = vmatprep.subr.mxu0 %v1541
        %2233 = vmatpush1.msra.mxu0 %v1540
        %2234 = vmatprep.subr.mxu0 %v1553
        %2235 = vmatpush1.msra.mxu0 %v1552
        %2236 = vmatprep.subr.mxu0 %v1565
        %2237 = vmatpush1.msra.mxu0 %v1564
        %2238 = vmatprep.subr.mxu0 %v1577
        %2239 = vmatpush1.msra.mxu0 %v1576
        %2240 = vmatprep.subr.mxu0 %v1589
        %2241 = vmatpush1.msra.mxu0 %v1588
        %2242 = vmatprep.subr.mxu0 %v1601
        %2243 = vmatpush1.msra.mxu0 %v1600
        %2244 = vmatprep.subr.mxu0 %v1613
        %2245 = vmatpush1.msra.mxu0 %v1612
        %2246 = vmatprep.subr.mxu0 %v1625
        %2247 = vmatpush1.msra.mxu0 %v1624
        %2248 = vmatprep.subr.mxu0 %v1637
        %2249 = vmatpush1.msra.mxu0 %v1636
        %2250 = vmatprep.subr.mxu0 %v1649
        %2251 = vmatpush1.msra.mxu0 %v1648
        %2252 = vmatprep.subr.mxu0 %v1661
        %2253 = vmatpush1.msra.mxu0 %v1660
        %2254 = vmatprep.subr.mxu0 %v1673
        %2255 = vmatpush1.msra.mxu0 %v1672
        %2256 = vmatprep.subr.mxu0 %v1685
        %2257 = vmatpush1.msra.mxu0 %v1684
        %2258 = vmatprep.subr.mxu0 %v1697
        %2259 = vmatpush1.msra.mxu0 %v1696
        %2260 = vmatprep.subr.mxu0 %v1709
        %2261 = vmatpush1.msra.mxu0 %v1708
        %2262 = vmatprep.subr.mxu0 %v1721
        %2263 = vmatpush1.msra.mxu0 %v1720
        %2264 = vmatprep.subr.mxu0 %v1733
        %2265 = vmatpush1.msra.mxu0 %v1732
        %2266 = vmatprep.subr.mxu0 %v1745
        %2267 = vmatpush1.msra.mxu0 %v1744
        %2268 = vmatprep.mubr.f32.mxu0 %v1369
        %2269 = vmatmul.mubr.f32.gmra.mrb[0].mxu0 %v1368
        %v2270 = vpop.f32.mrb[0].mxu0
        %v2271 = vadd.f32 %v2147, %v2270
        %v2272 = vpop.f32.mrb[0].mxu0
        %v2273 = vadd.f32 %v2151, %v2272
        %2274 = vdwg.mxu0
        %2275 = vmatprep.subr.mxu0 %v1757
        %2276 = vmatpush1.msra.mxu0 %v1756
        %2277 = vmatprep.subr.mxu0 %v1769
        %2278 = vmatpush1.msra.mxu0 %v1768
        %2279 = vmatprep.subr.mxu0 %v1781
        %2280 = vmatpush1.msra.mxu0 %v1780
        %2281 = vmatprep.subr.mxu0 %v1793
        %2282 = vmatpush1.msra.mxu0 %v1792
        %2283 = vmatprep.subr.mxu0 %v1805
        %2284 = vmatpush1.msra.mxu0 %v1804
        %2285 = vmatprep.subr.mxu0 %v1817
        %2286 = vmatpush1.msra.mxu0 %v1816
        %2287 = vmatprep.subr.mxu0 %v1829
        %2288 = vmatpush1.msra.mxu0 %v1828
        %2289 = vmatprep.subr.mxu0 %v1841
        %2290 = vmatpush1.msra.mxu0 %v1840
        %2291 = vmatprep.subr.mxu0 %v1853
        %2292 = vmatpush1.msra.mxu0 %v1852
        %2293 = vmatprep.subr.mxu0 %v1865
        %2294 = vmatpush1.msra.mxu0 %v1864
        %2295 = vmatprep.subr.mxu0 %v1877
        %2296 = vmatpush1.msra.mxu0 %v1876
        %2297 = vmatprep.subr.mxu0 %v1889
        %2298 = vmatpush1.msra.mxu0 %v1888
        %2299 = vmatprep.subr.mxu0 %v1901
        %2300 = vmatpush1.msra.mxu0 %v1900
        %2301 = vmatprep.subr.mxu0 %v1913
        %2302 = vmatpush1.msra.mxu0 %v1912
        %2303 = vmatprep.subr.mxu0 %v1925
        %2304 = vmatpush1.msra.mxu0 %v1924
        %2305 = vmatprep.subr.mxu0 %v1937
        %2306 = vmatpush1.msra.mxu0 %v1936
        %2307 = vmatprep.subr.mxu0 %v1949
        %2308 = vmatpush1.msra.mxu0 %v1948
        %2309 = vmatprep.subr.mxu0 %v1961
        %2310 = vmatpush1.msra.mxu0 %v1960
        %2311 = vmatprep.subr.mxu0 %v1973
        %2312 = vmatpush1.msra.mxu0 %v1972
        %2313 = vmatprep.subr.mxu0 %v1985
        %2314 = vmatpush1.msra.mxu0 %v1984
        %2315 = vmatprep.subr.mxu0 %v1997
        %2316 = vmatpush1.msra.mxu0 %v1996
        %2317 = vmatprep.subr.mxu0 %v2009
        %2318 = vmatpush1.msra.mxu0 %v2008
        %2319 = vmatprep.subr.mxu0 %v2021
        %2320 = vmatpush1.msra.mxu0 %v2020
        %2321 = vmatprep.subr.mxu0 %v2033
        %2322 = vmatpush1.msra.mxu0 %v2032
        %2323 = vmatprep.subr.mxu0 %v2045
        %2324 = vmatpush1.msra.mxu0 %v2044
        %2325 = vmatprep.subr.mxu0 %v2057
        %2326 = vmatpush1.msra.mxu0 %v2056
        %2327 = vmatprep.subr.mxu0 %v2069
        %2328 = vmatpush1.msra.mxu0 %v2068
        %2329 = vmatprep.subr.mxu0 %v2081
        %2330 = vmatpush1.msra.mxu0 %v2080
        %2331 = vmatprep.subr.mxu0 %v2093
        %2332 = vmatpush1.msra.mxu0 %v2092
        %2333 = vmatprep.subr.mxu0 %v2105
        %2334 = vmatpush1.msra.mxu0 %v2104
        %2335 = vmatprep.subr.mxu0 %v2117
        %2336 = vmatpush1.msra.mxu0 %v2116
        %2337 = vmatprep.subr.mxu0 %v2129
        %2338 = vmatpush1.msra.mxu0 %v2128
        %2339 = vmatprep.mubr.f32.mxu0 %v1371
        %2340 = vmatmul.mubr.f32.gmra.mrb[0].mxu0 %v1370
        %v2341 = vpop.f32.mrb[0].mxu0
        %v2342 = vadd.f32 %v2271, %v2341
        %v2343 = vpop.f32.mrb[0].mxu0
        %v2344 = vadd.f32 %v2273, %v2343
        %2345 = vdwg.mxu0
        %2346 = vmatprep.subr.mxu0 %v1375
        %2347 = vmatpush1.msra.mxu0 %v1374
        %2348 = vmatprep.subr.mxu0 %v1387
        %2349 = vmatpush1.msra.mxu0 %v1386
        %2350 = vmatprep.subr.mxu0 %v1399
        %2351 = vmatpush1.msra.mxu0 %v1398
        %2352 = vmatprep.subr.mxu0 %v1411
        %2353 = vmatpush1.msra.mxu0 %v1410
        %2354 = vmatprep.subr.mxu0 %v1423
        %2355 = vmatpush1.msra.mxu0 %v1422
        %2356 = vmatprep.subr.mxu0 %v1435
        %2357 = vmatpush1.msra.mxu0 %v1434
        %2358 = vmatprep.subr.mxu0 %v1447
        %2359 = vmatpush1.msra.mxu0 %v1446
        %2360 = vmatprep.subr.mxu0 %v1459
        %2361 = vmatpush1.msra.mxu0 %v1458
        %2362 = vmatprep.subr.mxu0 %v1471
        %2363 = vmatpush1.msra.mxu0 %v1470
        %2364 = vmatprep.subr.mxu0 %v1483
        %2365 = vmatpush1.msra.mxu0 %v1482
        %2366 = vmatprep.subr.mxu0 %v1495
        %2367 = vmatpush1.msra.mxu0 %v1494
        %2368 = vmatprep.subr.mxu0 %v1507
        %2369 = vmatpush1.msra.mxu0 %v1506
        %2370 = vmatprep.subr.mxu0 %v1519
        %2371 = vmatpush1.msra.mxu0 %v1518
        %2372 = vmatprep.subr.mxu0 %v1531
        %2373 = vmatpush1.msra.mxu0 %v1530
        %2374 = vmatprep.subr.mxu0 %v1543
        %2375 = vmatpush1.msra.mxu0 %v1542
        %2376 = vmatprep.subr.mxu0 %v1555
        %2377 = vmatpush1.msra.mxu0 %v1554
        %2378 = vmatprep.subr.mxu0 %v1567
        %2379 = vmatpush1.msra.mxu0 %v1566
        %2380 = vmatprep.subr.mxu0 %v1579
        %2381 = vmatpush1.msra.mxu0 %v1578
        %2382 = vmatprep.subr.mxu0 %v1591
        %2383 = vmatpush1.msra.mxu0 %v1590
        %2384 = vmatprep.subr.mxu0 %v1603
        %2385 = vmatpush1.msra.mxu0 %v1602
        %2386 = vmatprep.subr.mxu0 %v1615
        %2387 = vmatpush1.msra.mxu0 %v1614
        %2388 = vmatprep.subr.mxu0 %v1627
        %2389 = vmatpush1.msra.mxu0 %v1626
        %2390 = vmatprep.subr.mxu0 %v1639
        %2391 = vmatpush1.msra.mxu0 %v1638
        %2392 = vmatprep.subr.mxu0 %v1651
        %2393 = vmatpush1.msra.mxu0 %v1650
        %2394 = vmatprep.subr.mxu0 %v1663
        %2395 = vmatpush1.msra.mxu0 %v1662
        %2396 = vmatprep.subr.mxu0 %v1675
        %2397 = vmatpush1.msra.mxu0 %v1674
        %2398 = vmatprep.subr.mxu0 %v1687
        %2399 = vmatpush1.msra.mxu0 %v1686
        %2400 = vmatprep.subr.mxu0 %v1699
        %2401 = vmatpush1.msra.mxu0 %v1698
        %2402 = vmatprep.subr.mxu0 %v1711
        %2403 = vmatpush1.msra.mxu0 %v1710
        %2404 = vmatprep.subr.mxu0 %v1723
        %2405 = vmatpush1.msra.mxu0 %v1722
        %2406 = vmatprep.subr.mxu0 %v1735
        %2407 = vmatpush1.msra.mxu0 %v1734
        %2408 = vmatprep.subr.mxu0 %v1747
        %2409 = vmatpush1.msra.mxu0 %v1746
        %2410 = vmatprep.mubr.f32.mxu0 %v1369
        %2411 = vmatmul.mubr.f32.gmra.mrb[0].mxu0 %v1368
        %v2412 = vpop.f32.mrb[0].mxu0
        %v2413 = vadd.f32 %v2155, %v2412
        %v2414 = vpop.f32.mrb[0].mxu0
        %v2415 = vadd.f32 %v2159, %v2414
        %2416 = vdwg.mxu0
        %2417 = vmatprep.subr.mxu0 %v1759
        %2418 = vmatpush1.msra.mxu0 %v1758
        %2419 = vmatprep.subr.mxu0 %v1771
        %2420 = vmatpush1.msra.mxu0 %v1770
        %2421 = vmatprep.subr.mxu0 %v1783
        %2422 = vmatpush1.msra.mxu0 %v1782
        %2423 = vmatprep.subr.mxu0 %v1795
        %2424 = vmatpush1.msra.mxu0 %v1794
        %2425 = vmatprep.subr.mxu0 %v1807
        %2426 = vmatpush1.msra.mxu0 %v1806
        %2427 = vmatprep.subr.mxu0 %v1819
        %2428 = vmatpush1.msra.mxu0 %v1818
        %2429 = vmatprep.subr.mxu0 %v1831
        %2430 = vmatpush1.msra.mxu0 %v1830
        %2431 = vmatprep.subr.mxu0 %v1843
        %2432 = vmatpush1.msra.mxu0 %v1842
        %2433 = vmatprep.subr.mxu0 %v1855
        %2434 = vmatpush1.msra.mxu0 %v1854
        %2435 = vmatprep.subr.mxu0 %v1867
        %2436 = vmatpush1.msra.mxu0 %v1866
        %2437 = vmatprep.subr.mxu0 %v1879
        %2438 = vmatpush1.msra.mxu0 %v1878
        %2439 = vmatprep.subr.mxu0 %v1891
        %2440 = vmatpush1.msra.mxu0 %v1890
        %2441 = vmatprep.subr.mxu0 %v1903
        %2442 = vmatpush1.msra.mxu0 %v1902
        %2443 = vmatprep.subr.mxu0 %v1915
        %2444 = vmatpush1.msra.mxu0 %v1914
        %2445 = vmatprep.subr.mxu0 %v1927
        %2446 = vmatpush1.msra.mxu0 %v1926
        %2447 = vmatprep.subr.mxu0 %v1939
        %2448 = vmatpush1.msra.mxu0 %v1938
        %2449 = vmatprep.subr.mxu0 %v1951
        %2450 = vmatpush1.msra.mxu0 %v1950
        %2451 = vmatprep.subr.mxu0 %v1963
        %2452 = vmatpush1.msra.mxu0 %v1962
        %2453 = vmatprep.subr.mxu0 %v1975
        %2454 = vmatpush1.msra.mxu0 %v1974
        %2455 = vmatprep.subr.mxu0 %v1987
        %2456 = vmatpush1.msra.mxu0 %v1986
        %2457 = vmatprep.subr.mxu0 %v1999
        %2458 = vmatpush1.msra.mxu0 %v1998
        %2459 = vmatprep.subr.mxu0 %v2011
        %2460 = vmatpush1.msra.mxu0 %v2010
        %2461 = vmatprep.subr.mxu0 %v2023
        %2462 = vmatpush1.msra.mxu0 %v2022
        %2463 = vmatprep.subr.mxu0 %v2035
        %2464 = vmatpush1.msra.mxu0 %v2034
        %2465 = vmatprep.subr.mxu0 %v2047
        %2466 = vmatpush1.msra.mxu0 %v2046
        %2467 = vmatprep.subr.mxu0 %v2059
        %2468 = vmatpush1.msra.mxu0 %v2058
        %2469 = vmatprep.subr.mxu0 %v2071
        %2470 = vmatpush1.msra.mxu0 %v2070
        %2471 = vmatprep.subr.mxu0 %v2083
        %2472 = vmatpush1.msra.mxu0 %v2082
        %2473 = vmatprep.subr.mxu0 %v2095
        %2474 = vmatpush1.msra.mxu0 %v2094
        %2475 = vmatprep.subr.mxu0 %v2107
        %2476 = vmatpush1.msra.mxu0 %v2106
        %2477 = vmatprep.subr.mxu0 %v2119
        %2478 = vmatpush1.msra.mxu0 %v2118
        %2479 = vmatprep.subr.mxu0 %v2131
        %2480 = vmatpush1.msra.mxu0 %v2130
        %2481 = vmatprep.mubr.f32.mxu0 %v1371
        %2482 = vmatmul.mubr.f32.gmra.mrb[0].mxu0 %v1370
        %v2483 = vpop.f32.mrb[0].mxu0
        %v2484 = vadd.f32 %v2413, %v2483
        %v2485 = vpop.f32.mrb[0].mxu0
        %v2486 = vadd.f32 %v2415, %v2485
        %2487 = vdwg.mxu0
        %2488 = vmatprep.subr.mxu0 %v1377
        %2489 = vmatpush1.msra.mxu0 %v1376
        %2490 = vmatprep.subr.mxu0 %v1389
        %2491 = vmatpush1.msra.mxu0 %v1388
        %2492 = vmatprep.subr.mxu0 %v1401
        %2493 = vmatpush1.msra.mxu0 %v1400
        %2494 = vmatprep.subr.mxu0 %v1413
        %2495 = vmatpush1.msra.mxu0 %v1412
        %2496 = vmatprep.subr.mxu0 %v1425
        %2497 = vmatpush1.msra.mxu0 %v1424
        %2498 = vmatprep.subr.mxu0 %v1437
        %2499 = vmatpush1.msra.mxu0 %v1436
        %2500 = vmatprep.subr.mxu0 %v1449
        %2501 = vmatpush1.msra.mxu0 %v1448
        %2502 = vmatprep.subr.mxu0 %v1461
        %2503 = vmatpush1.msra.mxu0 %v1460
        %2504 = vmatprep.subr.mxu0 %v1473
        %2505 = vmatpush1.msra.mxu0 %v1472
        %2506 = vmatprep.subr.mxu0 %v1485
        %2507 = vmatpush1.msra.mxu0 %v1484
        %2508 = vmatprep.subr.mxu0 %v1497
        %2509 = vmatpush1.msra.mxu0 %v1496
        %2510 = vmatprep.subr.mxu0 %v1509
        %2511 = vmatpush1.msra.mxu0 %v1508
        %2512 = vmatprep.subr.mxu0 %v1521
        %2513 = vmatpush1.msra.mxu0 %v1520
        %2514 = vmatprep.subr.mxu0 %v1533
        %2515 = vmatpush1.msra.mxu0 %v1532
        %2516 = vmatprep.subr.mxu0 %v1545
        %2517 = vmatpush1.msra.mxu0 %v1544
        %2518 = vmatprep.subr.mxu0 %v1557
        %2519 = vmatpush1.msra.mxu0 %v1556
        %2520 = vmatprep.subr.mxu0 %v1569
        %2521 = vmatpush1.msra.mxu0 %v1568
        %2522 = vmatprep.subr.mxu0 %v1581
        %2523 = vmatpush1.msra.mxu0 %v1580
        %2524 = vmatprep.subr.mxu0 %v1593
        %2525 = vmatpush1.msra.mxu0 %v1592
        %2526 = vmatprep.subr.mxu0 %v1605
        %2527 = vmatpush1.msra.mxu0 %v1604
        %2528 = vmatprep.subr.mxu0 %v1617
        %2529 = vmatpush1.msra.mxu0 %v1616
        %2530 = vmatprep.subr.mxu0 %v1629
        %2531 = vmatpush1.msra.mxu0 %v1628
        %2532 = vmatprep.subr.mxu0 %v1641
        %2533 = vmatpush1.msra.mxu0 %v1640
        %2534 = vmatprep.subr.mxu0 %v1653
        %2535 = vmatpush1.msra.mxu0 %v1652
        %2536 = vmatprep.subr.mxu0 %v1665
        %2537 = vmatpush1.msra.mxu0 %v1664
        %2538 = vmatprep.subr.mxu0 %v1677
        %2539 = vmatpush1.msra.mxu0 %v1676
        %2540 = vmatprep.subr.mxu0 %v1689
        %2541 = vmatpush1.msra.mxu0 %v1688
        %2542 = vmatprep.subr.mxu0 %v1701
        %2543 = vmatpush1.msra.mxu0 %v1700
        %2544 = vmatprep.subr.mxu0 %v1713
        %2545 = vmatpush1.msra.mxu0 %v1712
        %2546 = vmatprep.subr.mxu0 %v1725
        %2547 = vmatpush1.msra.mxu0 %v1724
        %2548 = vmatprep.subr.mxu0 %v1737
        %2549 = vmatpush1.msra.mxu0 %v1736
        %2550 = vmatprep.subr.mxu0 %v1749
        %2551 = vmatpush1.msra.mxu0 %v1748
        %2552 = vmatprep.mubr.f32.mxu0 %v1369
        %2553 = vmatmul.mubr.f32.gmra.mrb[0].mxu0 %v1368
        %v2554 = vpop.f32.mrb[0].mxu0
        %v2555 = vadd.f32 %v2163, %v2554
        %v2556 = vpop.f32.mrb[0].mxu0
        %v2557 = vadd.f32 %v2167, %v2556
        %2558 = vdwg.mxu0
        %2559 = vmatprep.subr.mxu0 %v1761
        %2560 = vmatpush1.msra.mxu0 %v1760
        %2561 = vmatprep.subr.mxu0 %v1773
        %2562 = vmatpush1.msra.mxu0 %v1772
        %2563 = vmatprep.subr.mxu0 %v1785
        %2564 = vmatpush1.msra.mxu0 %v1784
        %2565 = vmatprep.subr.mxu0 %v1797
        %2566 = vmatpush1.msra.mxu0 %v1796
        %2567 = vmatprep.subr.mxu0 %v1809
        %2568 = vmatpush1.msra.mxu0 %v1808
        %2569 = vmatprep.subr.mxu0 %v1821
        %2570 = vmatpush1.msra.mxu0 %v1820
        %2571 = vmatprep.subr.mxu0 %v1833
        %2572 = vmatpush1.msra.mxu0 %v1832
        %2573 = vmatprep.subr.mxu0 %v1845
        %2574 = vmatpush1.msra.mxu0 %v1844
        %2575 = vmatprep.subr.mxu0 %v1857
        %2576 = vmatpush1.msra.mxu0 %v1856
        %2577 = vmatprep.subr.mxu0 %v1869
        %2578 = vmatpush1.msra.mxu0 %v1868
        %2579 = vmatprep.subr.mxu0 %v1881
        %2580 = vmatpush1.msra.mxu0 %v1880
        %2581 = vmatprep.subr.mxu0 %v1893
        %2582 = vmatpush1.msra.mxu0 %v1892
        %2583 = vmatprep.subr.mxu0 %v1905
        %2584 = vmatpush1.msra.mxu0 %v1904
        %2585 = vmatprep.subr.mxu0 %v1917
        %2586 = vmatpush1.msra.mxu0 %v1916
        %2587 = vmatprep.subr.mxu0 %v1929
        %2588 = vmatpush1.msra.mxu0 %v1928
        %2589 = vmatprep.subr.mxu0 %v1941
        %2590 = vmatpush1.msra.mxu0 %v1940
        %2591 = vmatprep.subr.mxu0 %v1953
        %2592 = vmatpush1.msra.mxu0 %v1952
        %2593 = vmatprep.subr.mxu0 %v1965
        %2594 = vmatpush1.msra.mxu0 %v1964
        %2595 = vmatprep.subr.mxu0 %v1977
        %2596 = vmatpush1.msra.mxu0 %v1976
        %2597 = vmatprep.subr.mxu0 %v1989
        %2598 = vmatpush1.msra.mxu0 %v1988
        %2599 = vmatprep.subr.mxu0 %v2001
        %2600 = vmatpush1.msra.mxu0 %v2000
        %2601 = vmatprep.subr.mxu0 %v2013
        %2602 = vmatpush1.msra.mxu0 %v2012
        %2603 = vmatprep.subr.mxu0 %v2025
        %2604 = vmatpush1.msra.mxu0 %v2024
        %2605 = vmatprep.subr.mxu0 %v2037
        %2606 = vmatpush1.msra.mxu0 %v2036
        %2607 = vmatprep.subr.mxu0 %v2049
        %2608 = vmatpush1.msra.mxu0 %v2048
        %2609 = vmatprep.subr.mxu0 %v2061
        %2610 = vmatpush1.msra.mxu0 %v2060
        %2611 = vmatprep.subr.mxu0 %v2073
        %2612 = vmatpush1.msra.mxu0 %v2072
        %2613 = vmatprep.subr.mxu0 %v2085
        %2614 = vmatpush1.msra.mxu0 %v2084
        %2615 = vmatprep.subr.mxu0 %v2097
        %2616 = vmatpush1.msra.mxu0 %v2096
        %2617 = vmatprep.subr.mxu0 %v2109
        %2618 = vmatpush1.msra.mxu0 %v2108
        %2619 = vmatprep.subr.mxu0 %v2121
        %2620 = vmatpush1.msra.mxu0 %v2120
        %2621 = vmatprep.subr.mxu0 %v2133
        %2622 = vmatpush1.msra.mxu0 %v2132
        %2623 = vmatprep.mubr.f32.mxu0 %v1371
        %2624 = vmatmul.mubr.f32.gmra.mrb[0].mxu0 %v1370
        %v2625 = vpop.f32.mrb[0].mxu0
        %v2626 = vadd.f32 %v2555, %v2625
        %v2627 = vpop.f32.mrb[0].mxu0
        %v2628 = vadd.f32 %v2557, %v2627
        %2629 = vdwg.mxu0
        %2630 = vmatprep.subr.mxu0 %v1379
        %2631 = vmatpush1.msra.mxu0 %v1378
        %2632 = vmatprep.subr.mxu0 %v1391
        %2633 = vmatpush1.msra.mxu0 %v1390
        %2634 = vmatprep.subr.mxu0 %v1403
        %2635 = vmatpush1.msra.mxu0 %v1402
        %2636 = vmatprep.subr.mxu0 %v1415
        %2637 = vmatpush1.msra.mxu0 %v1414
        %2638 = vmatprep.subr.mxu0 %v1427
        %2639 = vmatpush1.msra.mxu0 %v1426
        %2640 = vmatprep.subr.mxu0 %v1439
        %2641 = vmatpush1.msra.mxu0 %v1438
        %2642 = vmatprep.subr.mxu0 %v1451
        %2643 = vmatpush1.msra.mxu0 %v1450
        %2644 = vmatprep.subr.mxu0 %v1463
        %2645 = vmatpush1.msra.mxu0 %v1462
        %2646 = vmatprep.subr.mxu0 %v1475
        %2647 = vmatpush1.msra.mxu0 %v1474
        %2648 = vmatprep.subr.mxu0 %v1487
        %2649 = vmatpush1.msra.mxu0 %v1486
        %2650 = vmatprep.subr.mxu0 %v1499
        %2651 = vmatpush1.msra.mxu0 %v1498
        %2652 = vmatprep.subr.mxu0 %v1511
        %2653 = vmatpush1.msra.mxu0 %v1510
        %2654 = vmatprep.subr.mxu0 %v1523
        %2655 = vmatpush1.msra.mxu0 %v1522
        %2656 = vmatprep.subr.mxu0 %v1535
        %2657 = vmatpush1.msra.mxu0 %v1534
        %2658 = vmatprep.subr.mxu0 %v1547
        %2659 = vmatpush1.msra.mxu0 %v1546
        %2660 = vmatprep.subr.mxu0 %v1559
        %2661 = vmatpush1.msra.mxu0 %v1558
        %2662 = vmatprep.subr.mxu0 %v1571
        %2663 = vmatpush1.msra.mxu0 %v1570
        %2664 = vmatprep.subr.mxu0 %v1583
        %2665 = vmatpush1.msra.mxu0 %v1582
        %2666 = vmatprep.subr.mxu0 %v1595
        %2667 = vmatpush1.msra.mxu0 %v1594
        %2668 = vmatprep.subr.mxu0 %v1607
        %2669 = vmatpush1.msra.mxu0 %v1606
        %2670 = vmatprep.subr.mxu0 %v1619
        %2671 = vmatpush1.msra.mxu0 %v1618
        %2672 = vmatprep.subr.mxu0 %v1631
        %2673 = vmatpush1.msra.mxu0 %v1630
        %2674 = vmatprep.subr.mxu0 %v1643
        %2675 = vmatpush1.msra.mxu0 %v1642
        %2676 = vmatprep.subr.mxu0 %v1655
        %2677 = vmatpush1.msra.mxu0 %v1654
        %2678 = vmatprep.subr.mxu0 %v1667
        %2679 = vmatpush1.msra.mxu0 %v1666
        %2680 = vmatprep.subr.mxu0 %v1679
        %2681 = vmatpush1.msra.mxu0 %v1678
        %2682 = vmatprep.subr.mxu0 %v1691
        %2683 = vmatpush1.msra.mxu0 %v1690
        %2684 = vmatprep.subr.mxu0 %v1703
        %2685 = vmatpush1.msra.mxu0 %v1702
        %2686 = vmatprep.subr.mxu0 %v1715
        %2687 = vmatpush1.msra.mxu0 %v1714
        %2688 = vmatprep.subr.mxu0 %v1727
        %2689 = vmatpush1.msra.mxu0 %v1726
        %2690 = vmatprep.subr.mxu0 %v1739
        %2691 = vmatpush1.msra.mxu0 %v1738
        %2692 = vmatprep.subr.mxu0 %v1751
        %2693 = vmatpush1.msra.mxu0 %v1750
        %2694 = vmatprep.mubr.f32.mxu0 %v1369
        %2695 = vmatmul.mubr.f32.gmra.mrb[0].mxu0 %v1368
        %v2696 = vpop.f32.mrb[0].mxu0
        %v2697 = vadd.f32 %v2171, %v2696
        %v2698 = vpop.f32.mrb[0].mxu0
        %v2699 = vadd.f32 %v2175, %v2698
        %2700 = vdwg.mxu0
        %2701 = vmatprep.subr.mxu0 %v1763
        %2702 = vmatpush1.msra.mxu0 %v1762
        %2703 = vmatprep.subr.mxu0 %v1775
        %2704 = vmatpush1.msra.mxu0 %v1774
        %2705 = vmatprep.subr.mxu0 %v1787
        %2706 = vmatpush1.msra.mxu0 %v1786
        %2707 = vmatprep.subr.mxu0 %v1799
        %2708 = vmatpush1.msra.mxu0 %v1798
        %2709 = vmatprep.subr.mxu0 %v1811
        %2710 = vmatpush1.msra.mxu0 %v1810
        %2711 = vmatprep.subr.mxu0 %v1823
        %2712 = vmatpush1.msra.mxu0 %v1822
        %2713 = vmatprep.subr.mxu0 %v1835
        %2714 = vmatpush1.msra.mxu0 %v1834
        %2715 = vmatprep.subr.mxu0 %v1847
        %2716 = vmatpush1.msra.mxu0 %v1846
        %2717 = vmatprep.subr.mxu0 %v1859
        %2718 = vmatpush1.msra.mxu0 %v1858
        %2719 = vmatprep.subr.mxu0 %v1871
        %2720 = vmatpush1.msra.mxu0 %v1870
        %2721 = vmatprep.subr.mxu0 %v1883
        %2722 = vmatpush1.msra.mxu0 %v1882
        %2723 = vmatprep.subr.mxu0 %v1895
        %2724 = vmatpush1.msra.mxu0 %v1894
        %2725 = vmatprep.subr.mxu0 %v1907
        %2726 = vmatpush1.msra.mxu0 %v1906
        %2727 = vmatprep.subr.mxu0 %v1919
        %2728 = vmatpush1.msra.mxu0 %v1918
        %2729 = vmatprep.subr.mxu0 %v1931
        %2730 = vmatpush1.msra.mxu0 %v1930
        %2731 = vmatprep.subr.mxu0 %v1943
        %2732 = vmatpush1.msra.mxu0 %v1942
        %2733 = vmatprep.subr.mxu0 %v1955
        %2734 = vmatpush1.msra.mxu0 %v1954
        %2735 = vmatprep.subr.mxu0 %v1967
        %2736 = vmatpush1.msra.mxu0 %v1966
        %2737 = vmatprep.subr.mxu0 %v1979
        %2738 = vmatpush1.msra.mxu0 %v1978
        %2739 = vmatprep.subr.mxu0 %v1991
        %2740 = vmatpush1.msra.mxu0 %v1990
        %2741 = vmatprep.subr.mxu0 %v2003
        %2742 = vmatpush1.msra.mxu0 %v2002
        %2743 = vmatprep.subr.mxu0 %v2015
        %2744 = vmatpush1.msra.mxu0 %v2014
        %2745 = vmatprep.subr.mxu0 %v2027
        %2746 = vmatpush1.msra.mxu0 %v2026
        %2747 = vmatprep.subr.mxu0 %v2039
        %2748 = vmatpush1.msra.mxu0 %v2038
        %2749 = vmatprep.subr.mxu0 %v2051
        %2750 = vmatpush1.msra.mxu0 %v2050
        %2751 = vmatprep.subr.mxu0 %v2063
        %2752 = vmatpush1.msra.mxu0 %v2062
        %2753 = vmatprep.subr.mxu0 %v2075
        %2754 = vmatpush1.msra.mxu0 %v2074
        %2755 = vmatprep.subr.mxu0 %v2087
        %2756 = vmatpush1.msra.mxu0 %v2086
        %2757 = vmatprep.subr.mxu0 %v2099
        %2758 = vmatpush1.msra.mxu0 %v2098
        %2759 = vmatprep.subr.mxu0 %v2111
        %2760 = vmatpush1.msra.mxu0 %v2110
        %2761 = vmatprep.subr.mxu0 %v2123
        %2762 = vmatpush1.msra.mxu0 %v2122
        %2763 = vmatprep.subr.mxu0 %v2135
        %2764 = vmatpush1.msra.mxu0 %v2134
        %2765 = vmatprep.mubr.f32.mxu0 %v1371
        %2766 = vmatmul.mubr.f32.gmra.mrb[0].mxu0 %v1370
        %v2767 = vpop.f32.mrb[0].mxu0
        %v2768 = vadd.f32 %v2697, %v2767
        %v2769 = vpop.f32.mrb[0].mxu0
        %v2770 = vadd.f32 %v2699, %v2769
        %2771 = vdwg.mxu0
        %2772 = vmatprep.subr.mxu0 %v1381
        %2773 = vmatpush1.msra.mxu0 %v1380
        %2774 = vmatprep.subr.mxu0 %v1393
        %2775 = vmatpush1.msra.mxu0 %v1392
        %2776 = vmatprep.subr.mxu0 %v1405
        %2777 = vmatpush1.msra.mxu0 %v1404
        %2778 = vmatprep.subr.mxu0 %v1417
        %2779 = vmatpush1.msra.mxu0 %v1416
        %2780 = vmatprep.subr.mxu0 %v1429
        %2781 = vmatpush1.msra.mxu0 %v1428
        %2782 = vmatprep.subr.mxu0 %v1441
        %2783 = vmatpush1.msra.mxu0 %v1440
        %2784 = vmatprep.subr.mxu0 %v1453
        %2785 = vmatpush1.msra.mxu0 %v1452
        %2786 = vmatprep.subr.mxu0 %v1465
        %2787 = vmatpush1.msra.mxu0 %v1464
        %2788 = vmatprep.subr.mxu0 %v1477
        %2789 = vmatpush1.msra.mxu0 %v1476
        %2790 = vmatprep.subr.mxu0 %v1489
        %2791 = vmatpush1.msra.mxu0 %v1488
        %2792 = vmatprep.subr.mxu0 %v1501
        %2793 = vmatpush1.msra.mxu0 %v1500
        %2794 = vmatprep.subr.mxu0 %v1513
        %2795 = vmatpush1.msra.mxu0 %v1512
        %2796 = vmatprep.subr.mxu0 %v1525
        %2797 = vmatpush1.msra.mxu0 %v1524
        %2798 = vmatprep.subr.mxu0 %v1537
        %2799 = vmatpush1.msra.mxu0 %v1536
        %2800 = vmatprep.subr.mxu0 %v1549
        %2801 = vmatpush1.msra.mxu0 %v1548
        %2802 = vmatprep.subr.mxu0 %v1561
        %2803 = vmatpush1.msra.mxu0 %v1560
        %2804 = vmatprep.subr.mxu0 %v1573
        %2805 = vmatpush1.msra.mxu0 %v1572
        %2806 = vmatprep.subr.mxu0 %v1585
        %2807 = vmatpush1.msra.mxu0 %v1584
        %2808 = vmatprep.subr.mxu0 %v1597
        %2809 = vmatpush1.msra.mxu0 %v1596
        %2810 = vmatprep.subr.mxu0 %v1609
        %2811 = vmatpush1.msra.mxu0 %v1608
        %2812 = vmatprep.subr.mxu0 %v1621
        %2813 = vmatpush1.msra.mxu0 %v1620
        %2814 = vmatprep.subr.mxu0 %v1633
        %2815 = vmatpush1.msra.mxu0 %v1632
        %2816 = vmatprep.subr.mxu0 %v1645
        %2817 = vmatpush1.msra.mxu0 %v1644
        %2818 = vmatprep.subr.mxu0 %v1657
        %2819 = vmatpush1.msra.mxu0 %v1656
        %2820 = vmatprep.subr.mxu0 %v1669
        %2821 = vmatpush1.msra.mxu0 %v1668
        %2822 = vmatprep.subr.mxu0 %v1681
        %2823 = vmatpush1.msra.mxu0 %v1680
        %2824 = vmatprep.subr.mxu0 %v1693
        %2825 = vmatpush1.msra.mxu0 %v1692
        %2826 = vmatprep.subr.mxu0 %v1705
        %2827 = vmatpush1.msra.mxu0 %v1704
        %2828 = vmatprep.subr.mxu0 %v1717
        %2829 = vmatpush1.msra.mxu0 %v1716
        %2830 = vmatprep.subr.mxu0 %v1729
        %2831 = vmatpush1.msra.mxu0 %v1728
        %2832 = vmatprep.subr.mxu0 %v1741
        %2833 = vmatpush1.msra.mxu0 %v1740
        %2834 = vmatprep.subr.mxu0 %v1753
        %2835 = vmatpush1.msra.mxu0 %v1752
        %2836 = vmatprep.mubr.f32.mxu0 %v1369
        %2837 = vmatmul.mubr.f32.gmra.mrb[0].mxu0 %v1368
        %v2838 = vpop.f32.mrb[0].mxu0
        %v2839 = vadd.f32 %v2179, %v2838
        %v2840 = vpop.f32.mrb[0].mxu0
        %v2841 = vadd.f32 %v2183, %v2840
        %2842 = vdwg.mxu0
        %2843 = vmatprep.subr.mxu0 %v1765
        %2844 = vmatpush1.msra.mxu0 %v1764
        %2845 = vmatprep.subr.mxu0 %v1777
        %2846 = vmatpush1.msra.mxu0 %v1776
        %2847 = vmatprep.subr.mxu0 %v1789
        %2848 = vmatpush1.msra.mxu0 %v1788
        %2849 = vmatprep.subr.mxu0 %v1801
        %2850 = vmatpush1.msra.mxu0 %v1800
        %2851 = vmatprep.subr.mxu0 %v1813
        %2852 = vmatpush1.msra.mxu0 %v1812
        %2853 = vmatprep.subr.mxu0 %v1825
        %2854 = vmatpush1.msra.mxu0 %v1824
        %2855 = vmatprep.subr.mxu0 %v1837
        %2856 = vmatpush1.msra.mxu0 %v1836
        %2857 = vmatprep.subr.mxu0 %v1849
        %2858 = vmatpush1.msra.mxu0 %v1848
        %2859 = vmatprep.subr.mxu0 %v1861
        %2860 = vmatpush1.msra.mxu0 %v1860
        %2861 = vmatprep.subr.mxu0 %v1873
        %2862 = vmatpush1.msra.mxu0 %v1872
        %2863 = vmatprep.subr.mxu0 %v1885
        %2864 = vmatpush1.msra.mxu0 %v1884
        %2865 = vmatprep.subr.mxu0 %v1897
        %2866 = vmatpush1.msra.mxu0 %v1896
        %2867 = vmatprep.subr.mxu0 %v1909
        %2868 = vmatpush1.msra.mxu0 %v1908
        %2869 = vmatprep.subr.mxu0 %v1921
        %2870 = vmatpush1.msra.mxu0 %v1920
        %2871 = vmatprep.subr.mxu0 %v1933
        %2872 = vmatpush1.msra.mxu0 %v1932
        %2873 = vmatprep.subr.mxu0 %v1945
        %2874 = vmatpush1.msra.mxu0 %v1944
        %2875 = vmatprep.subr.mxu0 %v1957
        %2876 = vmatpush1.msra.mxu0 %v1956
        %2877 = vmatprep.subr.mxu0 %v1969
        %2878 = vmatpush1.msra.mxu0 %v1968
        %2879 = vmatprep.subr.mxu0 %v1981
        %2880 = vmatpush1.msra.mxu0 %v1980
        %2881 = vmatprep.subr.mxu0 %v1993
        %2882 = vmatpush1.msra.mxu0 %v1992
        %2883 = vmatprep.subr.mxu0 %v2005
        %2884 = vmatpush1.msra.mxu0 %v2004
        %2885 = vmatprep.subr.mxu0 %v2017
        %2886 = vmatpush1.msra.mxu0 %v2016
        %2887 = vmatprep.subr.mxu0 %v2029
        %2888 = vmatpush1.msra.mxu0 %v2028
        %2889 = vmatprep.subr.mxu0 %v2041
        %2890 = vmatpush1.msra.mxu0 %v2040
        %2891 = vmatprep.subr.mxu0 %v2053
        %2892 = vmatpush1.msra.mxu0 %v2052
        %2893 = vmatprep.subr.mxu0 %v2065
        %2894 = vmatpush1.msra.mxu0 %v2064
        %2895 = vmatprep.subr.mxu0 %v2077
        %2896 = vmatpush1.msra.mxu0 %v2076
        %2897 = vmatprep.subr.mxu0 %v2089
        %2898 = vmatpush1.msra.mxu0 %v2088
        %2899 = vmatprep.subr.mxu0 %v2101
        %2900 = vmatpush1.msra.mxu0 %v2100
        %2901 = vmatprep.subr.mxu0 %v2113
        %2902 = vmatpush1.msra.mxu0 %v2112
        %2903 = vmatprep.subr.mxu0 %v2125
        %2904 = vmatpush1.msra.mxu0 %v2124
        %2905 = vmatprep.subr.mxu0 %v2137
        %2906 = vmatpush1.msra.mxu0 %v2136
        %2907 = vmatprep.mubr.f32.mxu0 %v1371
        %2908 = vmatmul.mubr.f32.gmra.mrb[0].mxu0 %v1370
        %v2909 = vpop.f32.mrb[0].mxu0
        %v2910 = vadd.f32 %v2839, %v2909
        %v2911 = vpop.f32.mrb[0].mxu0
        %v2912 = vadd.f32 %v2841, %v2911
        %2913 = vdwg.mxu0
        %2914 = vmatprep.subr.mxu0 %v1383
        %2915 = vmatpush1.msra.mxu0 %v1382
        %2916 = vmatprep.subr.mxu0 %v1395
        %2917 = vmatpush1.msra.mxu0 %v1394
        %2918 = vmatprep.subr.mxu0 %v1407
        %2919 = vmatpush1.msra.mxu0 %v1406
        %2920 = vmatprep.subr.mxu0 %v1419
        %2921 = vmatpush1.msra.mxu0 %v1418
        %2922 = vmatprep.subr.mxu0 %v1431
        %2923 = vmatpush1.msra.mxu0 %v1430
        %2924 = vmatprep.subr.mxu0 %v1443
        %2925 = vmatpush1.msra.mxu0 %v1442
        %2926 = vmatprep.subr.mxu0 %v1455
        %2927 = vmatpush1.msra.mxu0 %v1454
        %2928 = vmatprep.subr.mxu0 %v1467
        %2929 = vmatpush1.msra.mxu0 %v1466
        %2930 = vmatprep.subr.mxu0 %v1479
        %2931 = vmatpush1.msra.mxu0 %v1478
        %2932 = vmatprep.subr.mxu0 %v1491
        %2933 = vmatpush1.msra.mxu0 %v1490
        %2934 = vmatprep.subr.mxu0 %v1503
        %2935 = vmatpush1.msra.mxu0 %v1502
        %2936 = vmatprep.subr.mxu0 %v1515
        %2937 = vmatpush1.msra.mxu0 %v1514
        %2938 = vmatprep.subr.mxu0 %v1527
        %2939 = vmatpush1.msra.mxu0 %v1526
        %2940 = vmatprep.subr.mxu0 %v1539
        %2941 = vmatpush1.msra.mxu0 %v1538
        %2942 = vmatprep.subr.mxu0 %v1551
        %2943 = vmatpush1.msra.mxu0 %v1550
        %2944 = vmatprep.subr.mxu0 %v1563
        %2945 = vmatpush1.msra.mxu0 %v1562
        %2946 = vmatprep.subr.mxu0 %v1575
        %2947 = vmatpush1.msra.mxu0 %v1574
        %2948 = vmatprep.subr.mxu0 %v1587
        %2949 = vmatpush1.msra.mxu0 %v1586
        %2950 = vmatprep.subr.mxu0 %v1599
        %2951 = vmatpush1.msra.mxu0 %v1598
        %2952 = vmatprep.subr.mxu0 %v1611
        %2953 = vmatpush1.msra.mxu0 %v1610
        %2954 = vmatprep.subr.mxu0 %v1623
        %2955 = vmatpush1.msra.mxu0 %v1622
        %2956 = vmatprep.subr.mxu0 %v1635
        %2957 = vmatpush1.msra.mxu0 %v1634
        %2958 = vmatprep.subr.mxu0 %v1647
        %2959 = vmatpush1.msra.mxu0 %v1646
        %2960 = vmatprep.subr.mxu0 %v1659
        %2961 = vmatpush1.msra.mxu0 %v1658
        %2962 = vmatprep.subr.mxu0 %v1671
        %2963 = vmatpush1.msra.mxu0 %v1670
        %2964 = vmatprep.subr.mxu0 %v1683
        %2965 = vmatpush1.msra.mxu0 %v1682
        %2966 = vmatprep.subr.mxu0 %v1695
        %2967 = vmatpush1.msra.mxu0 %v1694
        %2968 = vmatprep.subr.mxu0 %v1707
        %2969 = vmatpush1.msra.mxu0 %v1706
        %2970 = vmatprep.subr.mxu0 %v1719
        %2971 = vmatpush1.msra.mxu0 %v1718
        %2972 = vmatprep.subr.mxu0 %v1731
        %2973 = vmatpush1.msra.mxu0 %v1730
        %2974 = vmatprep.subr.mxu0 %v1743
        %2975 = vmatpush1.msra.mxu0 %v1742
        %2976 = vmatprep.subr.mxu0 %v1755
        %2977 = vmatpush1.msra.mxu0 %v1754
        %2978 = vmatprep.mubr.f32.mxu0 %v1369
        %2979 = vmatmul.mubr.f32.gmra.mrb[0].mxu0 %v1368
        %v2980 = vpop.f32.mrb[0].mxu0
        %v2981 = vadd.f32 %v2187, %v2980
        %v2982 = vpop.f32.mrb[0].mxu0
        %v2983 = vadd.f32 %v2191, %v2982
        %2984 = vdwg.mxu0
        %2985 = vmatprep.subr.mxu0 %v1767
        %2986 = vmatpush1.msra.mxu0 %v1766
        %2987 = vmatprep.subr.mxu0 %v1779
        %2988 = vmatpush1.msra.mxu0 %v1778
        %2989 = vmatprep.subr.mxu0 %v1791
        %2990 = vmatpush1.msra.mxu0 %v1790
        %2991 = vmatprep.subr.mxu0 %v1803
        %2992 = vmatpush1.msra.mxu0 %v1802
        %2993 = vmatprep.subr.mxu0 %v1815
        %2994 = vmatpush1.msra.mxu0 %v1814
        %2995 = vmatprep.subr.mxu0 %v1827
        %2996 = vmatpush1.msra.mxu0 %v1826
        %2997 = vmatprep.subr.mxu0 %v1839
        %2998 = vmatpush1.msra.mxu0 %v1838
        %2999 = vmatprep.subr.mxu0 %v1851
        %3000 = vmatpush1.msra.mxu0 %v1850
        %3001 = vmatprep.subr.mxu0 %v1863
        %3002 = vmatpush1.msra.mxu0 %v1862
        %3003 = vmatprep.subr.mxu0 %v1875
        %3004 = vmatpush1.msra.mxu0 %v1874
        %3005 = vmatprep.subr.mxu0 %v1887
        %3006 = vmatpush1.msra.mxu0 %v1886
        %3007 = vmatprep.subr.mxu0 %v1899
        %3008 = vmatpush1.msra.mxu0 %v1898
        %3009 = vmatprep.subr.mxu0 %v1911
        %3010 = vmatpush1.msra.mxu0 %v1910
        %3011 = vmatprep.subr.mxu0 %v1923
        %3012 = vmatpush1.msra.mxu0 %v1922
        %3013 = vmatprep.subr.mxu0 %v1935
        %3014 = vmatpush1.msra.mxu0 %v1934
        %3015 = vmatprep.subr.mxu0 %v1947
        %3016 = vmatpush1.msra.mxu0 %v1946
        %3017 = vmatprep.subr.mxu0 %v1959
        %3018 = vmatpush1.msra.mxu0 %v1958
        %3019 = vmatprep.subr.mxu0 %v1971
        %3020 = vmatpush1.msra.mxu0 %v1970
        %3021 = vmatprep.subr.mxu0 %v1983
        %3022 = vmatpush1.msra.mxu0 %v1982
        %3023 = vmatprep.subr.mxu0 %v1995
        %3024 = vmatpush1.msra.mxu0 %v1994
        %3025 = vmatprep.subr.mxu0 %v2007
        %3026 = vmatpush1.msra.mxu0 %v2006
        %3027 = vmatprep.subr.mxu0 %v2019
        %3028 = vmatpush1.msra.mxu0 %v2018
        %3029 = vmatprep.subr.mxu0 %v2031
        %3030 = vmatpush1.msra.mxu0 %v2030
        %3031 = vmatprep.subr.mxu0 %v2043
        %3032 = vmatpush1.msra.mxu0 %v2042
        %3033 = vmatprep.subr.mxu0 %v2055
        %3034 = vmatpush1.msra.mxu0 %v2054
        %3035 = vmatprep.subr.mxu0 %v2067
        %3036 = vmatpush1.msra.mxu0 %v2066
        %3037 = vmatprep.subr.mxu0 %v2079
        %3038 = vmatpush1.msra.mxu0 %v2078
        %3039 = vmatprep.subr.mxu0 %v2091
        %3040 = vmatpush1.msra.mxu0 %v2090
        %3041 = vmatprep.subr.mxu0 %v2103
        %3042 = vmatpush1.msra.mxu0 %v2102
        %3043 = vmatprep.subr.mxu0 %v2115
        %3044 = vmatpush1.msra.mxu0 %v2114
        %3045 = vmatprep.subr.mxu0 %v2127
        %3046 = vmatpush1.msra.mxu0 %v2126
        %3047 = vmatprep.subr.mxu0 %v2139
        %3048 = vmatpush1.msra.mxu0 %v2138
        %3049 = vmatprep.mubr.f32.mxu0 %v1371
        %3050 = vmatmul.mubr.f32.gmra.mrb[0].mxu0 %v1370
        %v3051 = vpop.f32.mrb[0].mxu0
        %v3052 = vadd.f32 %v2981, %v3051
        %v3053 = vpop.f32.mrb[0].mxu0
        %v3054 = vadd.f32 %v2983, %v3053
        %3055 = vdwg.mxu0
        %vm3056 = vcmp.gt.f32.partialorder %v2342, 0.0
        %vm3057 = vcmp.gt.f32.partialorder %v2344, 0.0
        %vm3058 = vcmp.gt.f32.partialorder %v2484, 0.0
        %vm3059 = vcmp.gt.f32.partialorder %v2486, 0.0
        %vm3060 = vcmp.gt.f32.partialorder %v2626, 0.0
        %vm3061 = vcmp.gt.f32.partialorder %v2628, 0.0
        %vm3062 = vcmp.gt.f32.partialorder %v2768, 0.0
        %vm3063 = vcmp.gt.f32.partialorder %v2770, 0.0
        %vm3064 = vcmp.gt.f32.partialorder %v2910, 0.0
        %vm3065 = vcmp.gt.f32.partialorder %v2912, 0.0
        %vm3066 = vcmp.gt.f32.partialorder %v3052, 0.0
        %vm3067 = vcmp.gt.f32.partialorder %v3054, 0.0
        %v3068 = vmul.f32 %v2342, 0.01
        %v3069 = vmul.f32 %v2344, 0.01
        %v3070 = vmul.f32 %v2484, 0.01
        %v3071 = vmul.f32 %v2486, 0.01
        %v3072 = vmul.f32 %v2626, 0.01
        %v3073 = vmul.f32 %v2628, 0.01
        %v3074 = vmul.f32 %v2768, 0.01
        %v3075 = vmul.f32 %v2770, 0.01
        %v3076 = vmul.f32 %v2910, 0.01
        %v3077 = vmul.f32 %v2912, 0.01
        %v3078 = vmul.f32 %v3052, 0.01
        %v3079 = vmul.f32 %v3054, 0.01
        %v3080 = vsel %vm3056, %v2342, %v3068
        %v3081 = vsel %vm3057, %v2344, %v3069
        %v3082 = vsel %vm3058, %v2484, %v3070
        %v3083 = vsel %vm3059, %v2486, %v3071
        %v3084 = vsel %vm3060, %v2626, %v3072
        %v3085 = vsel %vm3061, %v2628, %v3073
        %v3086 = vsel %vm3062, %v2768, %v3074
        %v3087 = vsel %vm3063, %v2770, %v3075
        %v3088 = vsel %vm3064, %v2910, %v3076
        %v3089 = vsel %vm3065, %v2912, %v3077
        %v3090 = vsel %vm3066, %v3052, %v3078
        %v3091 = vsel %vm3067, %v3054, %v3079
        %v3092 = vld [vmem:[#allocation21] sm:$0xff]
        %v3093 = vld [vmem:[#allocation21 + $0x8] sm:$0xff]
        %v3094 = vld [vmem:[#allocation21 + $0x10] sm:$0xff]
        %v3095 = vld [vmem:[#allocation21 + $0x18] sm:$0xff]
        %v3096 = vld [vmem:[#allocation21 + $0x20] sm:$0xff]
        %v3097 = vld [vmem:[#allocation21 + $0x28] sm:$0xff]
        %v3098 = vld [vmem:[#allocation21 + $0x30] sm:$0xff]
        %v3099 = vld [vmem:[#allocation21 + $0x38] sm:$0xff]
        %v3100 = vld [vmem:[#allocation22] sm:$0xff]
        %v3101 = vlaneseq
        %v3102 = vshrl.u32 %v3101, 7
        %v3103 = vsub.s32 6, %v3102
        %v3104 = vrot.slane %v3092, %v3103
        %v3105 = vlaneseq
        %v3106 = vshrl.u32 %v3105, 7
        %v3107 = vsub.s32 6, %v3106
        %v3108 = vrot.slane %v3093, %v3107
        %v3109 = vlaneseq
        %v3110 = vshrl.u32 %v3109, 7
        %v3111 = vsub.s32 6, %v3110
        %v3112 = vrot.slane %v3094, %v3111
        %v3113 = vlaneseq
        %v3114 = vshrl.u32 %v3113, 7
        %v3115 = vsub.s32 6, %v3114
        %v3116 = vrot.slane %v3095, %v3115
        %v3117 = vmul.f32 %v3088, %v3104
        %v3118 = vmul.f32 %v3089, %v3108
        %v3119 = vmul.f32 %v3090, %v3112
        %v3120 = vmul.f32 %v3091, %v3116
        %v3121 = vadd.f32 %v3117, %v3118
        %v3122 = vadd.f32 %v3121, %v3119
        %v3123 = vadd.f32 %v3122, %v3120
        %3124 = vadd.xlane.f32.xlu0 %v3123
        %v3125 = vpop.xlane.xlu0 %3124
        %v3126 = vlaneseq
        %v3127 = vshrl.u32 %v3126, 7
        %v3128 = vsub.s32 2, %v3127
        %v3129 = vrot.slane %v3100, %v3128
        %v3130 = vadd.f32 %v3125, %v3129
        %v3131 = vlaneseq
        %v3132 = vshrl.u32 %v3131, 7
        %v3133 = vsub.s32 7, %v3132
        %v3134 = vrot.slane %v3092, %v3133
        %v3135 = vlaneseq
        %v3136 = vshrl.u32 %v3135, 7
        %v3137 = vsub.s32 7, %v3136
        %v3138 = vrot.slane %v3093, %v3137
        %v3139 = vlaneseq
        %v3140 = vshrl.u32 %v3139, 7
        %v3141 = vsub.s32 7, %v3140
        %v3142 = vrot.slane %v3094, %v3141
        %v3143 = vlaneseq
        %v3144 = vshrl.u32 %v3143, 7
        %v3145 = vsub.s32 7, %v3144
        %v3146 = vrot.slane %v3095, %v3145
        %v3147 = vmul.f32 %v3088, %v3134
        %v3148 = vmul.f32 %v3089, %v3138
        %v3149 = vmul.f32 %v3090, %v3142
        %v3150 = vmul.f32 %v3091, %v3146
        %v3151 = vadd.f32 %v3147, %v3148
        %v3152 = vadd.f32 %v3151, %v3149
        %v3153 = vadd.f32 %v3152, %v3150
        %3154 = vadd.xlane.f32.xlu0 %v3153
        %v3155 = vpop.xlane.xlu0 %3154
        %v3156 = vadd.f32 %v3155, %v3129
        %v3157 = vlaneseq
        %v3158 = vshrl.u32 %v3157, 7
        %v3159 = vsub.s32 0, %v3158
        %v3160 = vrot.slane %v3096, %v3159
        %v3161 = vlaneseq
        %v3162 = vshrl.u32 %v3161, 7
        %v3163 = vsub.s32 0, %v3162
        %v3164 = vrot.slane %v3097, %v3163
        %v3165 = vlaneseq
        %v3166 = vshrl.u32 %v3165, 7
        %v3167 = vsub.s32 0, %v3166
        %v3168 = vrot.slane %v3098, %v3167
        %v3169 = vlaneseq
        %v3170 = vshrl.u32 %v3169, 7
        %v3171 = vsub.s32 0, %v3170
        %v3172 = vrot.slane %v3099, %v3171
        %v3173 = vmul.f32 %v3088, %v3160
        %v3174 = vmul.f32 %v3089, %v3164
        %v3175 = vmul.f32 %v3090, %v3168
        %v3176 = vmul.f32 %v3091, %v3172
        %v3177 = vadd.f32 %v3173, %v3174
        %v3178 = vadd.f32 %v3177, %v3175
        %v3179 = vadd.f32 %v3178, %v3176
        %3180 = vadd.xlane.f32.xlu0 %v3179
        %v3181 = vpop.xlane.xlu0 %3180
        %v3182 = vadd.f32 %v3181, %v3129
        %3184 = vrot.lane.b32.xlu0 %v3156, 127
        %v3185 = vpop.permute.xlu0 %3184
        %v3187 = vmax.f32 %v3130, %v3185
        %3189 = vrot.lane.b32.xlu0 %v3182, 126
        %v3190 = vpop.permute.xlu0 %3189
        %v3192 = vmax.f32 %v3187, %v3190
        %v3193 = vlaneseq
        %v3194 = vshrl.u32 %v3193, 7
        %v3195 = vsub.s32 0, %v3194
        %v3196 = vrot.slane %v3092, %v3195
        %v3197 = vlaneseq
        %v3198 = vshrl.u32 %v3197, 7
        %v3199 = vsub.s32 0, %v3198
        %v3200 = vrot.slane %v3093, %v3199
        %v3201 = vlaneseq
        %v3202 = vshrl.u32 %v3201, 7
        %v3203 = vsub.s32 0, %v3202
        %v3204 = vrot.slane %v3094, %v3203
        %v3205 = vlaneseq
        %v3206 = vshrl.u32 %v3205, 7
        %v3207 = vsub.s32 0, %v3206
        %v3208 = vrot.slane %v3095, %v3207
        %v3209 = vmul.f32 %v3080, %v3196
        %v3210 = vmul.f32 %v3081, %v3200
        %v3211 = vmul.f32 %v3082, %v3204
        %v3212 = vmul.f32 %v3083, %v3208
        %v3213 = vadd.f32 %v3209, %v3210
        %v3214 = vadd.f32 %v3213, %v3211
        %v3215 = vadd.f32 %v3214, %v3212
        %3216 = vadd.xlane.f32.xlu0 %v3215
        %v3217 = vpop.xlane.xlu0 %3216
        %v3218 = vadd.f32 %v3217, %v3129
        %v3219 = vtanh.pop %v3218
        %v3220 = vmul.f32 %v3219, 0.2
        %v3221 = vadd.f32 %v3220, 0.5
        %v3222 = vlaneseq
        %v3223 = vshrl.u32 %v3222, 7
        %v3224 = vsub.s32 3, %v3223
        %v3225 = vrot.slane %v3092, %v3224
        %v3226 = vlaneseq
        %v3227 = vshrl.u32 %v3226, 7
        %v3228 = vsub.s32 3, %v3227
        %v3229 = vrot.slane %v3093, %v3228
        %v3230 = vlaneseq
        %v3231 = vshrl.u32 %v3230, 7
        %v3232 = vsub.s32 3, %v3231
        %v3233 = vrot.slane %v3094, %v3232
        %v3234 = vlaneseq
        %v3235 = vshrl.u32 %v3234, 7
        %v3236 = vsub.s32 3, %v3235
        %v3237 = vrot.slane %v3095, %v3236
        %v3238 = vmul.f32 %v3084, %v3225
        %v3239 = vmul.f32 %v3085, %v3229
        %v3240 = vmul.f32 %v3086, %v3233
        %v3241 = vmul.f32 %v3087, %v3237
        %v3242 = vadd.f32 %v3238, %v3239
        %v3243 = vadd.f32 %v3242, %v3240
        %v3244 = vadd.f32 %v3243, %v3241
        %3245 = vadd.xlane.f32.xlu0 %v3244
        %v3246 = vpop.xlane.xlu0 %3245
        %v3247 = vadd.f32 %v3246, %v3129
        %v3248 = vtanh.pop %v3247
        %v3249 = vmul.f32 %v3248, 25.0
        %v3250 = vadd.f32 %v3249, 45.0
        %v3251 = vsub.f32 %v3130, %v3192
        %v3252 = vmul.f32 %v3251, 1.442695
        %v3253 = vpow.pop %v3252
        %v3254 = vlaneseq
        %v3255 = vshrl.u32 %v3254, 7
        %v3256 = vsub.s32 1, %v3255
        %v3257 = vrot.slane %v3092, %v3256
        %v3258 = vlaneseq
        %v3259 = vshrl.u32 %v3258, 7
        %v3260 = vsub.s32 1, %v3259
        %v3261 = vrot.slane %v3093, %v3260
        %v3262 = vlaneseq
        %v3263 = vshrl.u32 %v3262, 7
        %v3264 = vsub.s32 1, %v3263
        %v3265 = vrot.slane %v3094, %v3264
        %v3266 = vlaneseq
        %v3267 = vshrl.u32 %v3266, 7
        %v3268 = vsub.s32 1, %v3267
        %v3269 = vrot.slane %v3095, %v3268
        %v3270 = vmul.f32 %v3080, %v3257
        %v3271 = vmul.f32 %v3081, %v3261
        %v3272 = vmul.f32 %v3082, %v3265
        %v3273 = vmul.f32 %v3083, %v3269
        %v3274 = vadd.f32 %v3270, %v3271
        %v3275 = vadd.f32 %v3274, %v3272
        %v3276 = vadd.f32 %v3275, %v3273
        %3277 = vadd.xlane.f32.xlu0 %v3276
        %v3278 = vpop.xlane.xlu0 %3277
        %v3279 = vadd.f32 %v3278, %v3129
        %v3280 = vtanh.pop %v3279
        %v3281 = vmul.f32 %v3280, 0.5
        %v3282 = vadd.f32 %v3281, 1.2
        %v3283 = vlaneseq
        %v3284 = vshrl.u32 %v3283, 7
        %v3285 = vsub.s32 4, %v3284
        %v3286 = vrot.slane %v3092, %v3285
        %v3287 = vlaneseq
        %v3288 = vshrl.u32 %v3287, 7
        %v3289 = vsub.s32 4, %v3288
        %v3290 = vrot.slane %v3093, %v3289
        %v3291 = vlaneseq
        %v3292 = vshrl.u32 %v3291, 7
        %v3293 = vsub.s32 4, %v3292
        %v3294 = vrot.slane %v3094, %v3293
        %v3295 = vlaneseq
        %v3296 = vshrl.u32 %v3295, 7
        %v3297 = vsub.s32 4, %v3296
        %v3298 = vrot.slane %v3095, %v3297
        %v3299 = vmul.f32 %v3084, %v3286
        %v3300 = vmul.f32 %v3085, %v3290
        %v3301 = vmul.f32 %v3086, %v3294
        %v3302 = vmul.f32 %v3087, %v3298
        %v3303 = vadd.f32 %v3299, %v3300
        %v3304 = vadd.f32 %v3303, %v3301
        %v3305 = vadd.f32 %v3304, %v3302
        %3306 = vadd.xlane.f32.xlu0 %v3305
        %v3307 = vpop.xlane.xlu0 %3306
        %v3308 = vadd.f32 %v3307, %v3129
        %v3309 = vtanh.pop %v3308
        %v3310 = vmul.f32 %v3309, 30.0
        %v3311 = vadd.f32 %v3310, 70.0
        %3313 = vrot.lane.b32.xlu0 %v3192, 1
        %v3314 = vpop.permute.xlu0 %3313
        %v3316 = vsub.f32 %v3156, %v3314
        %v3317 = vmul.f32 %v3316, 1.442695
        %v3318 = vpow.pop %v3317
        %v3319 = vlaneseq
        %v3320 = vshrl.u32 %v3319, 7
        %v3321 = vsub.s32 2, %v3320
        %v3322 = vrot.slane %v3092, %v3321
        %v3323 = vlaneseq
        %v3324 = vshrl.u32 %v3323, 7
        %v3325 = vsub.s32 2, %v3324
        %v3326 = vrot.slane %v3093, %v3325
        %v3327 = vlaneseq
        %v3328 = vshrl.u32 %v3327, 7
        %v3329 = vsub.s32 2, %v3328
        %v3330 = vrot.slane %v3094, %v3329
        %v3331 = vlaneseq
        %v3332 = vshrl.u32 %v3331, 7
        %v3333 = vsub.s32 2, %v3332
        %v3334 = vrot.slane %v3095, %v3333
        %v3335 = vmul.f32 %v3080, %v3322
        %v3336 = vmul.f32 %v3081, %v3326
        %v3337 = vmul.f32 %v3082, %v3330
        %v3338 = vmul.f32 %v3083, %v3334
        %v3339 = vadd.f32 %v3335, %v3336
        %v3340 = vadd.f32 %v3339, %v3337
        %v3341 = vadd.f32 %v3340, %v3338
        %3342 = vadd.xlane.f32.xlu0 %v3341
        %v3343 = vpop.xlane.xlu0 %3342
        %v3344 = vadd.f32 %v3343, %v3129
        %v3345 = vtanh.pop %v3344
        %v3346 = vmul.f32 %v3345, 0.15
        %v3347 = vadd.f32 %v3346, 2.85
        %v3348 = vlaneseq
        %v3349 = vshrl.u32 %v3348, 7
        %v3350 = vsub.s32 5, %v3349
        %v3351 = vrot.slane %v3092, %v3350
        %v3352 = vlaneseq
        %v3353 = vshrl.u32 %v3352, 7
        %v3354 = vsub.s32 5, %v3353
        %v3355 = vrot.slane %v3093, %v3354
        %v3356 = vlaneseq
        %v3357 = vshrl.u32 %v3356, 7
        %v3358 = vsub.s32 5, %v3357
        %v3359 = vrot.slane %v3094, %v3358
        %v3360 = vlaneseq
        %v3361 = vshrl.u32 %v3360, 7
        %v3362 = vsub.s32 5, %v3361
        %v3363 = vrot.slane %v3095, %v3362
        %v3364 = vmul.f32 %v3084, %v3351
        %v3365 = vmul.f32 %v3085, %v3355
        %v3366 = vmul.f32 %v3086, %v3359
        %v3367 = vmul.f32 %v3087, %v3363
        %v3368 = vadd.f32 %v3364, %v3365
        %v3369 = vadd.f32 %v3368, %v3366
        %v3370 = vadd.f32 %v3369, %v3367
        %3371 = vadd.xlane.f32.xlu0 %v3370
        %v3372 = vpop.xlane.xlu0 %3371
        %v3373 = vadd.f32 %v3372, %v3129
        %v3374 = vtanh.pop %v3373
        %v3375 = vmul.f32 %v3374, 250.0
        %v3376 = vadd.f32 %v3375, 750.0
        %3377 = vrot.lane.b32.xlu0 %v3192, 2
        %v3378 = vpop.permute.xlu0 %3377
        %v3380 = vsub.f32 %v3182, %v3378
        %v3381 = vmul.f32 %v3380, 1.442695
        %v3382 = vpow.pop %v3381
        %3384 = vrot.lane.b32.xlu0 %v3318, 127
        %v3385 = vpop.permute.xlu0 %3384
        %v3387 = vadd.f32 %v3253, %v3385
        %3389 = vrot.lane.b32.xlu0 %v3382, 126
        %v3390 = vpop.permute.xlu0 %3389
        %v3392 = vadd.f32 %v3387, %v3390
        %v3393 = vrcp.pop %v3392
        %v3394 = vmul.f32 %v3253, %v3393
        %3396 = vrot.lane.b32.xlu0 %v3392, 1
        %v3397 = vpop.permute.xlu0 %3396
        %v3399 = vrcp.pop %v3397
        %v3400 = vmul.f32 %v3318, %v3399
        %3401 = vrot.lane.b32.xlu0 %v3392, 2
        %v3402 = vpop.permute.xlu0 %3401
        %v3404 = vrcp.pop %v3402
        %v3405 = vmul.f32 %v3382, %v3404
        %v3406 = vrcp.pop %v3250
        %v3407 = vmul.f32 1.0, %v3406
        %v3408 = vlaneseq
        %v3409 = vshrl.u32 %v3408, 7
        %v3410 = vsub.s32 0, %v3409
        %v3411 = vrot.slane %v3100, %v3410
        %3413 = vset.pattern.permute.xlu0 0
        %3414 = vperm.xlu0 %3413, %v3221
        %v3415 = vpop.permute.xlu0 %3414
        %v3417 = vmul.f32 %v3411, %v3415
        %v3418 = vlaneseq
        %v3419 = vshrl.u32 %v3418, 7
        %v3420 = vsub.s32 1, %v3419
        %v3421 = vrot.slane %v3100, %v3420
        %3423 = vset.pattern.permute.xlu0 3
        %3424 = vperm.xlu0 %3423, %v3407
        %v3425 = vpop.permute.xlu0 %3424
        %v3427 = vmul.f32 %v3421, %v3425
        %v3428 = vadd.f32 %v3417, %v3427
        %v3429 = vmul.f32 %v3428, 1.442695
        %v3430 = vpow.pop %v3429
        %3432 = vset.pattern.permute.xlu0 6
        %3433 = vperm.xlu0 %3432, %v3394
        %v3434 = vpop.permute.xlu0 %3433
        %v3436 = vmul.f32 %v3434, %v3430
        %v3437 = vrcp.pop %v3311
        %v3438 = vmul.f32 1.0, %v3437
        %3440 = vset.pattern.permute.xlu0 1
        %3441 = vperm.xlu0 %3440, %v3282
        %v3442 = vpop.permute.xlu0 %3441
        %v3444 = vmul.f32 %v3411, %v3442
        %3446 = vset.pattern.permute.xlu0 4
        %3447 = vperm.xlu0 %3446, %v3438
        %v3448 = vpop.permute.xlu0 %3447
        %v3450 = vmul.f32 %v3421, %v3448
        %v3451 = vadd.f32 %v3444, %v3450
        %v3452 = vmul.f32 %v3451, 1.442695
        %v3453 = vpow.pop %v3452
        %3455 = vset.pattern.permute.xlu0 7
        %3456 = vperm.xlu0 %3455, %v3400
        %v3457 = vpop.permute.xlu0 %3456
        %v3459 = vmul.f32 %v3457, %v3453
        %v3460 = vadd.f32 %v3436, %v3459
        %v3461 = vrcp.pop %v3376
        %v3462 = vmul.f32 1.0, %v3461
        %3464 = vset.pattern.permute.xlu0 2
        %3465 = vperm.xlu0 %3464, %v3347
        %v3466 = vpop.permute.xlu0 %3465
        %v3468 = vmul.f32 %v3411, %v3466
        %3470 = vset.pattern.permute.xlu0 5
        %3471 = vperm.xlu0 %3470, %v3462
        %v3472 = vpop.permute.xlu0 %3471
        %v3474 = vmul.f32 %v3421, %v3472
        %v3475 = vadd.f32 %v3468, %v3474
        %v3476 = vmul.f32 %v3475, 1.442695
        %v3477 = vpow.pop %v3476
        %3479 = vset.pattern.permute.xlu0 8
        %3480 = vperm.xlu0 %3479, %v3405
        %v3481 = vpop.permute.xlu0 %3480
        %v3483 = vmul.f32 %v3481, %v3477
        %v3484 = vadd.f32 %v3460, %v3483
        %v3485 = vmul.f32 %v3484, 1000.0
        %3486 = vrot.lane.b32.xlu0 %v3221, 16
        %v3487 = vpop.permute.xlu0 %3486
        %3489 = vrot.lane.b32.xlu0 %v3282, 16
        %v3490 = vpop.permute.xlu0 %3489
        %3492 = vrot.lane.b32.xlu0 %v3347, 16
        %v3493 = vpop.permute.xlu0 %3492
        %3496 = vrot.lane.b32.xlu0 %v3250, 16
        %v3497 = vpop.permute.xlu0 %3496
        %3500 = vrot.lane.b32.xlu0 %v3311, 16
        %v3501 = vpop.permute.xlu0 %3500
        %3504 = vrot.lane.b32.xlu0 %v3376, 16
        %v3505 = vpop.permute.xlu0 %3504
        %3507 = vrot.lane.b32.xlu0 %v3394, 16
        %v3508 = vpop.permute.xlu0 %3507
        %3510 = vrot.lane.b32.xlu0 %v3400, 16
        %v3511 = vpop.permute.xlu0 %3510
        %3513 = vrot.lane.b32.xlu0 %v3405, 16
        %v3514 = vpop.permute.xlu0 %3513
        %v3516 = vsel %vm690, %v3485, %v3487
        %vm3517 = vcmask 138240
        %v3518 = vsel %vm3517, %v3516, %v3490
        %vm3519 = vcmask 146432
        %v3520 = vsel %vm3519, %v3518, %v3493
        %vm3521 = vcmask 154624
        %v3522 = vsel %vm3521, %v3520, %v3497
        %vm3523 = vcmask 162816
        %v3524 = vsel %vm3523, %v3522, %v3501
        %vm3525 = vcmask 171008
        %v3526 = vsel %vm3525, %v3524, %v3505
        %vm3527 = vcmask 179200
        %v3528 = vsel %vm3527, %v3526, %v3508
        %vm3529 = vcmask 187392
        %v3530 = vsel %vm3529, %v3528, %v3511
        %vm3531 = vcmask 195584
        %v3532 = vsel %vm3531, %v3530, %v3514
        %vm3533 = vcmask 203776
        %v3534 = vsel %vm3533, %v3532, 0.0
        %3535 = vst [vmem:[%s679] sm:$0xff] %v3534
        %p3536 = scmp.lt.s32.totalorder %s34, 1
        %s3537 = scalar_select %p3536, %s34, 1
        %s3538 = smul.addr %s3537, 8
        %s3539 = scalar_lea.vmem %s15, %s3538
        // Predicated region
        $region137: #{pia_forward.1} parent=79 // pred_check
          %p3540 = pneg %p372
        $region138: #{pia_forward.1} parent=79 // pred_check_branch
          %3542 = sbr.rel (%p3540) target = $region140
        $region139: #{pia_forward.1} parent=79 // pred_region
          _
        $region140: #{pia_forward.1} parent=79 // pred_fallthru
          _
      $region80: #{pia_forward.1} parent=5 // pred_fallthru
        _
      %p3543 = scmp.le.s32.totalorder 2, %s29
      // Predicated region
      $region141: #{pia_forward.1} parent=5 // pred_check
        %p3544 = pneg %p3543
      $region142: #{pia_forward.1} parent=5 // pred_check_branch
        %3546 = sbr.rel (%p3544) target = $region144
      $region143: #{pia_forward.1} parent=5 // pred_region
        %s3547 = ssub.s32 %s29, 2
        // Predicated region
        $region145: #{pia_forward.1} parent=143 // pred_check
          %p3548 = pneg %p378
        $region146: #{pia_forward.1} parent=143 // pred_check_branch
          %3550 = sbr.rel (%p3548) target = $region148
        $region147: #{pia_forward.1} parent=143 // pred_region
          %p3551 = scmp.lt.s32.totalorder %s35, 1
          %s3552 = scalar_select %p3551, %s35, 1
          %s3553 = smul.addr %s3552, 8
          %s3554 = scalar_lea.vmem %s15, %s3553
        $region148: #{pia_forward.1} parent=143 // pred_fallthru
          _
      $region144: #{pia_forward.1} parent=5 // pred_fallthru
        _
    $region6: #{pia_forward.1} parent=1 // loop_footer
      %s33 = sadd.s32 1, %s29
    $region7: #{pia_forward.1} parent=1 // loop_footer_branch
      %28 = sbr.rel target = $region3
    $region8: #{pia_forward.1} parent=1 // loop_exit
      _
    %3555 = vsyncpa [#allocation3], 1
    %s3556 = scalar_lea.sflag [#allocation3], 1
    %3557 = vsyncpa %s3556, 1
    %3558 = vsyncpa [#allocation5], 1
    %3559 = vsyncpa [#allocation8], 1
    %3560 = vsyncpa [#allocation11], 1
    %3561 = vsyncpa [#allocation14], 1
    %3562 = vsyncpa [#allocation17], 1
    %3563 = vsyncpa [#allocation20], 1
    %3564 = vsyncpa [#allocation23], 1

</llo_original>
